<compile_context>
chip_gen: v6e
topology: v6e:2x2x1
jax: 0.10.0
libtpu: 0.0.40
codegen_flags: <defaults>
</compile_context>

<pallas_src>
import functools

import numpy as np
import jax
import jax.numpy as jnp
from jax import lax
from jax.experimental import pallas as pl
from jax.experimental.pallas import tpu as pltpu

EXPANSION = 4
BN_EPS = 1e-5


# ---------------------------------------------------------------------------
# Kernel 1: tiled GEMM + bias + optional ReLU  (used for conv1x1 + BN + ReLU)
# ---------------------------------------------------------------------------
def _gemm_bias_act_kernel(a_ref, w_ref, b_ref, o_ref, acc_ref, *, relu):
    @pl.when(pl.program_id(2) == 0)
    def _():
        acc_ref[...] = jnp.zeros_like(acc_ref)

    acc_ref[...] += jnp.dot(a_ref[...], w_ref[...],
                            preferred_element_type=jnp.float32)

    @pl.when(pl.program_id(2) == pl.num_programs(2) - 1)
    def _():
        r = acc_ref[...] + b_ref[...]
        if relu:
            r = jnp.maximum(r, 0.0)
        o_ref[...] = r.astype(o_ref.dtype)


def _pick_tile(dim, candidates):
    for c in candidates:
        if dim % c == 0:
            return c
    return dim  # full-extent block (always legal)


def gemm_bias_act(a, w, b, *, relu=True, out_dtype=jnp.bfloat16):
    """out = act(a @ w + b).  a:[M,K] bf16, w:[K,N] bf16 (BN scale folded), b:[N] f32."""
    M, K = a.shape
    K2, N = w.shape
    assert K == K2
    # bf16 sublane packing -> keep M tiles multiples of 16; prefer 256-wide tiles.
    tm = _pick_tile(M, (256, 128, 64, 32, 16))
    tn = _pick_tile(N, (256, 128))
    tk = _pick_tile(K, (512, 256, 128))
    b2d = b.reshape(1, N).astype(jnp.float32)

    cost = pl.CostEstimate(
        flops=int(2 * M * K * N),
        transcendentals=0,
        bytes_accessed=int(a.size * a.dtype.itemsize + w.size * w.dtype.itemsize
                           + b2d.size * 4 + M * N * np.dtype(out_dtype).itemsize))

    return pl.pallas_call(
        functools.partial(_gemm_bias_act_kernel, relu=relu),
        grid=(M // tm, N // tn, K // tk),
        in_specs=[
            pl.BlockSpec((tm, tk), lambda i, j, k: (i, k)),
            pl.BlockSpec((tk, tn), lambda i, j, k: (k, j)),
            pl.BlockSpec((1, tn), lambda i, j, k: (0, j)),
        ],
        out_specs=pl.BlockSpec((tm, tn), lambda i, j, k: (i, j)),
        out_shape=jax.ShapeDtypeStruct((M, N), out_dtype),
        scratch_shapes=[pltpu.VMEM((tm, tn), jnp.float32)],
        compiler_params=pltpu.CompilerParams(
            dimension_semantics=("parallel", "parallel", "arbitrary")),
        cost_estimate=cost,
    )(a, w, b2d)


# ---------------------------------------------------------------------------
# Kernel 2: fused Bottleneck tail (per batch element, everything VMEM-resident)
#   conv2(3x3, via 9 shifted taps) + bn2 + relu + conv3(1x1) + bn3
#   + optional 1x1 downsample(+bn) + residual add + relu
# ---------------------------------------------------------------------------
def _bottleneck_tail_kernel(*refs, H, W, has_down):
    if has_down:
        hp_ref, x_ref, w2_ref, b2_ref, w3_ref, b3_ref, wd_ref, bd_ref, o_ref = refs
    else:
        hp_ref, x_ref, w2_ref, b2_ref, w3_ref, b3_ref, o_ref = refs
        wd_ref = bd_ref = None

    HW = H * W
    P = w2_ref.shape[-1]

    # ---- conv2: 3x3, stride 1 (stride handled by the caller on the output). ----
    # hp_ref is the zero-padded conv1 output [H+2, W+2, P]; the 9 taps are read
    # as shifted static windows directly from VMEM (no im2col in HBM).
    acc = jnp.zeros((HW, P), jnp.float32)
    for di in range(3):
        for dj in range(3):
            win = hp_ref[di:di + H, dj:dj + W, :]            # [H, W, P] bf16
            acc = acc + jnp.dot(win.reshape(HW, P), w2_ref[di * 3 + dj],
                                preferred_element_type=jnp.float32)
    h2 = jnp.maximum(acc + b2_ref[...], 0.0).astype(jnp.bfloat16)

    # ---- conv3 (1x1) + bn3 ----
    out = jnp.dot(h2, w3_ref[...], preferred_element_type=jnp.float32) + b3_ref[...]

    # ---- identity / 1x1 downsample projection ----
    xf = x_ref[...].reshape(HW, x_ref.shape[-1])
    if has_down:
        iden = jnp.dot(xf, wd_ref[...], preferred_element_type=jnp.float32) + bd_ref[...]
    else:
        iden = xf.astype(jnp.float32)

    out = jnp.maximum(out + iden, 0.0)
    o_ref[...] = out.reshape(H, W, out.shape[-1]).astype(o_ref.dtype)


def bottleneck_tail(h1p, x, w2, b2, w3, b3, wd=None, bd=None, *, has_down):
    N, Hp, Wp, P = h1p.shape
    H, W = Hp - 2, Wp - 2
    Cin = x.shape[-1]
    C4 = w3.shape[-1]

    inputs = [h1p, x, w2, b2.reshape(1, P).astype(jnp.float32),
              w3, b3.reshape(1, C4).astype(jnp.float32)]
    in_specs = [
        pl.BlockSpec((None, Hp, Wp, P), lambda n: (n, 0, 0, 0)),
        pl.BlockSpec((None, H, W, Cin), lambda n: (n, 0, 0, 0)),
        pl.BlockSpec((9, P, P), lambda n: (0, 0, 0)),      # weights: resident across grid
        pl.BlockSpec((1, P), lambda n: (0, 0)),
        pl.BlockSpec((P, C4), lambda n: (0, 0)),
        pl.BlockSpec((1, C4), lambda n: (0, 0)),
    ]
    if has_down:
        inputs += [wd, bd.reshape(1, C4).astype(jnp.float32)]
        in_specs += [pl.BlockSpec((Cin, C4), lambda n: (0, 0)),
                     pl.BlockSpec((1, C4), lambda n: (0, 0))]

    flops = N * (2 * H * W * P * P * 9 + 2 * H * W * P * C4
                 + (2 * H * W * Cin * C4 if has_down else 0))
    bytes_accessed = int(sum(int(v.size) * v.dtype.itemsize for v in inputs)
                         + N * H * W * C4 * 4)

    return pl.pallas_call(
        functools.partial(_bottleneck_tail_kernel, H=H, W=W, has_down=has_down),
        grid=(N,),
        in_specs=in_specs,
        out_specs=pl.BlockSpec((None, H, W, C4), lambda n: (n, 0, 0, 0)),
        out_shape=jax.ShapeDtypeStruct((N, H, W, C4), jnp.float32),
        compiler_params=pltpu.CompilerParams(dimension_semantics=("parallel",)),
        cost_estimate=pl.CostEstimate(flops=int(flops), transcendentals=0,
                                      bytes_accessed=bytes_accessed),
    )(*inputs)


# ---------------------------------------------------------------------------
# Parameter init (PyTorch layout) + BN folding into GEMM weights
# ---------------------------------------------------------------------------
def _kaiming_conv(key, oc, ic, kh, kw):
    fan_out = oc * kh * kw
    return jax.random.normal(key, (oc, ic, kh, kw), jnp.float32) * (2.0 / fan_out) ** 0.5


def _bn_init(c):
    return dict(gamma=jnp.ones((c,), jnp.float32), beta=jnp.zeros((c,), jnp.float32),
                mean=jnp.zeros((c,), jnp.float32), var=jnp.ones((c,), jnp.float32))


def init_bottleneck_params(key, inplanes, planes, stride=1):
    outplanes = planes * EXPANSION
    k1, k2, k3, kd = jax.random.split(key, 4)
    params = dict(
        stride=stride,
        conv1=_kaiming_conv(k1, planes, inplanes, 1, 1), bn1=_bn_init(planes),
        conv2=_kaiming_conv(k2, planes, planes, 3, 3),   bn2=_bn_init(planes),
        conv3=_kaiming_conv(k3, outplanes, planes, 1, 1), bn3=_bn_init(outplanes),
    )
    if stride != 1 or inplanes != outplanes:
        params["down_conv"] = _kaiming_conv(kd, outplanes, inplanes, 1, 1)
        params["down_bn"] = _bn_init(outplanes)
    return params


def _fold_bn(w_pt, bn, eps=BN_EPS):
    """PyTorch conv weight [OC,IC,KH,KW] -> [KH,KW,IC,OC]*scale, plus bias."""
    scale = bn["gamma"] / jnp.sqrt(bn["var"] + eps)
    bias = bn["beta"] - bn["mean"] * scale
    w = jnp.transpose(w_pt, (2, 3, 1, 0)) * scale  # scale broadcasts over OC (last dim)
    return w, bias


def prepare_params(params):
    # TODO(synk): BN is folded with running (inference) statistics only.
    w1, b1 = _fold_bn(params["conv1"], params["bn1"])
    w2, b2 = _fold_bn(params["conv2"], params["bn2"])
    w3, b3 = _fold_bn(params["conv3"], params["bn3"])
    planes = w1.shape[-1]
    prep = dict(
        stride=int(params["stride"]),
        w1=w1.reshape(w1.shape[2], planes).astype(jnp.bfloat16),        # [Cin, P]
        b1=b1,
        w2=w2.reshape(9, planes, planes).astype(jnp.bfloat16),          # [9, P, P]
        b2=b2,
        w3=w3.reshape(planes, w3.shape[-1]).astype(jnp.bfloat16),       # [P, 4P]
        b3=b3,
        has_down="down_conv" in params,
    )
    if prep["has_down"]:
        wd, bd = _fold_bn(params["down_conv"], params["down_bn"])
        prep["wd"] = wd.reshape(wd.shape[2], wd.shape[-1]).astype(jnp.bfloat16)  # [Cin, 4P]
        prep["bd"] = bd
    return prep


# ---------------------------------------------------------------------------
# Forward pass (mirrors Bottleneck.forward)
# ---------------------------------------------------------------------------
def bottleneck_forward(prepared, x_nchw):
    p = prepared
    stride = p["stride"]
    x = jnp.transpose(x_nchw, (0, 2, 3, 1))                     # NCHW -> NHWC (once)
    N, H, W, Cin = x.shape
    P = p["w1"].shape[1]

    # conv1 (1x1) + bn1 + relu : tiled bf16 GEMM with f32 accumulation.
    a = x.reshape(N * H * W, Cin).astype(jnp.bfloat16)
    h1 = gemm_bias_act(a, p["w1"], p["b1"], relu=True, out_dtype=jnp.bfloat16)

    # Single cheap zero-pad for the 3x3 conv; the 9 taps are handled in-kernel.
    h1p = jnp.pad(h1.reshape(N, H, W, P), ((0, 0), (1, 1), (1, 1), (0, 0)))

    x_id = x.astype(jnp.bfloat16) if p["has_down"] else x
    out = bottleneck_tail(h1p, x_id, p["w2"], p["b2"], p["w3"], p["b3"],
                          p.get("wd"), p.get("bd"), has_down=p["has_down"])

    if stride > 1:
        # Exact: strided 3x3/1x1 convs == stride-1 convs + spatial subsampling,
        # and every later op (BN, add, ReLU) is pointwise.
        out = out[:, ::stride, ::stride, :]
    return jnp.transpose(out, (0, 3, 1, 2))                     # back to NCHW


# ---------------------------------------------------------------------------
# Pure-JAX reference (unfolded conv + BN) for a correctness check
# ---------------------------------------------------------------------------
def bottleneck_ref(params, x_nchw, eps=BN_EPS):
    def conv(x, w_pt, stride, pad):
        w = jnp.transpose(w_pt, (2, 3, 1, 0))  # HWIO
        return lax.conv_general_dilated(
            x, w, window_strides=(stride, stride),
            padding=[(pad, pad), (pad, pad)],
            dimension_numbers=("NHWC", "HWIO", "NHWC"))

    def bn(x, s):
        return (x - s["mean"]) / jnp.sqrt(s["var"] + eps) * s["gamma"] + s["beta"]

    x = jnp.transpose(x_nchw, (0, 2, 3, 1))
    s = params["stride"]
    out = jax.nn.relu(bn(conv(x, params["conv1"], 1, 0), params["bn1"]))
    out = jax.nn.relu(bn(conv(out, params["conv2"], s, 1), params["bn2"]))
    out = bn(conv(out, params["conv3"], 1, 0), params["bn3"])
    identity = x
    if "down_conv" in params:
        identity = bn(conv(x, params["down_conv"], s, 0), params["down_bn"])
    return jnp.transpose(jax.nn.relu(out + identity), (0, 3, 1, 2))


if __name__ == "__main__":
    key = jax.random.PRNGKey(0)
    kx, kp = jax.random.split(key)

    # Small, Bottleneck-typical config: inplanes=64, planes=32 (-> 128 out), stride=2
    # => downsample branch is exercised.  Input is PyTorch-style NCHW.
    N, Cin, H, W = 2, 64, 16, 16
    planes, stride = 32, 2
    x = jax.random.normal(kx, (N, Cin, H, W), jnp.float32)

    params = init_bottleneck_params(kp, Cin, planes, stride)
    prepared = prepare_params(params)

    fwd = jax.jit(lambda xx: bottleneck_forward(prepared, xx))
    out = jax.block_until_ready(fwd(x))

    OH = (H - 1) // stride + 1
    assert out.shape == (N, planes * EXPANSION, OH, OH), out.shape
    assert bool(jnp.all(jnp.isfinite(out)))

    ref = bottleneck_ref(params, x)
    assert bool(jnp.allclose(out, ref, atol=1e-1, rtol=1e-1)), \
        float(jnp.max(jnp.abs(out - ref)))

    print("KERNEL_OK")
</pallas_src>

<mosaic_0001>
module attributes {stable_mosaic.version = 11 : i64} {
  func.func @_gemm_bias_act_kernel(%arg0: i32, %arg1: i32, %arg2: i32, %arg3: memref<256x64xbf16, #tpu.memory_space<vmem>>, %arg4: memref<64x32xbf16, #tpu.memory_space<vmem>>, %arg5: memref<1x32xf32, #tpu.memory_space<vmem>>, %arg6: memref<256x32xbf16, #tpu.memory_space<vmem>>, %arg7: memref<256x32xf32, #tpu.memory_space<vmem>>) attributes {dimension_semantics = [#tpu.dimension_semantics<parallel>, #tpu.dimension_semantics<parallel>, #tpu.dimension_semantics<arbitrary>], iteration_bounds = array<i64: 2, 1, 1>, scalar_prefetch = 0 : i64, scratch_operands = 1 : i64, tpu.core_type = #tpu.core_type<tc>, window_params = [{transform_indices = @transform_0, window_bounds = array<i64: 256, 64>}, {transform_indices = @transform_1, window_bounds = array<i64: 64, 32>}, {transform_indices = @transform_2, window_bounds = array<i64: 1, 32>}, {transform_indices = @transform_3, window_bounds = array<i64: 256, 32>}]} {
    %c0_i32 = arith.constant 0 : i32
    %0 = arith.cmpi eq, %arg2, %c0_i32 : i32
    %1 = arith.extui %0 : i1 to i32
    %c0_i32_0 = arith.constant 0 : i32
    %2 = arith.cmpi ne, %1, %c0_i32_0 : i32
    scf.if %2 {
      %cst_10 = arith.constant 0.000000e+00 : f32
      %12 = vector.broadcast %cst_10 : f32 to vector<256x32xf32>
      %c0_11 = arith.constant 0 : index
      %c0_12 = arith.constant 0 : index
      %13 = vector.load %arg7[%c0_11, %c0_12] : memref<256x32xf32, #tpu.memory_space<vmem>>, vector<256x32xf32>
      tpu.vector_store %arg7[%c0_11, %c0_12], %12 {strides = array<i32>} : memref<256x32xf32, #tpu.memory_space<vmem>>, vector<256x32xf32>,
    } else {
    }
    %c0 = arith.constant 0 : index
    %c0_1 = arith.constant 0 : index
    %3 = vector.load %arg7[%c0, %c0_1] : memref<256x32xf32, #tpu.memory_space<vmem>>, vector<256x32xf32>
    %c0_2 = arith.constant 0 : index
    %c0_3 = arith.constant 0 : index
    %4 = vector.load %arg3[%c0_2, %c0_3] : memref<256x64xbf16, #tpu.memory_space<vmem>>, vector<256x64xbf16>
    %c0_4 = arith.constant 0 : index
    %c0_5 = arith.constant 0 : index
    %5 = vector.load %arg4[%c0_4, %c0_5] : memref<64x32xbf16, #tpu.memory_space<vmem>>, vector<64x32xbf16>
    %cst = arith.constant dense<0.000000e+00> : vector<256x32xf32>
    %6 = tpu.matmul %4, %5, %cst {dimension_numbers = #tpu.dot_dimension_numbers<[1], [0], [0], [1], [0, 0, 1, 1], [], []>} : vector<256x64xbf16>, vector<64x32xbf16>, vector<256x32xf32> -> vector<256x32xf32>
    %7 = arith.addf %3, %6 : vector<256x32xf32>
    %c0_6 = arith.constant 0 : index
    %c0_7 = arith.constant 0 : index
    %8 = vector.load %arg7[%c0_6, %c0_7] : memref<256x32xf32, #tpu.memory_space<vmem>>, vector<256x32xf32>
    tpu.vector_store %arg7[%c0_6, %c0_7], %7 {strides = array<i32>} : memref<256x32xf32, #tpu.memory_space<vmem>>, vector<256x32xf32>,
    %c0_i32_8 = arith.constant 0 : i32
    %9 = arith.cmpi eq, %arg2, %c0_i32_8 : i32
    %10 = arith.extui %9 : i1 to i32
    %c0_i32_9 = arith.constant 0 : i32
    %11 = arith.cmpi ne, %10, %c0_i32_9 : i32
    scf.if %11 {
      %c0_10 = arith.constant 0 : index
      %c0_11 = arith.constant 0 : index
      %12 = vector.load %arg7[%c0_10, %c0_11] : memref<256x32xf32, #tpu.memory_space<vmem>>, vector<256x32xf32>
      %c0_12 = arith.constant 0 : index
      %c0_13 = arith.constant 0 : index
      %13 = vector.load %arg5[%c0_12, %c0_13] : memref<1x32xf32, #tpu.memory_space<vmem>>, vector<1x32xf32>
      %14 = vector.broadcast %13 : vector<1x32xf32> to vector<256x32xf32>
      %15 = arith.addf %12, %14 : vector<256x32xf32>
      %cst_14 = arith.constant 0.000000e+00 : f32
      %16 = vector.broadcast %cst_14 : f32 to vector<256x32xf32>
      %17 = arith.maximumf %15, %16 : vector<256x32xf32>
      %18 = arith.truncf %17 : vector<256x32xf32> to vector<256x32xbf16>
      %c0_15 = arith.constant 0 : index
      %c0_16 = arith.constant 0 : index
      %19 = vector.load %arg6[%c0_15, %c0_16] : memref<256x32xbf16, #tpu.memory_space<vmem>>, vector<256x32xbf16>
      tpu.vector_store %arg6[%c0_15, %c0_16], %18 {strides = array<i32>} : memref<256x32xbf16, #tpu.memory_space<vmem>>, vector<256x32xbf16>,
    } else {
    }
    return
  }
  func.func @transform_0(%arg0: i32, %arg1: i32, %arg2: i32) -> (i32, i32) {
    %c0_i32 = arith.constant 0 : i32
    return %arg0, %arg2 : i32, i32
  }
  func.func @transform_1(%arg0: i32, %arg1: i32, %arg2: i32) -> (i32, i32) {
    %c0_i32 = arith.constant 0 : i32
    return %arg2, %arg1 : i32, i32
  }
  func.func @transform_2(%arg0: i32, %arg1: i32, %arg2: i32) -> (i32, i32) {
    %c0_i32 = arith.constant 0 : i32
    %c0_i32_0 = arith.constant 0 : i32
    return %c0_i32, %arg1 : i32, i32
  }
  func.func @transform_3(%arg0: i32, %arg1: i32, %arg2: i32) -> (i32, i32) {
    %c0_i32 = arith.constant 0 : i32
    return %arg0, %arg1 : i32, i32
  }
}

module attributes {stable_mosaic.version = 11 : i64} {
  func.func @_bottleneck_tail_kernel(%arg0: i32, %arg1: memref<1x18x18x32xbf16, #tpu.memory_space<vmem>>, %arg2: memref<1x16x16x64xbf16, #tpu.memory_space<vmem>>, %arg3: memref<9x32x32xbf16, #tpu.memory_space<vmem>>, %arg4: memref<1x32xf32, #tpu.memory_space<vmem>>, %arg5: memref<32x128xbf16, #tpu.memory_space<vmem>>, %arg6: memref<1x128xf32, #tpu.memory_space<vmem>>, %arg7: memref<64x128xbf16, #tpu.memory_space<vmem>>, %arg8: memref<1x128xf32, #tpu.memory_space<vmem>>, %arg9: memref<1x16x16x128xf32, #tpu.memory_space<vmem>>) attributes {dimension_semantics = [#tpu.dimension_semantics<parallel>], iteration_bounds = array<i64: 2>, scalar_prefetch = 0 : i64, scratch_operands = 0 : i64, tpu.core_type = #tpu.core_type<tc>, window_params = [{transform_indices = @transform_0, window_bounds = array<i64: 1, 18, 18, 32>}, {transform_indices = @transform_1, window_bounds = array<i64: 1, 16, 16, 64>}, {pipeline_mode = #tpu.pipeline_mode<synchronous>, transform_indices = @transform_2, window_bounds = array<i64: 9, 32, 32>}, {pipeline_mode = #tpu.pipeline_mode<synchronous>, transform_indices = @transform_3, window_bounds = array<i64: 1, 32>}, {pipeline_mode = #tpu.pipeline_mode<synchronous>, transform_indices = @transform_4, window_bounds = array<i64: 32, 128>}, {pipeline_mode = #tpu.pipeline_mode<synchronous>, transform_indices = @transform_5, window_bounds = array<i64: 1, 128>}, {pipeline_mode = #tpu.pipeline_mode<synchronous>, transform_indices = @transform_6, window_bounds = array<i64: 64, 128>}, {pipeline_mode = #tpu.pipeline_mode<synchronous>, transform_indices = @transform_7, window_bounds = array<i64: 1, 128>}, {transform_indices = @transform_8, window_bounds = array<i64: 1, 16, 16, 128>}]} {
    %cst = arith.constant 0.000000e+00 : f32
    %0 = vector.broadcast %cst : f32 to vector<256x32xf32>
    %c0 = arith.constant 0 : index
    %c0_0 = arith.constant 0 : index
    %c0_1 = arith.constant 0 : index
    %c0_2 = arith.constant 0 : index
    %1 = vector.load %arg1[%c0, %c0_0, %c0_1, %c0_2] : memref<1x18x18x32xbf16, #tpu.memory_space<vmem>>, vector<1x16x16x32xbf16>
    %2 = vector.shape_cast %1 : vector<1x16x16x32xbf16> to vector<16x16x32xbf16>
    %3 = vector.shape_cast %2 : vector<16x16x32xbf16> to vector<256x32xbf16>
    %c0_3 = arith.constant 0 : index
    %c0_4 = arith.constant 0 : index
    %c0_5 = arith.constant 0 : index
    %4 = vector.load %arg3[%c0_3, %c0_4, %c0_5] : memref<9x32x32xbf16, #tpu.memory_space<vmem>>, vector<1x32x32xbf16>
    %5 = vector.shape_cast %4 : vector<1x32x32xbf16> to vector<32x32xbf16>
    %cst_6 = arith.constant dense<0.000000e+00> : vector<256x32xf32>
    %6 = tpu.matmul %3, %5, %cst_6 {dimension_numbers = #tpu.dot_dimension_numbers<[1], [0], [0], [1], [0, 0, 1, 1], [], []>} : vector<256x32xbf16>, vector<32x32xbf16>, vector<256x32xf32> -> vector<256x32xf32>
    %7 = arith.addf %0, %6 : vector<256x32xf32>
    %c0_7 = arith.constant 0 : index
    %c0_8 = arith.constant 0 : index
    %c1 = arith.constant 1 : index
    %c0_9 = arith.constant 0 : index
    %8 = vector.load %arg1[%c0_7, %c0_8, %c1, %c0_9] : memref<1x18x18x32xbf16, #tpu.memory_space<vmem>>, vector<1x16x16x32xbf16>
    %9 = vector.shape_cast %8 : vector<1x16x16x32xbf16> to vector<16x16x32xbf16>
    %10 = vector.shape_cast %9 : vector<16x16x32xbf16> to vector<256x32xbf16>
    %c1_10 = arith.constant 1 : index
    %c0_11 = arith.constant 0 : index
    %c0_12 = arith.constant 0 : index
    %11 = vector.load %arg3[%c1_10, %c0_11, %c0_12] : memref<9x32x32xbf16, #tpu.memory_space<vmem>>, vector<1x32x32xbf16>
    %12 = vector.shape_cast %11 : vector<1x32x32xbf16> to vector<32x32xbf16>
    %cst_13 = arith.constant dense<0.000000e+00> : vector<256x32xf32>
    %13 = tpu.matmul %10, %12, %cst_13 {dimension_numbers = #tpu.dot_dimension_numbers<[1], [0], [0], [1], [0, 0, 1, 1], [], []>} : vector<256x32xbf16>, vector<32x32xbf16>, vector<256x32xf32> -> vector<256x32xf32>
    %14 = arith.addf %7, %13 : vector<256x32xf32>
    %c0_14 = arith.constant 0 : index
    %c0_15 = arith.constant 0 : index
    %c2 = arith.constant 2 : index
    %c0_16 = arith.constant 0 : index
    %15 = vector.load %arg1[%c0_14, %c0_15, %c2, %c0_16] : memref<1x18x18x32xbf16, #tpu.memory_space<vmem>>, vector<1x16x16x32xbf16>
    %16 = vector.shape_cast %15 : vector<1x16x16x32xbf16> to vector<16x16x32xbf16>
    %17 = vector.shape_cast %16 : vector<16x16x32xbf16> to vector<256x32xbf16>
    %c2_17 = arith.constant 2 : index
    %c0_18 = arith.constant 0 : index
    %c0_19 = arith.constant 0 : index
    %18 = vector.load %arg3[%c2_17, %c0_18, %c0_19] : memref<9x32x32xbf16, #tpu.memory_space<vmem>>, vector<1x32x32xbf16>
    %19 = vector.shape_cast %18 : vector<1x32x32xbf16> to vector<32x32xbf16>
    %cst_20 = arith.constant dense<0.000000e+00> : vector<256x32xf32>
    %20 = tpu.matmul %17, %19, %cst_20 {dimension_numbers = #tpu.dot_dimension_numbers<[1], [0], [0], [1], [0, 0, 1, 1], [], []>} : vector<256x32xbf16>, vector<32x32xbf16>, vector<256x32xf32> -> vector<256x32xf32>
    %21 = arith.addf %14, %20 : vector<256x32xf32>
    %c0_21 = arith.constant 0 : index
    %c1_22 = arith.constant 1 : index
    %c0_23 = arith.constant 0 : index
    %c0_24 = arith.constant 0 : index
    %22 = vector.load %arg1[%c0_21, %c1_22, %c0_23, %c0_24] : memref<1x18x18x32xbf16, #tpu.memory_space<vmem>>, vector<1x16x16x32xbf16>
    %23 = vector.shape_cast %22 : vector<1x16x16x32xbf16> to vector<16x16x32xbf16>
    %24 = vector.shape_cast %23 : vector<16x16x32xbf16> to vector<256x32xbf16>
    %c3 = arith.constant 3 : index
    %c0_25 = arith.constant 0 : index
    %c0_26 = arith.constant 0 : index
    %25 = vector.load %arg3[%c3, %c0_25, %c0_26] : memref<9x32x32xbf16, #tpu.memory_space<vmem>>, vector<1x32x32xbf16>
    %26 = vector.shape_cast %25 : vector<1x32x32xbf16> to vector<32x32xbf16>
    %cst_27 = arith.constant dense<0.000000e+00> : vector<256x32xf32>
    %27 = tpu.matmul %24, %26, %cst_27 {dimension_numbers = #tpu.dot_dimension_numbers<[1], [0], [0], [1], [0, 0, 1, 1], [], []>} : vector<256x32xbf16>, vector<32x32xbf16>, vector<256x32xf32> -> vector<256x32xf32>
    %28 = arith.addf %21, %27 : vector<256x32xf32>
    %c0_28 = arith.constant 0 : index
    %c1_29 = arith.constant 1 : index
    %c1_30 = arith.constant 1 : index
    %c0_31 = arith.constant 0 : index
    %29 = vector.load %arg1[%c0_28, %c1_29, %c1_30, %c0_31] : memref<1x18x18x32xbf16, #tpu.memory_space<vmem>>, vector<1x16x16x32xbf16>
    %30 = vector.shape_cast %29 : vector<1x16x16x32xbf16> to vector<16x16x32xbf16>
    %31 = vector.shape_cast %30 : vector<16x16x32xbf16> to vector<256x32xbf16>
    %c4 = arith.constant 4 : index
    %c0_32 = arith.constant 0 : index
    %c0_33 = arith.constant 0 : index
    %32 = vector.load %arg3[%c4, %c0_32, %c0_33] : memref<9x32x32xbf16, #tpu.memory_space<vmem>>, vector<1x32x32xbf16>
    %33 = vector.shape_cast %32 : vector<1x32x32xbf16> to vector<32x32xbf16>
    %cst_34 = arith.constant dense<0.000000e+00> : vector<256x32xf32>
    %34 = tpu.matmul %31, %33, %cst_34 {dimension_numbers = #tpu.dot_dimension_numbers<[1], [0], [0], [1], [0, 0, 1, 1], [], []>} : vector<256x32xbf16>, vector<32x32xbf16>, vector<256x32xf32> -> vector<256x32xf32>
    %35 = arith.addf %28, %34 : vector<256x32xf32>
    %c0_35 = arith.constant 0 : index
    %c1_36 = arith.constant 1 : index
    %c2_37 = arith.constant 2 : index
    %c0_38 = arith.constant 0 : index
    %36 = vector.load %arg1[%c0_35, %c1_36, %c2_37, %c0_38] : memref<1x18x18x32xbf16, #tpu.memory_space<vmem>>, vector<1x16x16x32xbf16>
    %37 = vector.shape_cast %36 : vector<1x16x16x32xbf16> to vector<16x16x32xbf16>
    %38 = vector.shape_cast %37 : vector<16x16x32xbf16> to vector<256x32xbf16>
    %c5 = arith.constant 5 : index
    %c0_39 = arith.constant 0 : index
    %c0_40 = arith.constant 0 : index
    %39 = vector.load %arg3[%c5, %c0_39, %c0_40] : memref<9x32x32xbf16, #tpu.memory_space<vmem>>, vector<1x32x32xbf16>
    %40 = vector.shape_cast %39 : vector<1x32x32xbf16> to vector<32x32xbf16>
    %cst_41 = arith.constant dense<0.000000e+00> : vector<256x32xf32>
    %41 = tpu.matmul %38, %40, %cst_41 {dimension_numbers = #tpu.dot_dimension_numbers<[1], [0], [0], [1], [0, 0, 1, 1], [], []>} : vector<256x32xbf16>, vector<32x32xbf16>, vector<256x32xf32> -> vector<256x32xf32>
    %42 = arith.addf %35, %41 : vector<256x32xf32>
    %c0_42 = arith.constant 0 : index
    %c2_43 = arith.constant 2 : index
    %c0_44 = arith.constant 0 : index
    %c0_45 = arith.constant 0 : index
    %43 = vector.load %arg1[%c0_42, %c2_43, %c0_44, %c0_45] : memref<1x18x18x32xbf16, #tpu.memory_space<vmem>>, vector<1x16x16x32xbf16>
    %44 = vector.shape_cast %43 : vector<1x16x16x32xbf16> to vector<16x16x32xbf16>
    %45 = vector.shape_cast %44 : vector<16x16x32xbf16> to vector<256x32xbf16>
    %c6 = arith.constant 6 : index
    %c0_46 = arith.constant 0 : index
    %c0_47 = arith.constant 0 : index
    %46 = vector.load %arg3[%c6, %c0_46, %c0_47] : memref<9x32x32xbf16, #tpu.memory_space<vmem>>, vector<1x32x32xbf16>
    %47 = vector.shape_cast %46 : vector<1x32x32xbf16> to vector<32x32xbf16>
    %cst_48 = arith.constant dense<0.000000e+00> : vector<256x32xf32>
    %48 = tpu.matmul %45, %47, %cst_48 {dimension_numbers = #tpu.dot_dimension_numbers<[1], [0], [0], [1], [0, 0, 1, 1], [], []>} : vector<256x32xbf16>, vector<32x32xbf16>, vector<256x32xf32> -> vector<256x32xf32>
    %49 = arith.addf %42, %48 : vector<256x32xf32>
    %c0_49 = arith.constant 0 : index
    %c2_50 = arith.constant 2 : index
    %c1_51 = arith.constant 1 : index
    %c0_52 = arith.constant 0 : index
    %50 = vector.load %arg1[%c0_49, %c2_50, %c1_51, %c0_52] : memref<1x18x18x32xbf16, #tpu.memory_space<vmem>>, vector<1x16x16x32xbf16>
    %51 = vector.shape_cast %50 : vector<1x16x16x32xbf16> to vector<16x16x32xbf16>
    %52 = vector.shape_cast %51 : vector<16x16x32xbf16> to vector<256x32xbf16>
    %c7 = arith.constant 7 : index
    %c0_53 = arith.constant 0 : index
    %c0_54 = arith.constant 0 : index
    %53 = vector.load %arg3[%c7, %c0_53, %c0_54] : memref<9x32x32xbf16, #tpu.memory_space<vmem>>, vector<1x32x32xbf16>
    %54 = vector.shape_cast %53 : vector<1x32x32xbf16> to vector<32x32xbf16>
    %cst_55 = arith.constant dense<0.000000e+00> : vector<256x32xf32>
    %55 = tpu.matmul %52, %54, %cst_55 {dimension_numbers = #tpu.dot_dimension_numbers<[1], [0], [0], [1], [0, 0, 1, 1], [], []>} : vector<256x32xbf16>, vector<32x32xbf16>, vector<256x32xf32> -> vector<256x32xf32>
    %56 = arith.addf %49, %55 : vector<256x32xf32>
    %c0_56 = arith.constant 0 : index
    %c2_57 = arith.constant 2 : index
    %c2_58 = arith.constant 2 : index
    %c0_59 = arith.constant 0 : index
    %57 = vector.load %arg1[%c0_56, %c2_57, %c2_58, %c0_59] : memref<1x18x18x32xbf16, #tpu.memory_space<vmem>>, vector<1x16x16x32xbf16>
    %58 = vector.shape_cast %57 : vector<1x16x16x32xbf16> to vector<16x16x32xbf16>
    %59 = vector.shape_cast %58 : vector<16x16x32xbf16> to vector<256x32xbf16>
    %c8 = arith.constant 8 : index
    %c0_60 = arith.constant 0 : index
    %c0_61 = arith.constant 0 : index
    %60 = vector.load %arg3[%c8, %c0_60, %c0_61] : memref<9x32x32xbf16, #tpu.memory_space<vmem>>, vector<1x32x32xbf16>
    %61 = vector.shape_cast %60 : vector<1x32x32xbf16> to vector<32x32xbf16>
    %cst_62 = arith.constant dense<0.000000e+00> : vector<256x32xf32>
    %62 = tpu.matmul %59, %61, %cst_62 {dimension_numbers = #tpu.dot_dimension_numbers<[1], [0], [0], [1], [0, 0, 1, 1], [], []>} : vector<256x32xbf16>, vector<32x32xbf16>, vector<256x32xf32> -> vector<256x32xf32>
    %63 = arith.addf %56, %62 : vector<256x32xf32>
    %c0_63 = arith.constant 0 : index
    %c0_64 = arith.constant 0 : index
    %64 = vector.load %arg4[%c0_63, %c0_64] : memref<1x32xf32, #tpu.memory_space<vmem>>, vector<1x32xf32>
    %65 = vector.broadcast %64 : vector<1x32xf32> to vector<256x32xf32>
    %66 = arith.addf %63, %65 : vector<256x32xf32>
    %cst_65 = arith.constant 0.000000e+00 : f32
    %67 = vector.broadcast %cst_65 : f32 to vector<256x32xf32>
    %68 = arith.maximumf %66, %67 : vector<256x32xf32>
    %69 = arith.truncf %68 : vector<256x32xf32> to vector<256x32xbf16>
    %c0_66 = arith.constant 0 : index
    %c0_67 = arith.constant 0 : index
    %70 = vector.load %arg5[%c0_66, %c0_67] : memref<32x128xbf16, #tpu.memory_space<vmem>>, vector<32x128xbf16>
    %cst_68 = arith.constant dense<0.000000e+00> : vector<256x128xf32>
    %71 = tpu.matmul %69, %70, %cst_68 {dimension_numbers = #tpu.dot_dimension_numbers<[1], [0], [0], [1], [0, 0, 1, 1], [], []>} : vector<256x32xbf16>, vector<32x128xbf16>, vector<256x128xf32> -> vector<256x128xf32>
    %c0_69 = arith.constant 0 : index
    %c0_70 = arith.constant 0 : index
    %72 = vector.load %arg6[%c0_69, %c0_70] : memref<1x128xf32, #tpu.memory_space<vmem>>, vector<1x128xf32>
    %73 = vector.broadcast %72 : vector<1x128xf32> to vector<256x128xf32>
    %74 = arith.addf %71, %73 : vector<256x128xf32>
    %c0_71 = arith.constant 0 : index
    %c0_72 = arith.constant 0 : index
    %c0_73 = arith.constant 0 : index
    %c0_74 = arith.constant 0 : index
    %75 = vector.load %arg2[%c0_71, %c0_72, %c0_73, %c0_74] : memref<1x16x16x64xbf16, #tpu.memory_space<vmem>>, vector<1x16x16x64xbf16>
    %76 = vector.shape_cast %75 : vector<1x16x16x64xbf16> to vector<16x16x64xbf16>
    %77 = vector.shape_cast %76 : vector<16x16x64xbf16> to vector<256x64xbf16>
    %c0_75 = arith.constant 0 : index
    %c0_76 = arith.constant 0 : index
    %78 = vector.load %arg7[%c0_75, %c0_76] : memref<64x128xbf16, #tpu.memory_space<vmem>>, vector<64x128xbf16>
    %cst_77 = arith.constant dense<0.000000e+00> : vector<256x128xf32>
    %79 = tpu.matmul %77, %78, %cst_77 {dimension_numbers = #tpu.dot_dimension_numbers<[1], [0], [0], [1], [0, 0, 1, 1], [], []>} : vector<256x64xbf16>, vector<64x128xbf16>, vector<256x128xf32> -> vector<256x128xf32>
    %c0_78 = arith.constant 0 : index
    %c0_79 = arith.constant 0 : index
    %80 = vector.load %arg8[%c0_78, %c0_79] : memref<1x128xf32, #tpu.memory_space<vmem>>, vector<1x128xf32>
    %81 = vector.broadcast %80 : vector<1x128xf32> to vector<256x128xf32>
    %82 = arith.addf %79, %81 : vector<256x128xf32>
    %83 = arith.addf %74, %82 : vector<256x128xf32>
    %cst_80 = arith.constant 0.000000e+00 : f32
    %84 = vector.broadcast %cst_80 : f32 to vector<256x128xf32>
    %85 = arith.maximumf %83, %84 : vector<256x128xf32>
    %86 = vector.shape_cast %85 : vector<256x128xf32> to vector<16x16x128xf32>
    %c0_81 = arith.constant 0 : index
    %c0_82 = arith.constant 0 : index
    %c0_83 = arith.constant 0 : index
    %c0_84 = arith.constant 0 : index
    %87 = vector.load %arg9[%c0_81, %c0_82, %c0_83, %c0_84] : memref<1x16x16x128xf32, #tpu.memory_space<vmem>>, vector<1x16x16x128xf32>
    %88 = vector.shape_cast %87 : vector<1x16x16x128xf32> to vector<16x16x128xf32>
    %89 = vector.shape_cast %86 : vector<16x16x128xf32> to vector<1x16x16x128xf32>
    tpu.vector_store %arg9[%c0_81, %c0_82, %c0_83, %c0_84], %89 {strides = array<i32>} : memref<1x16x16x128xf32, #tpu.memory_space<vmem>>, vector<1x16x16x128xf32>,
    return
  }
  func.func @transform_0(%arg0: i32) -> (i32, i32, i32, i32) {
    %c0_i32 = arith.constant 0 : i32
    %c0_i32_0 = arith.constant 0 : i32
    %c0_i32_1 = arith.constant 0 : i32
    %c0_i32_2 = arith.constant 0 : i32
    return %arg0, %c0_i32, %c0_i32_0, %c0_i32_1 : i32, i32, i32, i32
  }
  func.func @transform_1(%arg0: i32) -> (i32, i32, i32, i32) {
    %c0_i32 = arith.constant 0 : i32
    %c0_i32_0 = arith.constant 0 : i32
    %c0_i32_1 = arith.constant 0 : i32
    %c0_i32_2 = arith.constant 0 : i32
    return %arg0, %c0_i32, %c0_i32_0, %c0_i32_1 : i32, i32, i32, i32
  }
  func.func @transform_2(%arg0: i32) -> (i32, i32, i32) {
    %c0_i32 = arith.constant 0 : i32
    %c0_i32_0 = arith.constant 0 : i32
    %c0_i32_1 = arith.constant 0 : i32
    %c0_i32_2 = arith.constant 0 : i32
    return %c0_i32, %c0_i32_0, %c0_i32_1 : i32, i32, i32
  }
  func.func @transform_3(%arg0: i32) -> (i32, i32) {
    %c0_i32 = arith.constant 0 : i32
    %c0_i32_0 = arith.constant 0 : i32
    %c0_i32_1 = arith.constant 0 : i32
    return %c0_i32, %c0_i32_0 : i32, i32
  }
  func.func @transform_4(%arg0: i32) -> (i32, i32) {
    %c0_i32 = arith.constant 0 : i32
    %c0_i32_0 = arith.constant 0 : i32
    %c0_i32_1 = arith.constant 0 : i32
    return %c0_i32, %c0_i32_0 : i32, i32
  }
  func.func @transform_5(%arg0: i32) -> (i32, i32) {
    %c0_i32 = arith.constant 0 : i32
    %c0_i32_0 = arith.constant 0 : i32
    %c0_i32_1 = arith.constant 0 : i32
    return %c0_i32, %c0_i32_0 : i32, i32
  }
  func.func @transform_6(%arg0: i32) -> (i32, i32) {
    %c0_i32 = arith.constant 0 : i32
    %c0_i32_0 = arith.constant 0 : i32
    %c0_i32_1 = arith.constant 0 : i32
    return %c0_i32, %c0_i32_0 : i32, i32
  }
  func.func @transform_7(%arg0: i32) -> (i32, i32) {
    %c0_i32 = arith.constant 0 : i32
    %c0_i32_0 = arith.constant 0 : i32
    %c0_i32_1 = arith.constant 0 : i32
    return %c0_i32, %c0_i32_0 : i32, i32
  }
  func.func @transform_8(%arg0: i32) -> (i32, i32, i32, i32) {
    %c0_i32 = arith.constant 0 : i32
    %c0_i32_0 = arith.constant 0 : i32
    %c0_i32_1 = arith.constant 0 : i32
    %c0_i32_2 = arith.constant 0 : i32
    return %arg0, %c0_i32, %c0_i32_0, %c0_i32_1 : i32, i32, i32, i32
  }
}

</mosaic_0001>

<llo_original>
// kernel: _lambda_.2
$region0: #{_lambda_.2}
  #allocation0 [shape = 'u32[]', space=smem, size = 0x4, offset = 0x4, fixed_abs, tag = 'smem constant byte address 0x4 - core index']
  #allocation1 [shape = 'u32[144,128]{1,0:T(1,128)}', space=vmem, size = 0x12000, scoped, tag = 'internal scratch']
  #allocation2 [shape = 'f32[256,32]{1,0:T(8,128)}', space=vmem, size = 0x20000, scoped, tag = 'scratch operand']
  %s0 = inlined_call_operand.vmem [shape: bf16[512,64], index: 0, kind: input, shape index: {}]
  %s1 = inlined_call_operand.vmem [shape: bf16[64,32], index: 1, kind: input, shape index: {}]
  %s2 = inlined_call_operand.vmem [shape: f32[1,32], index: 2, kind: input, shape index: {}]
  %s3 = inlined_call_operand.vmem [shape: bf16[512,32], index: 3, kind: output, shape index: {}]
  %s4 = sld [smem:[#allocation0]]
  $region53: #{_lambda_.2} parent=0
    _
  %s6 = ssub.s32 1, %s4
  %s7 = scalar_select 0, %s6, %s4
  loop: start=0, step=1, limit=4
  $region2: #{_lambda_.2} parent=0 // loop_pre_header
    _
  $region3: #{_lambda_.2} parent=0 // loop_header
    %s9 = sphi 0, %s13
    %p10 = scmp.ge.s32.totalorder %s9, 4
    %s16 = sphi 0, %s35
    %s17 = sphi 0, %s31
    %s18 = sphi 0, %s27
    %s19 = sphi 0, %s16
    %s20 = sphi 0, %s17
    %s21 = sphi 0, %s18
    %s22 = sphi 0, %s19
    %s23 = sphi 0, %s20
    %s24 = sphi 0, %s21
    %s40 = sphi 0, %s42
    %s43 = sphi 0, %s40
    %s44 = sphi 0, %s43
    %s60 = sphi 0, %s44
    %s68 = sphi 0, %s70
    %s71 = sphi 0, %s68
    %s72 = sphi 0, %s71
    %s88 = sphi 0, %s72
    %s94 = sphi 0, %s96
    %s97 = sphi 0, %s94
    %s98 = sphi 0, %s97
    %s114 = sphi 0, %s98
    %s122 = sphi 0, %s124
    %s125 = sphi 0, %s122
    %s126 = sphi 0, %s125
    %s142 = sphi 0, %s126
  $region4: #{_lambda_.2} parent=0 // loop_header_branch
    %12 = sbr.rel (%p10) target = $region8
  $region5: #{_lambda_.2} parent=0 // loop_body
    %s14 = ssub.s32 %s9, 1
    %s15 = ssub.s32 %s9, 2
    %s25 = sadd.s32 1, %s18
    %p26 = scmp.ge.s32.totalorder %s25, 1
    %s27 = scalar_select %p26, 0, %s25
    %s28 = sadd.s32 1, %s17
    %s29 = scalar_select %p26, %s28, %s17
    %p30 = scmp.ge.s32.totalorder %s29, 1
    %s31 = scalar_select %p30, 0, %s29
    %s32 = sadd.s32 1, %s16
    %s33 = scalar_select %p30, %s32, %s16
    %p34 = scmp.ge.s32.totalorder %s33, 2
    %s35 = scalar_select %p34, 0, %s33
    %s36 = ssub.s32 %s16, %s35
    %s37 = ssub.s32 %s18, %s27
    %s38 = sor.u32 %s36, %s37
    %p39 = scmp.eq.s32.totalorder %s38, 0
    %s41 = sadd.s32 %s40, 1
    %s42 = scalar_select %p39, %s40, %s41
    %p45 = pneg %p39
    %p46 = scmp.eq.s32.totalorder %s9, 1
    %p47 = por %p45, %p46
    %p48 = scmp.ne.s32.totalorder %s40, %s43
    %p49 = scmp.eq.s32.totalorder %s9, 0
    %p50 = por %p48, %p49
    %p51 = scmp.ne.s32.totalorder %s40, %s43
    %p52 = scmp.eq.s32.totalorder %s14, 1
    %p53 = por %p51, %p52
    %p54 = scmp.ne.s32.totalorder %s43, %s44
    %p55 = scmp.eq.s32.totalorder %s14, 0
    %p56 = por %p54, %p55
    %p57 = scmp.ne.s32.totalorder %s43, %s44
    %p58 = scmp.eq.s32.totalorder %s15, 1
    %p59 = por %p57, %p58
    %p61 = scmp.ne.s32.totalorder %s44, %s60
    %p62 = scmp.eq.s32.totalorder %s15, 0
    %p63 = por %p61, %p62
    %s64 = ssub.s32 %s18, %s27
    %s65 = ssub.s32 %s17, %s31
    %s66 = sor.u32 %s64, %s65
    %p67 = scmp.eq.s32.totalorder %s66, 0
    %s69 = sadd.s32 %s68, 1
    %s70 = scalar_select %p67, %s68, %s69
    %p73 = pneg %p67
    %p74 = scmp.eq.s32.totalorder %s9, 1
    %p75 = por %p73, %p74
    %p76 = scmp.ne.s32.totalorder %s68, %s71
    %p77 = scmp.eq.s32.totalorder %s9, 0
    %p78 = por %p76, %p77
    %p79 = scmp.ne.s32.totalorder %s68, %s71
    %p80 = scmp.eq.s32.totalorder %s14, 1
    %p81 = por %p79, %p80
    %p82 = scmp.ne.s32.totalorder %s71, %s72
    %p83 = scmp.eq.s32.totalorder %s14, 0
    %p84 = por %p82, %p83
    %p85 = scmp.ne.s32.totalorder %s71, %s72
    %p86 = scmp.eq.s32.totalorder %s15, 1
    %p87 = por %p85, %p86
    %p89 = scmp.ne.s32.totalorder %s72, %s88
    %p90 = scmp.eq.s32.totalorder %s15, 0
    %p91 = por %p89, %p90
    %s92 = ssub.s32 %s17, %s31
    %p93 = scmp.eq.s32.totalorder %s92, 0
    %s95 = sadd.s32 %s94, 1
    %s96 = scalar_select %p93, %s94, %s95
    %p99 = pneg %p93
    %p100 = scmp.eq.s32.totalorder %s9, 1
    %p101 = por %p99, %p100
    %p102 = scmp.ne.s32.totalorder %s94, %s97
    %p103 = scmp.eq.s32.totalorder %s9, 0
    %p104 = por %p102, %p103
    %p105 = scmp.ne.s32.totalorder %s94, %s97
    %p106 = scmp.eq.s32.totalorder %s14, 1
    %p107 = por %p105, %p106
    %p108 = scmp.ne.s32.totalorder %s97, %s98
    %p109 = scmp.eq.s32.totalorder %s14, 0
    %p110 = por %p108, %p109
    %p111 = scmp.ne.s32.totalorder %s97, %s98
    %p112 = scmp.eq.s32.totalorder %s15, 1
    %p113 = por %p111, %p112
    %p115 = scmp.ne.s32.totalorder %s98, %s114
    %p116 = scmp.eq.s32.totalorder %s15, 0
    %p117 = por %p115, %p116
    %s118 = ssub.s32 %s16, %s35
    %s119 = ssub.s32 %s17, %s31
    %s120 = sor.u32 %s118, %s119
    %p121 = scmp.eq.s32.totalorder %s120, 0
    %s123 = sadd.s32 %s122, 1
    %s124 = scalar_select %p121, %s122, %s123
    %p127 = pneg %p121
    %p128 = scmp.eq.s32.totalorder %s9, 1
    %p129 = por %p127, %p128
    %p130 = scmp.ne.s32.totalorder %s122, %s125
    %p131 = scmp.eq.s32.totalorder %s9, 0
    %p132 = por %p130, %p131
    %p133 = scmp.ne.s32.totalorder %s122, %s125
    %p134 = scmp.eq.s32.totalorder %s14, 1
    %p135 = por %p133, %p134
    %p136 = scmp.ne.s32.totalorder %s125, %s126
    %p137 = scmp.eq.s32.totalorder %s14, 0
    %p138 = por %p136, %p137
    %p139 = scmp.ne.s32.totalorder %s125, %s126
    %p140 = scmp.eq.s32.totalorder %s15, 1
    %p141 = por %p139, %p140
    %p143 = scmp.ne.s32.totalorder %s126, %s142
    %p144 = scmp.eq.s32.totalorder %s15, 0
    %p145 = por %p143, %p144
    %p146 = scmp.le.s32.totalorder 1, %s9
    %p147 = scmp.lt.s32.totalorder %s9, 3
    %p148 = pnand %p146, %p147
    %p149 = pneg %p148
    // Predicated region
    $region9: #{_lambda_.2} parent=5 // pred_check
      _
    $region10: #{_lambda_.2} parent=5 // pred_check_branch
      %151 = sbr.rel (%p148) target = $region12
    $region11: #{_lambda_.2} parent=5 // pred_region
      %s152 = ssub.s32 %s9, 1
      // Predicated region
      $region13: #{_lambda_.2} parent=11 // pred_check
        %p153 = pneg %p84
      $region14: #{_lambda_.2} parent=11 // pred_check_branch
        %155 = sbr.rel (%p153) target = $region16
      $region15: #{_lambda_.2} parent=11 // pred_region
        %s156 = smul.u32 8, %s21
        %p157 = scmp.lt.s32.totalorder %s156, 7
        %s158 = scalar_select %p157, %s156, 7
        %p159 = scmp.lt.s32.totalorder %s20, 0
        %s160 = scalar_select %p159, %s20, 0
        %s161 = sadd.s32 %s160, %s158
        %s162 = smul.addr %s161, 4
        %s163 = scalar_lea.vmem %s1, %s162
        %s164 = smul.u32 8, %s21
      $region16: #{_lambda_.2} parent=11 // pred_fallthru
        _
      // Predicated region
      $region17: #{_lambda_.2} parent=11 // pred_check
        %p165 = pneg %p110
      $region18: #{_lambda_.2} parent=11 // pred_check_branch
        %167 = sbr.rel (%p165) target = $region20
      $region19: #{_lambda_.2} parent=11 // pred_region
        %p168 = scmp.lt.s32.totalorder %s20, 0
        %s169 = scalar_select %p168, %s20, 0
        %s170 = scalar_lea.vmem %s2, %s169
      $region20: #{_lambda_.2} parent=11 // pred_fallthru
        _
    $region12: #{_lambda_.2} parent=5 // pred_fallthru
      _
    %p171 = scmp.lt.s32.totalorder %s9, 2
    // Predicated region
    $region21: #{_lambda_.2} parent=5 // pred_check
      %p172 = pneg %p171
    $region22: #{_lambda_.2} parent=5 // pred_check_branch
      %174 = sbr.rel (%p172) target = $region24
    $region23: #{_lambda_.2} parent=5 // pred_region
      // Predicated region
      $region25: #{_lambda_.2} parent=23 // pred_check
        %p175 = pneg %p50
      $region26: #{_lambda_.2} parent=23 // pred_check_branch
        %177 = sbr.rel (%p175) target = $region28
      $region27: #{_lambda_.2} parent=23 // pred_region
        %s178 = smul.u32 32, %s16
        %p179 = scmp.lt.s32.totalorder %s178, 63
        %s180 = scalar_select %p179, %s178, 63
        %p181 = scmp.lt.s32.totalorder %s18, 0
        %s182 = scalar_select %p181, %s18, 0
        %s183 = sadd.s32 %s182, %s180
        %s184 = smul.addr %s183, 4
        %s185 = scalar_lea.vmem %s0, %s184
        %s186 = smul.u32 32, %s16
      $region28: #{_lambda_.2} parent=23 // pred_fallthru
        _
    $region24: #{_lambda_.2} parent=5 // pred_fallthru
      _
    %p187 = scmp.le.s32.totalorder 1, %s9
    %p188 = scmp.lt.s32.totalorder %s9, 3
    %p189 = pnand %p187, %p188
    %p190 = pneg %p189
    // Predicated region
    $region29: #{_lambda_.2} parent=5 // pred_check
      _
    $region30: #{_lambda_.2} parent=5 // pred_check_branch
      %192 = sbr.rel (%p189) target = $region32
    $region31: #{_lambda_.2} parent=5 // pred_region
      %s193 = ssub.s32 %s9, 1
      %s194 = smul.u32 32, %s19
      %p195 = scmp.lt.s32.totalorder %s194, 63
      %s196 = scalar_select %p195, %s194, 63
      %p197 = scmp.lt.s32.totalorder %s21, 0
      %s198 = scalar_select %p197, %s21, 0
      %s199 = sadd.s32 %s198, %s196
      %s200 = smul.addr %s199, 4
      %s201 = scalar_lea.vmem %s0, %s200
      %p202 = pneg %p56
      %p203 = pneg %p53
      %s204 = smul.u32 8, %s21
      %p205 = scmp.lt.s32.totalorder %s204, 7
      %s206 = scalar_select %p205, %s204, 7
      %p207 = scmp.lt.s32.totalorder %s20, 0
      %s208 = scalar_select %p207, %s20, 0
      %s209 = sadd.s32 %s208, %s206
      %s210 = smul.addr %s209, 4
      %s211 = scalar_lea.vmem %s1, %s210
      %p212 = pneg %p84
      %p213 = pneg %p81
      %p214 = scmp.lt.s32.totalorder %s20, 0
      %s215 = scalar_select %p214, %s20, 0
      %s216 = scalar_lea.vmem %s2, %s215
      %p217 = pneg %p110
      %p218 = pneg %p107
      %p219 = pneg %p138
      %p220 = pneg %p135
      %s221 = smul.u32 32, %s19
      %p222 = scmp.lt.s32.totalorder %s221, 63
      %s223 = scalar_select %p222, %s221, 63
      %p224 = scmp.lt.s32.totalorder %s20, 0
      %s225 = scalar_select %p224, %s20, 0
      %s226 = sadd.s32 %s225, %s223
      %s227 = smul.addr %s226, 4
      %s228 = scalar_lea.vmem %s3, %s227
      %s229 = smul.u32 32, %s19
      %p230 = scmp.lt.s32.totalorder %s229, 63
      %s231 = scalar_select %p230, %s229, 63
      %p232 = scmp.lt.s32.totalorder %s21, 0
      %s233 = scalar_select %p232, %s21, 0
      %s234 = sadd.s32 %s233, %s231
      %s235 = smul.addr %s234, 4
      %s236 = scalar_lea.vmem %s0, %s235
      %s237 = smul.u32 32, %s19
      %s238 = smul.u32 8, %s21
      %p239 = scmp.lt.s32.totalorder %s238, 7
      %s240 = scalar_select %p239, %s238, 7
      %p241 = scmp.lt.s32.totalorder %s20, 0
      %s242 = scalar_select %p241, %s20, 0
      %s243 = sadd.s32 %s242, %s240
      %s244 = smul.addr %s243, 4
      %s245 = scalar_lea.vmem %s1, %s244
      %s246 = smul.u32 8, %s21
      %p247 = scmp.lt.s32.totalorder %s20, 0
      %s248 = scalar_select %p247, %s20, 0
      %s249 = scalar_lea.vmem %s2, %s248
      %s250 = smul.u32 32, %s19
      %p251 = scmp.lt.s32.totalorder %s250, 63
      %s252 = scalar_select %p251, %s250, 63
      %p253 = scmp.lt.s32.totalorder %s20, 0
      %s254 = scalar_select %p253, %s20, 0
      %s255 = sadd.s32 %s254, %s252
      %s256 = smul.addr %s255, 4
      %s257 = scalar_lea.vmem %s3, %s256
      %s258 = smul.u32 32, %s19
      %p260 = scmp.eq.s32.totalorder %s21, 0
      // Predicated region
      $region33: #{_lambda_.2} parent=31 // pred_check
        %p261 = pneg %p260
      $region34: #{_lambda_.2} parent=31 // pred_check_branch
        %263 = sbr.rel (%p261) target = $region36
      $region35: #{_lambda_.2} parent=31 // pred_region
        %vm264 = vcmask 261120
        %265 = vst.msk [vmem:[#allocation2] sm:$0xff] %vm264, 0.0
        %266 = vst.msk [vmem:[#allocation2 + $0x8] sm:$0xff] %vm264, 0.0
        %267 = vst.msk [vmem:[#allocation2 + $0x10] sm:$0xff] %vm264, 0.0
        %268 = vst.msk [vmem:[#allocation2 + $0x18] sm:$0xff] %vm264, 0.0
        %269 = vst.msk [vmem:[#allocation2 + $0x20] sm:$0xff] %vm264, 0.0
        %270 = vst.msk [vmem:[#allocation2 + $0x28] sm:$0xff] %vm264, 0.0
        %271 = vst.msk [vmem:[#allocation2 + $0x30] sm:$0xff] %vm264, 0.0
        %272 = vst.msk [vmem:[#allocation2 + $0x38] sm:$0xff] %vm264, 0.0
        %273 = vst.msk [vmem:[#allocation2 + $0x40] sm:$0xff] %vm264, 0.0
        %274 = vst.msk [vmem:[#allocation2 + $0x48] sm:$0xff] %vm264, 0.0
        %275 = vst.msk [vmem:[#allocation2 + $0x50] sm:$0xff] %vm264, 0.0
        %276 = vst.msk [vmem:[#allocation2 + $0x58] sm:$0xff] %vm264, 0.0
        %277 = vst.msk [vmem:[#allocation2 + $0x60] sm:$0xff] %vm264, 0.0
        %278 = vst.msk [vmem:[#allocation2 + $0x68] sm:$0xff] %vm264, 0.0
        %279 = vst.msk [vmem:[#allocation2 + $0x70] sm:$0xff] %vm264, 0.0
        %280 = vst.msk [vmem:[#allocation2 + $0x78] sm:$0xff] %vm264, 0.0
        %281 = vst.msk [vmem:[#allocation2 + $0x80] sm:$0xff] %vm264, 0.0
        %282 = vst.msk [vmem:[#allocation2 + $0x88] sm:$0xff] %vm264, 0.0
        %283 = vst.msk [vmem:[#allocation2 + $0x90] sm:$0xff] %vm264, 0.0
        %284 = vst.msk [vmem:[#allocation2 + $0x98] sm:$0xff] %vm264, 0.0
        %285 = vst.msk [vmem:[#allocation2 + $0xa0] sm:$0xff] %vm264, 0.0
        %286 = vst.msk [vmem:[#allocation2 + $0xa8] sm:$0xff] %vm264, 0.0
        %287 = vst.msk [vmem:[#allocation2 + $0xb0] sm:$0xff] %vm264, 0.0
        %288 = vst.msk [vmem:[#allocation2 + $0xb8] sm:$0xff] %vm264, 0.0
        %289 = vst.msk [vmem:[#allocation2 + $0xc0] sm:$0xff] %vm264, 0.0
        %290 = vst.msk [vmem:[#allocation2 + $0xc8] sm:$0xff] %vm264, 0.0
        %291 = vst.msk [vmem:[#allocation2 + $0xd0] sm:$0xff] %vm264, 0.0
        %292 = vst.msk [vmem:[#allocation2 + $0xd8] sm:$0xff] %vm264, 0.0
        %293 = vst.msk [vmem:[#allocation2 + $0xe0] sm:$0xff] %vm264, 0.0
        %294 = vst.msk [vmem:[#allocation2 + $0xe8] sm:$0xff] %vm264, 0.0
        %295 = vst.msk [vmem:[#allocation2 + $0xf0] sm:$0xff] %vm264, 0.0
        %296 = vst.msk [vmem:[#allocation2 + $0xf8] sm:$0xff] %vm264, 0.0
      $region36: #{_lambda_.2} parent=31 // pred_fallthru
        _
      %v297 = vld [vmem:[#allocation2] sm:$0xff]
      %v298 = vld [vmem:[#allocation2 + $0x8] sm:$0xff]
      %v299 = vld [vmem:[#allocation2 + $0x10] sm:$0xff]
      %v300 = vld [vmem:[#allocation2 + $0x18] sm:$0xff]
      %v301 = vld [vmem:[#allocation2 + $0x20] sm:$0xff]
      %v302 = vld [vmem:[#allocation2 + $0x28] sm:$0xff]
      %v303 = vld [vmem:[#allocation2 + $0x30] sm:$0xff]
      %v304 = vld [vmem:[#allocation2 + $0x38] sm:$0xff]
      %v305 = vld [vmem:[#allocation2 + $0x40] sm:$0xff]
      %v306 = vld [vmem:[#allocation2 + $0x48] sm:$0xff]
      %v307 = vld [vmem:[#allocation2 + $0x50] sm:$0xff]
      %v308 = vld [vmem:[#allocation2 + $0x58] sm:$0xff]
      %v309 = vld [vmem:[#allocation2 + $0x60] sm:$0xff]
      %v310 = vld [vmem:[#allocation2 + $0x68] sm:$0xff]
      %v311 = vld [vmem:[#allocation2 + $0x70] sm:$0xff]
      %v312 = vld [vmem:[#allocation2 + $0x78] sm:$0xff]
      %v313 = vld [vmem:[#allocation2 + $0x80] sm:$0xff]
      %v314 = vld [vmem:[#allocation2 + $0x88] sm:$0xff]
      %v315 = vld [vmem:[#allocation2 + $0x90] sm:$0xff]
      %v316 = vld [vmem:[#allocation2 + $0x98] sm:$0xff]
      %v317 = vld [vmem:[#allocation2 + $0xa0] sm:$0xff]
      %v318 = vld [vmem:[#allocation2 + $0xa8] sm:$0xff]
      %v319 = vld [vmem:[#allocation2 + $0xb0] sm:$0xff]
      %v320 = vld [vmem:[#allocation2 + $0xb8] sm:$0xff]
      %v321 = vld [vmem:[#allocation2 + $0xc0] sm:$0xff]
      %v322 = vld [vmem:[#allocation2 + $0xc8] sm:$0xff]
      %v323 = vld [vmem:[#allocation2 + $0xd0] sm:$0xff]
      %v324 = vld [vmem:[#allocation2 + $0xd8] sm:$0xff]
      %v325 = vld [vmem:[#allocation2 + $0xe0] sm:$0xff]
      %v326 = vld [vmem:[#allocation2 + $0xe8] sm:$0xff]
      %v327 = vld [vmem:[#allocation2 + $0xf0] sm:$0xff]
      %v328 = vld [vmem:[#allocation2 + $0xf8] sm:$0xff]
      %v329 = vld [vmem:[%s236] sm:$0xf]
      %v330 = vld [vmem:[%s236 + $0x4] sm:$0xf]
      %v331 = vld [vmem:[%s236 + $0x8] sm:$0xf]
      %v332 = vld [vmem:[%s236 + $0xc] sm:$0xf]
      %v333 = vld [vmem:[%s236 + $0x10] sm:$0xf]
      %v334 = vld [vmem:[%s236 + $0x14] sm:$0xf]
      %v335 = vld [vmem:[%s236 + $0x18] sm:$0xf]
      %v336 = vld [vmem:[%s236 + $0x1c] sm:$0xf]
      %v337 = vld [vmem:[%s236 + $0x20] sm:$0xf]
      %v338 = vld [vmem:[%s236 + $0x24] sm:$0xf]
      %v339 = vld [vmem:[%s236 + $0x28] sm:$0xf]
      %v340 = vld [vmem:[%s236 + $0x2c] sm:$0xf]
      %v341 = vld [vmem:[%s236 + $0x30] sm:$0xf]
      %v342 = vld [vmem:[%s236 + $0x34] sm:$0xf]
      %v343 = vld [vmem:[%s236 + $0x38] sm:$0xf]
      %v344 = vld [vmem:[%s236 + $0x3c] sm:$0xf]
      %v345 = vld [vmem:[%s236 + $0x40] sm:$0xf]
      %v346 = vld [vmem:[%s236 + $0x44] sm:$0xf]
      %v347 = vld [vmem:[%s236 + $0x48] sm:$0xf]
      %v348 = vld [vmem:[%s236 + $0x4c] sm:$0xf]
      %v349 = vld [vmem:[%s236 + $0x50] sm:$0xf]
      %v350 = vld [vmem:[%s236 + $0x54] sm:$0xf]
      %v351 = vld [vmem:[%s236 + $0x58] sm:$0xf]
      %v352 = vld [vmem:[%s236 + $0x5c] sm:$0xf]
      %v353 = vld [vmem:[%s236 + $0x60] sm:$0xf]
      %v354 = vld [vmem:[%s236 + $0x64] sm:$0xf]
      %v355 = vld [vmem:[%s236 + $0x68] sm:$0xf]
      %v356 = vld [vmem:[%s236 + $0x6c] sm:$0xf]
      %v357 = vld [vmem:[%s236 + $0x70] sm:$0xf]
      %v358 = vld [vmem:[%s236 + $0x74] sm:$0xf]
      %v359 = vld [vmem:[%s236 + $0x78] sm:$0xf]
      %v360 = vld [vmem:[%s236 + $0x7c] sm:$0xf]
      %v361 = vld [vmem:[%s245] sm:$0xf]
      %v362 = vld [vmem:[%s245 + $0x4] sm:$0xf]
      %v363 = vld [vmem:[%s245 + $0x8] sm:$0xf]
      %v364 = vld [vmem:[%s245 + $0xc] sm:$0xf]
      %v365 = vld [vmem:[%s245 + $0x10] sm:$0xf]
      %v366 = vld [vmem:[%s245 + $0x14] sm:$0xf]
      %v367 = vld [vmem:[%s245 + $0x18] sm:$0xf]
      %v368 = vld [vmem:[%s245 + $0x1c] sm:$0xf]
      %v401 = vunpack.c.l.b16 %v329
      %v402 = vunpack.c.l.b16 %v330
      %v403 = vunpack.c.l.b16 %v331
      %v404 = vunpack.c.l.b16 %v332
      %v405 = vunpack.c.l.b16 %v333
      %v406 = vunpack.c.l.b16 %v334
      %v407 = vunpack.c.l.b16 %v335
      %v408 = vunpack.c.l.b16 %v336
      %v409 = vunpack.c.l.b16 %v337
      %v410 = vunpack.c.l.b16 %v338
      %v411 = vunpack.c.l.b16 %v339
      %v412 = vunpack.c.l.b16 %v340
      %v413 = vunpack.c.l.b16 %v341
      %v414 = vunpack.c.l.b16 %v342
      %v415 = vunpack.c.l.b16 %v343
      %v416 = vunpack.c.l.b16 %v344
      %v417 = vunpack.c.l.b16 %v345
      %v418 = vunpack.c.l.b16 %v346
      %v419 = vunpack.c.l.b16 %v347
      %v420 = vunpack.c.l.b16 %v348
      %v421 = vunpack.c.l.b16 %v349
      %v422 = vunpack.c.l.b16 %v350
      %v423 = vunpack.c.l.b16 %v351
      %v424 = vunpack.c.l.b16 %v352
      %v425 = vunpack.c.l.b16 %v353
      %v426 = vunpack.c.l.b16 %v354
      %v427 = vunpack.c.l.b16 %v355
      %v428 = vunpack.c.l.b16 %v356
      %v429 = vunpack.c.l.b16 %v357
      %v430 = vunpack.c.l.b16 %v358
      %v431 = vunpack.c.l.b16 %v359
      %v432 = vunpack.c.l.b16 %v360
      %v433 = vpack.c.b16 %v402, %v401
      %v434 = vpack.c.b16 %v404, %v403
      %v435 = vpack.c.b16 %v406, %v405
      %v436 = vpack.c.b16 %v408, %v407
      %v437 = vpack.c.b16 %v410, %v409
      %v438 = vpack.c.b16 %v412, %v411
      %v439 = vpack.c.b16 %v414, %v413
      %v440 = vpack.c.b16 %v416, %v415
      %v441 = vpack.c.b16 %v418, %v417
      %v442 = vpack.c.b16 %v420, %v419
      %v443 = vpack.c.b16 %v422, %v421
      %v444 = vpack.c.b16 %v424, %v423
      %v445 = vpack.c.b16 %v426, %v425
      %v446 = vpack.c.b16 %v428, %v427
      %v447 = vpack.c.b16 %v430, %v429
      %v448 = vpack.c.b16 %v432, %v431
      %v457 = vunpack.c.l.b16 %v361
      %v458 = vunpack.c.l.b16 %v362
      %v459 = vunpack.c.l.b16 %v363
      %v460 = vunpack.c.l.b16 %v364
      %v461 = vunpack.c.l.b16 %v365
      %v462 = vunpack.c.l.b16 %v366
      %v463 = vunpack.c.l.b16 %v367
      %v464 = vunpack.c.l.b16 %v368
      %v465 = vpack.c.b16 %v458, %v457
      %v466 = vpack.c.b16 %v460, %v459
      %v467 = vpack.c.b16 %v462, %v461
      %v468 = vpack.c.b16 %v464, %v463
      %vm473 = vcmask 523264
      %v475 = vsel %vm473, %v433, 0
      %v478 = vsel %vm473, %v434, 0
      %v481 = vsel %vm473, %v435, 0
      %v484 = vsel %vm473, %v436, 0
      %v487 = vsel %vm473, %v437, 0
      %v490 = vsel %vm473, %v438, 0
      %v493 = vsel %vm473, %v439, 0
      %v496 = vsel %vm473, %v440, 0
      %v499 = vsel %vm473, %v441, 0
      %v502 = vsel %vm473, %v442, 0
      %v505 = vsel %vm473, %v443, 0
      %v508 = vsel %vm473, %v444, 0
      %v511 = vsel %vm473, %v445, 0
      %v514 = vsel %vm473, %v446, 0
      %v517 = vsel %vm473, %v447, 0
      %v520 = vsel %vm473, %v448, 0
      %522 = vmatprep.subr.bf16.mxu0 0
      %523 = vmatpush1.bf16.msra.mxu0 0
      %524 = vmatprep.subr.bf16.mxu0 0
      %525 = vmatpush1.bf16.msra.mxu0 0
      %526 = vmatprep.subr.bf16.mxu0 0
      %527 = vmatpush1.bf16.msra.mxu0 0
      %528 = vmatprep.subr.bf16.mxu0 0
      %529 = vmatpush1.bf16.msra.mxu0 0
      %530 = vmatprep.subr.bf16.mxu0 0
      %531 = vmatpush1.bf16.msra.mxu0 %v468
      %532 = vmatprep.subr.bf16.mxu0 0
      %533 = vmatpush1.bf16.msra.mxu0 %v467
      %534 = vmatprep.subr.bf16.mxu0 0
      %535 = vmatpush1.bf16.msra.mxu0 %v466
      %536 = vmatprep.subr.bf16.mxu0 0
      %537 = vmatpush1.bf16.msra.mxu0 %v465
      %538 = vmatprep.subr.bf16.mxu0 0
      %539 = vmatpush2.bf16.msra.mxu0 0
      %540 = vmatprep.subr.bf16.mxu0 0
      %541 = vmatpush2.bf16.msra.mxu0 0
      %542 = vmatprep.subr.bf16.mxu0 0
      %543 = vmatpush2.bf16.msra.mxu0 0
      %544 = vmatprep.subr.bf16.mxu0 0
      %545 = vmatpush2.bf16.msra.mxu0 0
      %546 = vmatprep.subr.bf16.mxu0 0
      %547 = vmatpush2.bf16.msra.mxu0 0
      %548 = vmatprep.subr.bf16.mxu0 0
      %549 = vmatpush2.bf16.msra.mxu0 0
      %550 = vmatprep.subr.bf16.mxu0 0
      %551 = vmatpush2.bf16.msra.mxu0 0
      %552 = vmatprep.subr.bf16.mxu0 0
      %553 = vmatpush2.bf16.msra.mxu0 0
      %554 = vmatprep.mubr.bf16.mxu0 0
      %555 = vmatmul.mubr.bf16.gmra.mxu0 %v475
      %v556 = vpop.f32.mrf.mxu0
      %v557 = vadd.f32 0.0, %v556
      %v558 = vpop.f32.mrf.mxu0
      %v559 = vpop.f32.mrf.mxu0
      %v560 = vadd.f32 0.0, %v559
      %v561 = vpop.f32.mrf.mxu0
      %562 = vmatprep.mubr.bf16.mxu0 0
      %563 = vmatmul.mubr.bf16.gmra.mxu0 %v478
      %v564 = vpop.f32.mrf.mxu0
      %v565 = vadd.f32 0.0, %v564
      %v566 = vpop.f32.mrf.mxu0
      %v567 = vpop.f32.mrf.mxu0
      %v568 = vadd.f32 0.0, %v567
      %v569 = vpop.f32.mrf.mxu0
      %570 = vmatprep.mubr.bf16.mxu0 0
      %571 = vmatmul.mubr.bf16.gmra.mxu0 %v481
      %v572 = vpop.f32.mrf.mxu0
      %v573 = vadd.f32 0.0, %v572
      %v574 = vpop.f32.mrf.mxu0
      %v575 = vpop.f32.mrf.mxu0
      %v576 = vadd.f32 0.0, %v575
      %v577 = vpop.f32.mrf.mxu0
      %578 = vmatprep.mubr.bf16.mxu0 0
      %579 = vmatmul.mubr.bf16.gmra.mxu0 %v484
      %v580 = vpop.f32.mrf.mxu0
      %v581 = vadd.f32 0.0, %v580
      %v582 = vpop.f32.mrf.mxu0
      %v583 = vpop.f32.mrf.mxu0
      %v584 = vadd.f32 0.0, %v583
      %v585 = vpop.f32.mrf.mxu0
      %586 = vmatprep.mubr.bf16.mxu0 0
      %587 = vmatmul.mubr.bf16.gmra.mxu0 %v487
      %v588 = vpop.f32.mrf.mxu0
      %v589 = vadd.f32 0.0, %v588
      %v590 = vpop.f32.mrf.mxu0
      %v591 = vpop.f32.mrf.mxu0
      %v592 = vadd.f32 0.0, %v591
      %v593 = vpop.f32.mrf.mxu0
      %594 = vmatprep.mubr.bf16.mxu0 0
      %595 = vmatmul.mubr.bf16.gmra.mxu0 %v490
      %v596 = vpop.f32.mrf.mxu0
      %v597 = vadd.f32 0.0, %v596
      %v598 = vpop.f32.mrf.mxu0
      %v599 = vpop.f32.mrf.mxu0
      %v600 = vadd.f32 0.0, %v599
      %v601 = vpop.f32.mrf.mxu0
      %602 = vmatprep.mubr.bf16.mxu0 0
      %603 = vmatmul.mubr.bf16.gmra.mxu0 %v493
      %v604 = vpop.f32.mrf.mxu0
      %v605 = vadd.f32 0.0, %v604
      %v606 = vpop.f32.mrf.mxu0
      %v607 = vpop.f32.mrf.mxu0
      %v608 = vadd.f32 0.0, %v607
      %v609 = vpop.f32.mrf.mxu0
      %610 = vmatprep.mubr.bf16.mxu0 0
      %611 = vmatmul.mubr.bf16.gmra.mxu0 %v496
      %v612 = vpop.f32.mrf.mxu0
      %v613 = vadd.f32 0.0, %v612
      %v614 = vpop.f32.mrf.mxu0
      %v615 = vpop.f32.mrf.mxu0
      %v616 = vadd.f32 0.0, %v615
      %v617 = vpop.f32.mrf.mxu0
      %618 = vmatprep.mubr.bf16.mxu0 0
      %619 = vmatmul.mubr.bf16.gmra.mxu0 %v499
      %v620 = vpop.f32.mrf.mxu0
      %v621 = vadd.f32 0.0, %v620
      %v622 = vpop.f32.mrf.mxu0
      %v623 = vpop.f32.mrf.mxu0
      %v624 = vadd.f32 0.0, %v623
      %v625 = vpop.f32.mrf.mxu0
      %626 = vmatprep.mubr.bf16.mxu0 0
      %627 = vmatmul.mubr.bf16.gmra.mxu0 %v502
      %v628 = vpop.f32.mrf.mxu0
      %v629 = vadd.f32 0.0, %v628
      %v630 = vpop.f32.mrf.mxu0
      %v631 = vpop.f32.mrf.mxu0
      %v632 = vadd.f32 0.0, %v631
      %v633 = vpop.f32.mrf.mxu0
      %634 = vmatprep.mubr.bf16.mxu0 0
      %635 = vmatmul.mubr.bf16.gmra.mxu0 %v505
      %v636 = vpop.f32.mrf.mxu0
      %v637 = vadd.f32 0.0, %v636
      %v638 = vpop.f32.mrf.mxu0
      %v639 = vpop.f32.mrf.mxu0
      %v640 = vadd.f32 0.0, %v639
      %v641 = vpop.f32.mrf.mxu0
      %642 = vmatprep.mubr.bf16.mxu0 0
      %643 = vmatmul.mubr.bf16.gmra.mxu0 %v508
      %v644 = vpop.f32.mrf.mxu0
      %v645 = vadd.f32 0.0, %v644
      %v646 = vpop.f32.mrf.mxu0
      %v647 = vpop.f32.mrf.mxu0
      %v648 = vadd.f32 0.0, %v647
      %v649 = vpop.f32.mrf.mxu0
      %650 = vmatprep.mubr.bf16.mxu0 0
      %651 = vmatmul.mubr.bf16.gmra.mxu0 %v511
      %v652 = vpop.f32.mrf.mxu0
      %v653 = vadd.f32 0.0, %v652
      %v654 = vpop.f32.mrf.mxu0
      %v655 = vpop.f32.mrf.mxu0
      %v656 = vadd.f32 0.0, %v655
      %v657 = vpop.f32.mrf.mxu0
      %658 = vmatprep.mubr.bf16.mxu0 0
      %659 = vmatmul.mubr.bf16.gmra.mxu0 %v514
      %v660 = vpop.f32.mrf.mxu0
      %v661 = vadd.f32 0.0, %v660
      %v662 = vpop.f32.mrf.mxu0
      %v663 = vpop.f32.mrf.mxu0
      %v664 = vadd.f32 0.0, %v663
      %v665 = vpop.f32.mrf.mxu0
      %666 = vmatprep.mubr.bf16.mxu0 0
      %667 = vmatmul.mubr.bf16.gmra.mxu0 %v517
      %v668 = vpop.f32.mrf.mxu0
      %v669 = vadd.f32 0.0, %v668
      %v670 = vpop.f32.mrf.mxu0
      %v671 = vpop.f32.mrf.mxu0
      %v672 = vadd.f32 0.0, %v671
      %v673 = vpop.f32.mrf.mxu0
      %674 = vmatprep.mubr.bf16.mxu0 0
      %675 = vmatmul.mubr.bf16.gmra.mxu0 %v520
      %v676 = vpop.f32.mrf.mxu0
      %v677 = vadd.f32 0.0, %v676
      %v678 = vpop.f32.mrf.mxu0
      %v679 = vpop.f32.mrf.mxu0
      %v680 = vadd.f32 0.0, %v679
      %v681 = vpop.f32.mrf.mxu0
      %682 = vdwg.mxu0
      %v683 = vadd.f32 %v297, %v557
      %v684 = vadd.f32 %v298, %v560
      %v685 = vadd.f32 %v299, %v565
      %v686 = vadd.f32 %v300, %v568
      %v687 = vadd.f32 %v301, %v573
      %v688 = vadd.f32 %v302, %v576
      %v689 = vadd.f32 %v303, %v581
      %v690 = vadd.f32 %v304, %v584
      %v691 = vadd.f32 %v305, %v589
      %v692 = vadd.f32 %v306, %v592
      %v693 = vadd.f32 %v307, %v597
      %v694 = vadd.f32 %v308, %v600
      %v695 = vadd.f32 %v309, %v605
      %v696 = vadd.f32 %v310, %v608
      %v697 = vadd.f32 %v311, %v613
      %v698 = vadd.f32 %v312, %v616
      %v699 = vadd.f32 %v313, %v621
      %v700 = vadd.f32 %v314, %v624
      %v701 = vadd.f32 %v315, %v629
      %v702 = vadd.f32 %v316, %v632
      %v703 = vadd.f32 %v317, %v637
      %v704 = vadd.f32 %v318, %v640
      %v705 = vadd.f32 %v319, %v645
      %v706 = vadd.f32 %v320, %v648
      %v707 = vadd.f32 %v321, %v653
      %v708 = vadd.f32 %v322, %v656
      %v709 = vadd.f32 %v323, %v661
      %v710 = vadd.f32 %v324, %v664
      %v711 = vadd.f32 %v325, %v669
      %v712 = vadd.f32 %v326, %v672
      %v713 = vadd.f32 %v327, %v677
      %v714 = vadd.f32 %v328, %v680
      %vm715 = vcmask 261120
      %716 = vst.msk [vmem:[#allocation2] sm:$0xff] %vm715, %v683
      %717 = vst.msk [vmem:[#allocation2 + $0x8] sm:$0xff] %vm715, %v684
      %718 = vst.msk [vmem:[#allocation2 + $0x10] sm:$0xff] %vm715, %v685
      %719 = vst.msk [vmem:[#allocation2 + $0x18] sm:$0xff] %vm715, %v686
      %720 = vst.msk [vmem:[#allocation2 + $0x20] sm:$0xff] %vm715, %v687
      %721 = vst.msk [vmem:[#allocation2 + $0x28] sm:$0xff] %vm715, %v688
      %722 = vst.msk [vmem:[#allocation2 + $0x30] sm:$0xff] %vm715, %v689
      %723 = vst.msk [vmem:[#allocation2 + $0x38] sm:$0xff] %vm715, %v690
      %724 = vst.msk [vmem:[#allocation2 + $0x40] sm:$0xff] %vm715, %v691
      %725 = vst.msk [vmem:[#allocation2 + $0x48] sm:$0xff] %vm715, %v692
      %726 = vst.msk [vmem:[#allocation2 + $0x50] sm:$0xff] %vm715, %v693
      %727 = vst.msk [vmem:[#allocation2 + $0x58] sm:$0xff] %vm715, %v694
      %728 = vst.msk [vmem:[#allocation2 + $0x60] sm:$0xff] %vm715, %v695
      %729 = vst.msk [vmem:[#allocation2 + $0x68] sm:$0xff] %vm715, %v696
      %730 = vst.msk [vmem:[#allocation2 + $0x70] sm:$0xff] %vm715, %v697
      %731 = vst.msk [vmem:[#allocation2 + $0x78] sm:$0xff] %vm715, %v698
      %732 = vst.msk [vmem:[#allocation2 + $0x80] sm:$0xff] %vm715, %v699
      %733 = vst.msk [vmem:[#allocation2 + $0x88] sm:$0xff] %vm715, %v700
      %734 = vst.msk [vmem:[#allocation2 + $0x90] sm:$0xff] %vm715, %v701
      %735 = vst.msk [vmem:[#allocation2 + $0x98] sm:$0xff] %vm715, %v702
      %736 = vst.msk [vmem:[#allocation2 + $0xa0] sm:$0xff] %vm715, %v703
      %737 = vst.msk [vmem:[#allocation2 + $0xa8] sm:$0xff] %vm715, %v704
      %738 = vst.msk [vmem:[#allocation2 + $0xb0] sm:$0xff] %vm715, %v705
      %739 = vst.msk [vmem:[#allocation2 + $0xb8] sm:$0xff] %vm715, %v706
      %740 = vst.msk [vmem:[#allocation2 + $0xc0] sm:$0xff] %vm715, %v707
      %741 = vst.msk [vmem:[#allocation2 + $0xc8] sm:$0xff] %vm715, %v708
      %742 = vst.msk [vmem:[#allocation2 + $0xd0] sm:$0xff] %vm715, %v709
      %743 = vst.msk [vmem:[#allocation2 + $0xd8] sm:$0xff] %vm715, %v710
      %744 = vst.msk [vmem:[#allocation2 + $0xe0] sm:$0xff] %vm715, %v711
      %745 = vst.msk [vmem:[#allocation2 + $0xe8] sm:$0xff] %vm715, %v712
      %746 = vst.msk [vmem:[#allocation2 + $0xf0] sm:$0xff] %vm715, %v713
      %747 = vst.msk [vmem:[#allocation2 + $0xf8] sm:$0xff] %vm715, %v714
      // Predicated region
      $region37: #{_lambda_.2} parent=31 // pred_check
        %p748 = pneg %p260
      $region38: #{_lambda_.2} parent=31 // pred_check_branch
        %750 = sbr.rel (%p748) target = $region40
      $region39: #{_lambda_.2} parent=31 // pred_region
        %v751 = vld [vmem:[#allocation2] sm:$0xff]
        %v752 = vld [vmem:[#allocation2 + $0x8] sm:$0xff]
        %v753 = vld [vmem:[#allocation2 + $0x10] sm:$0xff]
        %v754 = vld [vmem:[#allocation2 + $0x18] sm:$0xff]
        %v755 = vld [vmem:[#allocation2 + $0x20] sm:$0xff]
        %v756 = vld [vmem:[#allocation2 + $0x28] sm:$0xff]
        %v757 = vld [vmem:[#allocation2 + $0x30] sm:$0xff]
        %v758 = vld [vmem:[#allocation2 + $0x38] sm:$0xff]
        %v759 = vld [vmem:[#allocation2 + $0x40] sm:$0xff]
        %v760 = vld [vmem:[#allocation2 + $0x48] sm:$0xff]
        %v761 = vld [vmem:[#allocation2 + $0x50] sm:$0xff]
        %v762 = vld [vmem:[#allocation2 + $0x58] sm:$0xff]
        %v763 = vld [vmem:[#allocation2 + $0x60] sm:$0xff]
        %v764 = vld [vmem:[#allocation2 + $0x68] sm:$0xff]
        %v765 = vld [vmem:[#allocation2 + $0x70] sm:$0xff]
        %v766 = vld [vmem:[#allocation2 + $0x78] sm:$0xff]
        %v767 = vld [vmem:[#allocation2 + $0x80] sm:$0xff]
        %v768 = vld [vmem:[#allocation2 + $0x88] sm:$0xff]
        %v769 = vld [vmem:[#allocation2 + $0x90] sm:$0xff]
        %v770 = vld [vmem:[#allocation2 + $0x98] sm:$0xff]
        %v771 = vld [vmem:[#allocation2 + $0xa0] sm:$0xff]
        %v772 = vld [vmem:[#allocation2 + $0xa8] sm:$0xff]
        %v773 = vld [vmem:[#allocation2 + $0xb0] sm:$0xff]
        %v774 = vld [vmem:[#allocation2 + $0xb8] sm:$0xff]
        %v775 = vld [vmem:[#allocation2 + $0xc0] sm:$0xff]
        %v776 = vld [vmem:[#allocation2 + $0xc8] sm:$0xff]
        %v777 = vld [vmem:[#allocation2 + $0xd0] sm:$0xff]
        %v778 = vld [vmem:[#allocation2 + $0xd8] sm:$0xff]
        %v779 = vld [vmem:[#allocation2 + $0xe0] sm:$0xff]
        %v780 = vld [vmem:[#allocation2 + $0xe8] sm:$0xff]
        %v781 = vld [vmem:[#allocation2 + $0xf0] sm:$0xff]
        %v782 = vld [vmem:[#allocation2 + $0xf8] sm:$0xff]
        %v783 = vld [vmem:[%s249] sm:$0x1]
        %v785 = vlaneseq
        %v786 = vshrl.u32 %v785, 7
        %v787 = vsub.s32 0, %v786
        %v788 = vrot.slane %v783, %v787
        %v790 = vadd.f32 %v751, %v788
        %v791 = vadd.f32 %v752, %v788
        %v792 = vadd.f32 %v753, %v788
        %v793 = vadd.f32 %v754, %v788
        %v794 = vadd.f32 %v755, %v788
        %v795 = vadd.f32 %v756, %v788
        %v796 = vadd.f32 %v757, %v788
        %v797 = vadd.f32 %v758, %v788
        %v798 = vadd.f32 %v759, %v788
        %v799 = vadd.f32 %v760, %v788
        %v800 = vadd.f32 %v761, %v788
        %v801 = vadd.f32 %v762, %v788
        %v802 = vadd.f32 %v763, %v788
        %v803 = vadd.f32 %v764, %v788
        %v804 = vadd.f32 %v765, %v788
        %v805 = vadd.f32 %v766, %v788
        %v806 = vadd.f32 %v767, %v788
        %v807 = vadd.f32 %v768, %v788
        %v808 = vadd.f32 %v769, %v788
        %v809 = vadd.f32 %v770, %v788
        %v810 = vadd.f32 %v771, %v788
        %v811 = vadd.f32 %v772, %v788
        %v812 = vadd.f32 %v773, %v788
        %v813 = vadd.f32 %v774, %v788
        %v814 = vadd.f32 %v775, %v788
        %v815 = vadd.f32 %v776, %v788
        %v816 = vadd.f32 %v777, %v788
        %v817 = vadd.f32 %v778, %v788
        %v818 = vadd.f32 %v779, %v788
        %v819 = vadd.f32 %v780, %v788
        %v820 = vadd.f32 %v781, %v788
        %v821 = vadd.f32 %v782, %v788
        %v822 = vmax.f32 %v790, 0.0
        %v823 = vmax.f32 %v791, 0.0
        %v824 = vmax.f32 %v792, 0.0
        %v825 = vmax.f32 %v793, 0.0
        %v826 = vmax.f32 %v794, 0.0
        %v827 = vmax.f32 %v795, 0.0
        %v828 = vmax.f32 %v796, 0.0
        %v829 = vmax.f32 %v797, 0.0
        %v830 = vmax.f32 %v798, 0.0
        %v831 = vmax.f32 %v799, 0.0
        %v832 = vmax.f32 %v800, 0.0
        %v833 = vmax.f32 %v801, 0.0
        %v834 = vmax.f32 %v802, 0.0
        %v835 = vmax.f32 %v803, 0.0
        %v836 = vmax.f32 %v804, 0.0
        %v837 = vmax.f32 %v805, 0.0
        %v838 = vmax.f32 %v806, 0.0
        %v839 = vmax.f32 %v807, 0.0
        %v840 = vmax.f32 %v808, 0.0
        %v841 = vmax.f32 %v809, 0.0
        %v842 = vmax.f32 %v810, 0.0
        %v843 = vmax.f32 %v811, 0.0
        %v844 = vmax.f32 %v812, 0.0
        %v845 = vmax.f32 %v813, 0.0
        %v846 = vmax.f32 %v814, 0.0
        %v847 = vmax.f32 %v815, 0.0
        %v848 = vmax.f32 %v816, 0.0
        %v849 = vmax.f32 %v817, 0.0
        %v850 = vmax.f32 %v818, 0.0
        %v851 = vmax.f32 %v819, 0.0
        %v852 = vmax.f32 %v820, 0.0
        %v853 = vmax.f32 %v821, 0.0
        %v854 = vpack.c.bf16 %v823, %v822
        %v855 = vpack.c.bf16 %v825, %v824
        %v856 = vpack.c.bf16 %v827, %v826
        %v857 = vpack.c.bf16 %v829, %v828
        %v858 = vpack.c.bf16 %v831, %v830
        %v859 = vpack.c.bf16 %v833, %v832
        %v860 = vpack.c.bf16 %v835, %v834
        %v861 = vpack.c.bf16 %v837, %v836
        %v862 = vpack.c.bf16 %v839, %v838
        %v863 = vpack.c.bf16 %v841, %v840
        %v864 = vpack.c.bf16 %v843, %v842
        %v865 = vpack.c.bf16 %v845, %v844
        %v866 = vpack.c.bf16 %v847, %v846
        %v867 = vpack.c.bf16 %v849, %v848
        %v868 = vpack.c.bf16 %v851, %v850
        %v869 = vpack.c.bf16 %v853, %v852
        %v886 = vunpack.c.l.b16 %v854
        %v887 = vunpack.c.h.b16 %v854
        %v888 = vunpack.c.l.b16 %v855
        %v889 = vunpack.c.h.b16 %v855
        %v890 = vunpack.c.l.b16 %v856
        %v891 = vunpack.c.h.b16 %v856
        %v892 = vunpack.c.l.b16 %v857
        %v893 = vunpack.c.h.b16 %v857
        %v894 = vunpack.c.l.b16 %v858
        %v895 = vunpack.c.h.b16 %v858
        %v896 = vunpack.c.l.b16 %v859
        %v897 = vunpack.c.h.b16 %v859
        %v898 = vunpack.c.l.b16 %v860
        %v899 = vunpack.c.h.b16 %v860
        %v900 = vunpack.c.l.b16 %v861
        %v901 = vunpack.c.h.b16 %v861
        %v902 = vunpack.c.l.b16 %v862
        %v903 = vunpack.c.h.b16 %v862
        %v904 = vunpack.c.l.b16 %v863
        %v905 = vunpack.c.h.b16 %v863
        %v906 = vunpack.c.l.b16 %v864
        %v907 = vunpack.c.h.b16 %v864
        %v908 = vunpack.c.l.b16 %v865
        %v909 = vunpack.c.h.b16 %v865
        %v910 = vunpack.c.l.b16 %v866
        %v911 = vunpack.c.h.b16 %v866
        %v912 = vunpack.c.l.b16 %v867
        %v913 = vunpack.c.h.b16 %v867
        %v914 = vunpack.c.l.b16 %v868
        %v915 = vunpack.c.h.b16 %v868
        %v916 = vunpack.c.l.b16 %v869
        %v917 = vunpack.c.h.b16 %v869
        %v918 = vpack.c.b16 %v886, %v886
        %v919 = vpack.c.b16 %v887, %v887
        %v920 = vpack.c.b16 %v888, %v888
        %v921 = vpack.c.b16 %v889, %v889
        %v922 = vpack.c.b16 %v890, %v890
        %v923 = vpack.c.b16 %v891, %v891
        %v924 = vpack.c.b16 %v892, %v892
        %v925 = vpack.c.b16 %v893, %v893
        %v926 = vpack.c.b16 %v894, %v894
        %v927 = vpack.c.b16 %v895, %v895
        %v928 = vpack.c.b16 %v896, %v896
        %v929 = vpack.c.b16 %v897, %v897
        %v930 = vpack.c.b16 %v898, %v898
        %v931 = vpack.c.b16 %v899, %v899
        %v932 = vpack.c.b16 %v900, %v900
        %v933 = vpack.c.b16 %v901, %v901
        %v934 = vpack.c.b16 %v902, %v902
        %v935 = vpack.c.b16 %v903, %v903
        %v936 = vpack.c.b16 %v904, %v904
        %v937 = vpack.c.b16 %v905, %v905
        %v938 = vpack.c.b16 %v906, %v906
        %v939 = vpack.c.b16 %v907, %v907
        %v940 = vpack.c.b16 %v908, %v908
        %v941 = vpack.c.b16 %v909, %v909
        %v942 = vpack.c.b16 %v910, %v910
        %v943 = vpack.c.b16 %v911, %v911
        %v944 = vpack.c.b16 %v912, %v912
        %v945 = vpack.c.b16 %v913, %v913
        %v946 = vpack.c.b16 %v914, %v914
        %v947 = vpack.c.b16 %v915, %v915
        %v948 = vpack.c.b16 %v916, %v916
        %v949 = vpack.c.b16 %v917, %v917
        %vm982 = vcmask 257024
        %983 = vst.msk [vmem:[%s257] sm:$0xf] %vm982, %v918
        %984 = vst.msk [vmem:[%s257 + $0x4] sm:$0xf] %vm982, %v919
        %985 = vst.msk [vmem:[%s257 + $0x8] sm:$0xf] %vm982, %v920
        %986 = vst.msk [vmem:[%s257 + $0xc] sm:$0xf] %vm982, %v921
        %987 = vst.msk [vmem:[%s257 + $0x10] sm:$0xf] %vm982, %v922
        %988 = vst.msk [vmem:[%s257 + $0x14] sm:$0xf] %vm982, %v923
        %989 = vst.msk [vmem:[%s257 + $0x18] sm:$0xf] %vm982, %v924
        %990 = vst.msk [vmem:[%s257 + $0x1c] sm:$0xf] %vm982, %v925
        %991 = vst.msk [vmem:[%s257 + $0x20] sm:$0xf] %vm982, %v926
        %992 = vst.msk [vmem:[%s257 + $0x24] sm:$0xf] %vm982, %v927
        %993 = vst.msk [vmem:[%s257 + $0x28] sm:$0xf] %vm982, %v928
        %994 = vst.msk [vmem:[%s257 + $0x2c] sm:$0xf] %vm982, %v929
        %995 = vst.msk [vmem:[%s257 + $0x30] sm:$0xf] %vm982, %v930
        %996 = vst.msk [vmem:[%s257 + $0x34] sm:$0xf] %vm982, %v931
        %997 = vst.msk [vmem:[%s257 + $0x38] sm:$0xf] %vm982, %v932
        %998 = vst.msk [vmem:[%s257 + $0x3c] sm:$0xf] %vm982, %v933
        %999 = vst.msk [vmem:[%s257 + $0x40] sm:$0xf] %vm982, %v934
        %1000 = vst.msk [vmem:[%s257 + $0x44] sm:$0xf] %vm982, %v935
        %1001 = vst.msk [vmem:[%s257 + $0x48] sm:$0xf] %vm982, %v936
        %1002 = vst.msk [vmem:[%s257 + $0x4c] sm:$0xf] %vm982, %v937
        %1003 = vst.msk [vmem:[%s257 + $0x50] sm:$0xf] %vm982, %v938
        %1004 = vst.msk [vmem:[%s257 + $0x54] sm:$0xf] %vm982, %v939
        %1005 = vst.msk [vmem:[%s257 + $0x58] sm:$0xf] %vm982, %v940
        %1006 = vst.msk [vmem:[%s257 + $0x5c] sm:$0xf] %vm982, %v941
        %1007 = vst.msk [vmem:[%s257 + $0x60] sm:$0xf] %vm982, %v942
        %1008 = vst.msk [vmem:[%s257 + $0x64] sm:$0xf] %vm982, %v943
        %1009 = vst.msk [vmem:[%s257 + $0x68] sm:$0xf] %vm982, %v944
        %1010 = vst.msk [vmem:[%s257 + $0x6c] sm:$0xf] %vm982, %v945
        %1011 = vst.msk [vmem:[%s257 + $0x70] sm:$0xf] %vm982, %v946
        %1012 = vst.msk [vmem:[%s257 + $0x74] sm:$0xf] %vm982, %v947
        %1013 = vst.msk [vmem:[%s257 + $0x78] sm:$0xf] %vm982, %v948
        %1014 = vst.msk [vmem:[%s257 + $0x7c] sm:$0xf] %vm982, %v949
      $region40: #{_lambda_.2} parent=31 // pred_fallthru
        _
      %s1015 = smul.u32 32, %s19
      %p1016 = scmp.lt.s32.totalorder %s1015, 63
      %s1017 = scalar_select %p1016, %s1015, 63
      %p1018 = scmp.lt.s32.totalorder %s20, 0
      %s1019 = scalar_select %p1018, %s20, 0
      %s1020 = sadd.s32 %s1019, %s1017
      %s1021 = smul.addr %s1020, 4
      %s1022 = scalar_lea.vmem %s3, %s1021
      // Predicated region
      $region41: #{_lambda_.2} parent=31 // pred_check
        %p1023 = pneg %p135
      $region42: #{_lambda_.2} parent=31 // pred_check_branch
        %1025 = sbr.rel (%p1023) target = $region44
      $region43: #{_lambda_.2} parent=31 // pred_region
        %s1026 = smul.u32 32, %s19
      $region44: #{_lambda_.2} parent=31 // pred_fallthru
        _
    $region32: #{_lambda_.2} parent=5 // pred_fallthru
      _
    %p1027 = scmp.le.s32.totalorder 2, %s9
    // Predicated region
    $region45: #{_lambda_.2} parent=5 // pred_check
      %p1028 = pneg %p1027
    $region46: #{_lambda_.2} parent=5 // pred_check_branch
      %1030 = sbr.rel (%p1028) target = $region48
    $region47: #{_lambda_.2} parent=5 // pred_region
      %s1031 = ssub.s32 %s9, 2
      // Predicated region
      $region49: #{_lambda_.2} parent=47 // pred_check
        %p1032 = pneg %p141
      $region50: #{_lambda_.2} parent=47 // pred_check_branch
        %1034 = sbr.rel (%p1032) target = $region52
      $region51: #{_lambda_.2} parent=47 // pred_region
        %s1035 = smul.u32 32, %s22
        %p1036 = scmp.lt.s32.totalorder %s1035, 63
        %s1037 = scalar_select %p1036, %s1035, 63
        %p1038 = scmp.lt.s32.totalorder %s23, 0
        %s1039 = scalar_select %p1038, %s23, 0
        %s1040 = sadd.s32 %s1039, %s1037
        %s1041 = smul.addr %s1040, 4
        %s1042 = scalar_lea.vmem %s3, %s1041
      $region52: #{_lambda_.2} parent=47 // pred_fallthru
        _
    $region48: #{_lambda_.2} parent=5 // pred_fallthru
      _
  $region6: #{_lambda_.2} parent=0 // loop_footer
    %s13 = sadd.s32 1, %s9
  $region7: #{_lambda_.2} parent=0 // loop_footer_branch
    %8 = sbr.rel target = $region3
  $region8: #{_lambda_.2} parent=0 // loop_exit
    _

// kernel: _lambda_.3
$region0: #{_lambda_.3}
  #allocation0 [shape = 'u32[]', space=smem, size = 0x4, offset = 0x4, fixed_abs, tag = 'smem constant byte address 0x4 - core index']
  #allocation1 [shape = 'u32[144,128]{1,0:T(1,128)}', space=vmem, size = 0x12000, scoped, tag = 'internal scratch']
  %s0 = inlined_call_operand.vmem [shape: bf16[2,18,18,32], index: 0, kind: input, shape index: {}]
  %s1 = inlined_call_operand.vmem [shape: bf16[2,16,16,64], index: 1, kind: input, shape index: {}]
  %s2 = inlined_call_operand.vmem [shape: bf16[9,32,32], index: 2, kind: input, shape index: {}]
  %s3 = inlined_call_operand.vmem [shape: f32[1,32], index: 3, kind: input, shape index: {}]
  %s4 = inlined_call_operand.vmem [shape: bf16[32,128], index: 4, kind: input, shape index: {}]
  %s5 = inlined_call_operand.vmem [shape: f32[1,128], index: 5, kind: input, shape index: {}, may-alias: {5,7}]
  %s6 = inlined_call_operand.vmem [shape: bf16[64,128], index: 6, kind: input, shape index: {}]
  %s7 = inlined_call_operand.vmem [shape: f32[1,128], index: 7, kind: input, shape index: {}, may-alias: {5,7}]
  %s8 = inlined_call_operand.vmem [shape: f32[2,16,16,128], index: 8, kind: output, shape index: {}]
  %s9 = sld [smem:[#allocation0]]
  $region65: #{_lambda_.3} parent=0
    _
  %s11 = ssub.s32 1, %s9
  %s12 = scalar_select 0, %s11, %s9
  loop: start=0, step=1, limit=4
  $region2: #{_lambda_.3} parent=0 // loop_pre_header
    _
  $region3: #{_lambda_.3} parent=0 // loop_header
    %s14 = sphi 0, %s18
    %p15 = scmp.ge.s32.totalorder %s14, 4
    %s24 = sphi 0, %s26
    %s27 = sphi 0, %s24
    %s28 = sphi 0, %s27
    %s44 = sphi 0, %s28
    %s50 = sphi 0, %s52
    %s53 = sphi 0, %s50
    %s54 = sphi 0, %s53
    %s70 = sphi 0, %s54
    %s74 = sphi 0, %s74
    %s76 = sphi 0, %s74
    %s77 = sphi 0, %s76
    %s91 = sphi 0, %s77
    %s95 = sphi 0, %s95
    %s97 = sphi 0, %s95
    %s98 = sphi 0, %s97
    %s112 = sphi 0, %s98
    %s116 = sphi 0, %s116
    %s118 = sphi 0, %s116
    %s119 = sphi 0, %s118
    %s133 = sphi 0, %s119
    %s137 = sphi 0, %s137
    %s139 = sphi 0, %s137
    %s140 = sphi 0, %s139
    %s154 = sphi 0, %s140
    %s158 = sphi 0, %s158
    %s160 = sphi 0, %s158
    %s161 = sphi 0, %s160
    %s175 = sphi 0, %s161
    %s179 = sphi 0, %s179
    %s181 = sphi 0, %s179
    %s182 = sphi 0, %s181
    %s196 = sphi 0, %s182
    %s202 = sphi 0, %s204
    %s205 = sphi 0, %s202
    %s206 = sphi 0, %s205
    %s222 = sphi 0, %s206
  $region4: #{_lambda_.3} parent=0 // loop_header_branch
    %17 = sbr.rel (%p15) target = $region8
  $region5: #{_lambda_.3} parent=0 // loop_body
    %s19 = ssub.s32 %s14, 1
    %s20 = ssub.s32 %s14, 2
    %s21 = sadd.s32 %s14, 1
    %s22 = ssub.s32 %s14, %s21
    %p23 = scmp.eq.s32.totalorder %s22, 0
    %s25 = sadd.s32 %s24, 1
    %s26 = scalar_select %p23, %s24, %s25
    %p29 = pneg %p23
    %p30 = scmp.eq.s32.totalorder %s14, 1
    %p31 = por %p29, %p30
    %p32 = scmp.ne.s32.totalorder %s24, %s27
    %p33 = scmp.eq.s32.totalorder %s14, 0
    %p34 = por %p32, %p33
    %p35 = scmp.ne.s32.totalorder %s24, %s27
    %p36 = scmp.eq.s32.totalorder %s19, 1
    %p37 = por %p35, %p36
    %p38 = scmp.ne.s32.totalorder %s27, %s28
    %p39 = scmp.eq.s32.totalorder %s19, 0
    %p40 = por %p38, %p39
    %p41 = scmp.ne.s32.totalorder %s27, %s28
    %p42 = scmp.eq.s32.totalorder %s20, 1
    %p43 = por %p41, %p42
    %p45 = scmp.ne.s32.totalorder %s28, %s44
    %p46 = scmp.eq.s32.totalorder %s20, 0
    %p47 = por %p45, %p46
    %s48 = ssub.s32 %s14, %s21
    %p49 = scmp.eq.s32.totalorder %s48, 0
    %s51 = sadd.s32 %s50, 1
    %s52 = scalar_select %p49, %s50, %s51
    %p55 = pneg %p49
    %p56 = scmp.eq.s32.totalorder %s14, 1
    %p57 = por %p55, %p56
    %p58 = scmp.ne.s32.totalorder %s50, %s53
    %p59 = scmp.eq.s32.totalorder %s14, 0
    %p60 = por %p58, %p59
    %p61 = scmp.ne.s32.totalorder %s50, %s53
    %p62 = scmp.eq.s32.totalorder %s19, 1
    %p63 = por %p61, %p62
    %p64 = scmp.ne.s32.totalorder %s53, %s54
    %p65 = scmp.eq.s32.totalorder %s19, 0
    %p66 = por %p64, %p65
    %p67 = scmp.ne.s32.totalorder %s53, %s54
    %p68 = scmp.eq.s32.totalorder %s20, 1
    %p69 = por %p67, %p68
    %p71 = scmp.ne.s32.totalorder %s54, %s70
    %p72 = scmp.eq.s32.totalorder %s20, 0
    %p73 = por %p71, %p72
    %s75 = sadd.s32 %s74, 1
    %p78 = scmp.eq.s32.totalorder %s14, 1
    %p79 = scmp.ne.s32.totalorder %s74, %s76
    %p80 = scmp.eq.s32.totalorder %s14, 0
    %p81 = por %p79, %p80
    %p82 = scmp.ne.s32.totalorder %s74, %s76
    %p83 = scmp.eq.s32.totalorder %s19, 1
    %p84 = por %p82, %p83
    %p85 = scmp.ne.s32.totalorder %s76, %s77
    %p86 = scmp.eq.s32.totalorder %s19, 0
    %p87 = por %p85, %p86
    %p88 = scmp.ne.s32.totalorder %s76, %s77
    %p89 = scmp.eq.s32.totalorder %s20, 1
    %p90 = por %p88, %p89
    %p92 = scmp.ne.s32.totalorder %s77, %s91
    %p93 = scmp.eq.s32.totalorder %s20, 0
    %p94 = por %p92, %p93
    %s96 = sadd.s32 %s95, 1
    %p99 = scmp.eq.s32.totalorder %s14, 1
    %p100 = scmp.ne.s32.totalorder %s95, %s97
    %p101 = scmp.eq.s32.totalorder %s14, 0
    %p102 = por %p100, %p101
    %p103 = scmp.ne.s32.totalorder %s95, %s97
    %p104 = scmp.eq.s32.totalorder %s19, 1
    %p105 = por %p103, %p104
    %p106 = scmp.ne.s32.totalorder %s97, %s98
    %p107 = scmp.eq.s32.totalorder %s19, 0
    %p108 = por %p106, %p107
    %p109 = scmp.ne.s32.totalorder %s97, %s98
    %p110 = scmp.eq.s32.totalorder %s20, 1
    %p111 = por %p109, %p110
    %p113 = scmp.ne.s32.totalorder %s98, %s112
    %p114 = scmp.eq.s32.totalorder %s20, 0
    %p115 = por %p113, %p114
    %s117 = sadd.s32 %s116, 1
    %p120 = scmp.eq.s32.totalorder %s14, 1
    %p121 = scmp.ne.s32.totalorder %s116, %s118
    %p122 = scmp.eq.s32.totalorder %s14, 0
    %p123 = por %p121, %p122
    %p124 = scmp.ne.s32.totalorder %s116, %s118
    %p125 = scmp.eq.s32.totalorder %s19, 1
    %p126 = por %p124, %p125
    %p127 = scmp.ne.s32.totalorder %s118, %s119
    %p128 = scmp.eq.s32.totalorder %s19, 0
    %p129 = por %p127, %p128
    %p130 = scmp.ne.s32.totalorder %s118, %s119
    %p131 = scmp.eq.s32.totalorder %s20, 1
    %p132 = por %p130, %p131
    %p134 = scmp.ne.s32.totalorder %s119, %s133
    %p135 = scmp.eq.s32.totalorder %s20, 0
    %p136 = por %p134, %p135
    %s138 = sadd.s32 %s137, 1
    %p141 = scmp.eq.s32.totalorder %s14, 1
    %p142 = scmp.ne.s32.totalorder %s137, %s139
    %p143 = scmp.eq.s32.totalorder %s14, 0
    %p144 = por %p142, %p143
    %p145 = scmp.ne.s32.totalorder %s137, %s139
    %p146 = scmp.eq.s32.totalorder %s19, 1
    %p147 = por %p145, %p146
    %p148 = scmp.ne.s32.totalorder %s139, %s140
    %p149 = scmp.eq.s32.totalorder %s19, 0
    %p150 = por %p148, %p149
    %p151 = scmp.ne.s32.totalorder %s139, %s140
    %p152 = scmp.eq.s32.totalorder %s20, 1
    %p153 = por %p151, %p152
    %p155 = scmp.ne.s32.totalorder %s140, %s154
    %p156 = scmp.eq.s32.totalorder %s20, 0
    %p157 = por %p155, %p156
    %s159 = sadd.s32 %s158, 1
    %p162 = scmp.eq.s32.totalorder %s14, 1
    %p163 = scmp.ne.s32.totalorder %s158, %s160
    %p164 = scmp.eq.s32.totalorder %s14, 0
    %p165 = por %p163, %p164
    %p166 = scmp.ne.s32.totalorder %s158, %s160
    %p167 = scmp.eq.s32.totalorder %s19, 1
    %p168 = por %p166, %p167
    %p169 = scmp.ne.s32.totalorder %s160, %s161
    %p170 = scmp.eq.s32.totalorder %s19, 0
    %p171 = por %p169, %p170
    %p172 = scmp.ne.s32.totalorder %s160, %s161
    %p173 = scmp.eq.s32.totalorder %s20, 1
    %p174 = por %p172, %p173
    %p176 = scmp.ne.s32.totalorder %s161, %s175
    %p177 = scmp.eq.s32.totalorder %s20, 0
    %p178 = por %p176, %p177
    %s180 = sadd.s32 %s179, 1
    %p183 = scmp.eq.s32.totalorder %s14, 1
    %p184 = scmp.ne.s32.totalorder %s179, %s181
    %p185 = scmp.eq.s32.totalorder %s14, 0
    %p186 = por %p184, %p185
    %p187 = scmp.ne.s32.totalorder %s179, %s181
    %p188 = scmp.eq.s32.totalorder %s19, 1
    %p189 = por %p187, %p188
    %p190 = scmp.ne.s32.totalorder %s181, %s182
    %p191 = scmp.eq.s32.totalorder %s19, 0
    %p192 = por %p190, %p191
    %p193 = scmp.ne.s32.totalorder %s181, %s182
    %p194 = scmp.eq.s32.totalorder %s20, 1
    %p195 = por %p193, %p194
    %p197 = scmp.ne.s32.totalorder %s182, %s196
    %p198 = scmp.eq.s32.totalorder %s20, 0
    %p199 = por %p197, %p198
    %s200 = ssub.s32 %s14, %s21
    %p201 = scmp.eq.s32.totalorder %s200, 0
    %s203 = sadd.s32 %s202, 1
    %s204 = scalar_select %p201, %s202, %s203
    %p207 = pneg %p201
    %p208 = scmp.eq.s32.totalorder %s14, 1
    %p209 = por %p207, %p208
    %p210 = scmp.ne.s32.totalorder %s202, %s205
    %p211 = scmp.eq.s32.totalorder %s14, 0
    %p212 = por %p210, %p211
    %p213 = scmp.ne.s32.totalorder %s202, %s205
    %p214 = scmp.eq.s32.totalorder %s19, 1
    %p215 = por %p213, %p214
    %p216 = scmp.ne.s32.totalorder %s205, %s206
    %p217 = scmp.eq.s32.totalorder %s19, 0
    %p218 = por %p216, %p217
    %p219 = scmp.ne.s32.totalorder %s205, %s206
    %p220 = scmp.eq.s32.totalorder %s20, 1
    %p221 = por %p219, %p220
    %p223 = scmp.ne.s32.totalorder %s206, %s222
    %p224 = scmp.eq.s32.totalorder %s20, 0
    %p225 = por %p223, %p224
    %p226 = scmp.le.s32.totalorder 1, %s14
    %p227 = scmp.lt.s32.totalorder %s14, 3
    %p228 = pnand %p226, %p227
    %p229 = pneg %p228
    // Predicated region
    $region9: #{_lambda_.3} parent=5 // pred_check
      _
    $region10: #{_lambda_.3} parent=5 // pred_check_branch
      %231 = sbr.rel (%p228) target = $region12
    $region11: #{_lambda_.3} parent=5 // pred_region
      %s232 = ssub.s32 %s14, 1
      // Predicated region
      $region13: #{_lambda_.3} parent=11 // pred_check
        %p233 = pneg %p87
      $region14: #{_lambda_.3} parent=11 // pred_check_branch
        %235 = sbr.rel (%p233) target = $region16
      $region15: #{_lambda_.3} parent=11 // pred_region
        _
      $region16: #{_lambda_.3} parent=11 // pred_fallthru
        _
      // Predicated region
      $region17: #{_lambda_.3} parent=11 // pred_check
        %p236 = pneg %p108
      $region18: #{_lambda_.3} parent=11 // pred_check_branch
        %238 = sbr.rel (%p236) target = $region20
      $region19: #{_lambda_.3} parent=11 // pred_region
        _
      $region20: #{_lambda_.3} parent=11 // pred_fallthru
        _
      // Predicated region
      $region21: #{_lambda_.3} parent=11 // pred_check
        %p239 = pneg %p129
      $region22: #{_lambda_.3} parent=11 // pred_check_branch
        %241 = sbr.rel (%p239) target = $region24
      $region23: #{_lambda_.3} parent=11 // pred_region
        _
      $region24: #{_lambda_.3} parent=11 // pred_fallthru
        _
      // Predicated region
      $region25: #{_lambda_.3} parent=11 // pred_check
        %p242 = pneg %p150
      $region26: #{_lambda_.3} parent=11 // pred_check_branch
        %244 = sbr.rel (%p242) target = $region28
      $region27: #{_lambda_.3} parent=11 // pred_region
        _
      $region28: #{_lambda_.3} parent=11 // pred_fallthru
        _
      // Predicated region
      $region29: #{_lambda_.3} parent=11 // pred_check
        %p245 = pneg %p171
      $region30: #{_lambda_.3} parent=11 // pred_check_branch
        %247 = sbr.rel (%p245) target = $region32
      $region31: #{_lambda_.3} parent=11 // pred_region
        _
      $region32: #{_lambda_.3} parent=11 // pred_fallthru
        _
      // Predicated region
      $region33: #{_lambda_.3} parent=11 // pred_check
        %p248 = pneg %p192
      $region34: #{_lambda_.3} parent=11 // pred_check_branch
        %250 = sbr.rel (%p248) target = $region36
      $region35: #{_lambda_.3} parent=11 // pred_region
        _
      $region36: #{_lambda_.3} parent=11 // pred_fallthru
        _
    $region12: #{_lambda_.3} parent=5 // pred_fallthru
      _
    %p251 = scmp.lt.s32.totalorder %s14, 2
    // Predicated region
    $region37: #{_lambda_.3} parent=5 // pred_check
      %p252 = pneg %p251
    $region38: #{_lambda_.3} parent=5 // pred_check_branch
      %254 = sbr.rel (%p252) target = $region40
    $region39: #{_lambda_.3} parent=5 // pred_region
      // Predicated region
      $region41: #{_lambda_.3} parent=39 // pred_check
        %p255 = pneg %p34
      $region42: #{_lambda_.3} parent=39 // pred_check_branch
        %257 = sbr.rel (%p255) target = $region44
      $region43: #{_lambda_.3} parent=39 // pred_region
        %p258 = scmp.lt.s32.totalorder %s14, 1
        %s259 = scalar_select %p258, %s14, 1
        %s260 = smul.addr %s259, 54
        %s261 = smul.addr %s260, 4
        %s262 = scalar_lea.vmem %s0, %s261
      $region44: #{_lambda_.3} parent=39 // pred_fallthru
        _
      // Predicated region
      $region45: #{_lambda_.3} parent=39 // pred_check
        %p263 = pneg %p60
      $region46: #{_lambda_.3} parent=39 // pred_check_branch
        %265 = sbr.rel (%p263) target = $region48
      $region47: #{_lambda_.3} parent=39 // pred_region
        %p266 = scmp.lt.s32.totalorder %s14, 1
        %s267 = scalar_select %p266, %s14, 1
        %s268 = smul.addr %s267, 32
        %s269 = smul.addr %s268, 4
        %s270 = scalar_lea.vmem %s1, %s269
      $region48: #{_lambda_.3} parent=39 // pred_fallthru
        _
    $region40: #{_lambda_.3} parent=5 // pred_fallthru
      _
    %p271 = scmp.le.s32.totalorder 1, %s14
    %p272 = scmp.lt.s32.totalorder %s14, 3
    %p273 = pnand %p271, %p272
    %p274 = pneg %p273
    // Predicated region
    $region49: #{_lambda_.3} parent=5 // pred_check
      _
    $region50: #{_lambda_.3} parent=5 // pred_check_branch
      %276 = sbr.rel (%p273) target = $region52
    $region51: #{_lambda_.3} parent=5 // pred_region
      %s277 = ssub.s32 %s14, 1
      %p278 = scmp.lt.s32.totalorder %s19, 1
      %s279 = scalar_select %p278, %s19, 1
      %s280 = smul.addr %s279, 54
      %s281 = smul.addr %s280, 4
      %s282 = scalar_lea.vmem %s0, %s281
      %p283 = pneg %p40
      %p284 = pneg %p37
      %p285 = scmp.lt.s32.totalorder %s19, 1
      %s286 = scalar_select %p285, %s19, 1
      %s287 = smul.addr %s286, 32
      %s288 = smul.addr %s287, 4
      %s289 = scalar_lea.vmem %s1, %s288
      %p290 = pneg %p66
      %p291 = pneg %p63
      %p292 = pneg %p87
      %p293 = pneg %p84
      %p294 = pneg %p108
      %p295 = pneg %p105
      %p296 = pneg %p129
      %p297 = pneg %p126
      %p298 = pneg %p150
      %p299 = pneg %p147
      %p300 = pneg %p171
      %p301 = pneg %p168
      %p302 = pneg %p192
      %p303 = pneg %p189
      %p304 = pneg %p218
      %p305 = pneg %p215
      %p306 = scmp.lt.s32.totalorder %s19, 1
      %s307 = scalar_select %p306, %s19, 1
      %s308 = smul.addr %s307, 32
      %s309 = smul.addr %s308, 8
      %s310 = scalar_lea.vmem %s8, %s309
      %p311 = scmp.lt.s32.totalorder %s19, 1
      %s312 = scalar_select %p311, %s19, 1
      %s313 = smul.addr %s312, 54
      %s314 = smul.addr %s313, 4
      %s315 = scalar_lea.vmem %s0, %s314
      %p316 = scmp.lt.s32.totalorder %s19, 1
      %s317 = scalar_select %p316, %s19, 1
      %s318 = smul.addr %s317, 32
      %s319 = smul.addr %s318, 4
      %s320 = scalar_lea.vmem %s1, %s319
      %p321 = scmp.lt.s32.totalorder %s19, 1
      %s322 = scalar_select %p321, %s19, 1
      %s323 = smul.addr %s322, 32
      %s324 = smul.addr %s323, 8
      %s325 = scalar_lea.vmem %s8, %s324
      %v327 = vld [vmem:[%s315] sm:$0xf]
      %v328 = vld [vmem:[%s315 + $0x4] sm:$0xf]
      %v329 = vld [vmem:[%s315 + $0xc] sm:$0xf]
      %v330 = vld [vmem:[%s315 + $0x10] sm:$0xf]
      %v331 = vld [vmem:[%s315 + $0x18] sm:$0xf]
      %v332 = vld [vmem:[%s315 + $0x1c] sm:$0xf]
      %v333 = vld [vmem:[%s315 + $0x24] sm:$0xf]
      %v334 = vld [vmem:[%s315 + $0x28] sm:$0xf]
      %v335 = vld [vmem:[%s315 + $0x30] sm:$0xf]
      %v336 = vld [vmem:[%s315 + $0x34] sm:$0xf]
      %v337 = vld [vmem:[%s315 + $0x3c] sm:$0xf]
      %v338 = vld [vmem:[%s315 + $0x40] sm:$0xf]
      %v339 = vld [vmem:[%s315 + $0x48] sm:$0xf]
      %v340 = vld [vmem:[%s315 + $0x4c] sm:$0xf]
      %v341 = vld [vmem:[%s315 + $0x54] sm:$0xf]
      %v342 = vld [vmem:[%s315 + $0x58] sm:$0xf]
      %v343 = vld [vmem:[%s315 + $0x60] sm:$0xf]
      %v344 = vld [vmem:[%s315 + $0x64] sm:$0xf]
      %v345 = vld [vmem:[%s315 + $0x6c] sm:$0xf]
      %v346 = vld [vmem:[%s315 + $0x70] sm:$0xf]
      %v347 = vld [vmem:[%s315 + $0x78] sm:$0xf]
      %v348 = vld [vmem:[%s315 + $0x7c] sm:$0xf]
      %v349 = vld [vmem:[%s315 + $0x84] sm:$0xf]
      %v350 = vld [vmem:[%s315 + $0x88] sm:$0xf]
      %v351 = vld [vmem:[%s315 + $0x90] sm:$0xf]
      %v352 = vld [vmem:[%s315 + $0x94] sm:$0xf]
      %v353 = vld [vmem:[%s315 + $0x9c] sm:$0xf]
      %v354 = vld [vmem:[%s315 + $0xa0] sm:$0xf]
      %v355 = vld [vmem:[%s315 + $0xa8] sm:$0xf]
      %v356 = vld [vmem:[%s315 + $0xac] sm:$0xf]
      %v357 = vld [vmem:[%s315 + $0xb4] sm:$0xf]
      %v358 = vld [vmem:[%s315 + $0xb8] sm:$0xf]
      %v359 = vld [vmem:[%s2] sm:$0xf]
      %v360 = vld [vmem:[%s2 + $0x4] sm:$0xf]
      %v361 = vld [vmem:[%s2 + $0x8] sm:$0xf]
      %v362 = vld [vmem:[%s2 + $0xc] sm:$0xf]
      %v363 = vld [vmem:[%s315 + $0x8] sm:$0x1]
      %v364 = vld [vmem:[%s315 + $0x14] sm:$0x1]
      %v365 = vld [vmem:[%s315 + $0x20] sm:$0x1]
      %v366 = vld [vmem:[%s315 + $0x2c] sm:$0x1]
      %v367 = vld [vmem:[%s315 + $0x38] sm:$0x1]
      %v368 = vld [vmem:[%s315 + $0x44] sm:$0x1]
      %v369 = vld [vmem:[%s315 + $0x50] sm:$0x1]
      %v370 = vld [vmem:[%s315 + $0x5c] sm:$0x1]
      %v371 = vld [vmem:[%s315 + $0x68] sm:$0x1]
      %v372 = vld [vmem:[%s315 + $0x74] sm:$0x1]
      %v373 = vld [vmem:[%s315 + $0x80] sm:$0x1]
      %v374 = vld [vmem:[%s315 + $0x8c] sm:$0x1]
      %v375 = vld [vmem:[%s315 + $0x98] sm:$0x1]
      %v376 = vld [vmem:[%s315 + $0xa4] sm:$0x1]
      %v377 = vld [vmem:[%s315 + $0xb0] sm:$0x1]
      %v378 = vld [vmem:[%s315 + $0xbc] sm:$0x1]
      %vm379 = vsmask.f32 3328
      %vm380 = vsmask.f32 7440
      %vm381 = vmor %vm379, %vm380
      %v383 = vshrl.u32 %v327, 16
      %v385 = vrot.slane %v383, 4
      %v386 = vshll.u32 %v327, 16
      %v388 = vrot.slane %v386, 5
      %v389 = vor.u32 %v385, %v388
      %v390 = vrot.slane %v389, 4
      %v392 = vshll.u32 %v328, 16
      %v394 = vrot.slane %v392, 5
      %v395 = vsel %vm381, %v390, %v394
      %v396 = vshrl.u32 %v328, 16
      %v398 = vrot.slane %v396, 4
      %v399 = vor.u32 %v398, %v394
      %v400 = vrot.slane %v399, 4
      %v402 = vshll.u32 %v363, 16
      %v404 = vrot.slane %v402, 5
      %v405 = vsel %vm381, %v400, %v404
      %v407 = vshrl.u32 %v329, 16
      %v409 = vrot.slane %v407, 4
      %v410 = vshll.u32 %v329, 16
      %v412 = vrot.slane %v410, 5
      %v413 = vor.u32 %v409, %v412
      %v414 = vrot.slane %v413, 4
      %v416 = vshll.u32 %v330, 16
      %v418 = vrot.slane %v416, 5
      %v419 = vsel %vm381, %v414, %v418
      %v420 = vshrl.u32 %v330, 16
      %v422 = vrot.slane %v420, 4
      %v423 = vor.u32 %v422, %v418
      %v424 = vrot.slane %v423, 4
      %v426 = vshll.u32 %v364, 16
      %v428 = vrot.slane %v426, 5
      %v429 = vsel %vm381, %v424, %v428
      %v431 = vshrl.u32 %v331, 16
      %v433 = vrot.slane %v431, 4
      %v434 = vshll.u32 %v331, 16
      %v436 = vrot.slane %v434, 5
      %v437 = vor.u32 %v433, %v436
      %v438 = vrot.slane %v437, 4
      %v440 = vshll.u32 %v332, 16
      %v442 = vrot.slane %v440, 5
      %v443 = vsel %vm381, %v438, %v442
      %v444 = vshrl.u32 %v332, 16
      %v446 = vrot.slane %v444, 4
      %v447 = vor.u32 %v446, %v442
      %v448 = vrot.slane %v447, 4
      %v450 = vshll.u32 %v365, 16
      %v452 = vrot.slane %v450, 5
      %v453 = vsel %vm381, %v448, %v452
      %v455 = vshrl.u32 %v333, 16
      %v457 = vrot.slane %v455, 4
      %v458 = vshll.u32 %v333, 16
      %v460 = vrot.slane %v458, 5
      %v461 = vor.u32 %v457, %v460
      %v462 = vrot.slane %v461, 4
      %v464 = vshll.u32 %v334, 16
      %v466 = vrot.slane %v464, 5
      %v467 = vsel %vm381, %v462, %v466
      %v468 = vshrl.u32 %v334, 16
      %v470 = vrot.slane %v468, 4
      %v471 = vor.u32 %v470, %v466
      %v472 = vrot.slane %v471, 4
      %v474 = vshll.u32 %v366, 16
      %v476 = vrot.slane %v474, 5
      %v477 = vsel %vm381, %v472, %v476
      %v479 = vshrl.u32 %v335, 16
      %v481 = vrot.slane %v479, 4
      %v482 = vshll.u32 %v335, 16
      %v484 = vrot.slane %v482, 5
      %v485 = vor.u32 %v481, %v484
      %v486 = vrot.slane %v485, 4
      %v488 = vshll.u32 %v336, 16
      %v490 = vrot.slane %v488, 5
      %v491 = vsel %vm381, %v486, %v490
      %v492 = vshrl.u32 %v336, 16
      %v494 = vrot.slane %v492, 4
      %v495 = vor.u32 %v494, %v490
      %v496 = vrot.slane %v495, 4
      %v498 = vshll.u32 %v367, 16
      %v500 = vrot.slane %v498, 5
      %v501 = vsel %vm381, %v496, %v500
      %v503 = vshrl.u32 %v337, 16
      %v505 = vrot.slane %v503, 4
      %v506 = vshll.u32 %v337, 16
      %v508 = vrot.slane %v506, 5
      %v509 = vor.u32 %v505, %v508
      %v510 = vrot.slane %v509, 4
      %v512 = vshll.u32 %v338, 16
      %v514 = vrot.slane %v512, 5
      %v515 = vsel %vm381, %v510, %v514
      %v516 = vshrl.u32 %v338, 16
      %v518 = vrot.slane %v516, 4
      %v519 = vor.u32 %v518, %v514
      %v520 = vrot.slane %v519, 4
      %v522 = vshll.u32 %v368, 16
      %v524 = vrot.slane %v522, 5
      %v525 = vsel %vm381, %v520, %v524
      %v527 = vshrl.u32 %v339, 16
      %v529 = vrot.slane %v527, 4
      %v530 = vshll.u32 %v339, 16
      %v532 = vrot.slane %v530, 5
      %v533 = vor.u32 %v529, %v532
      %v534 = vrot.slane %v533, 4
      %v536 = vshll.u32 %v340, 16
      %v538 = vrot.slane %v536, 5
      %v539 = vsel %vm381, %v534, %v538
      %v540 = vshrl.u32 %v340, 16
      %v542 = vrot.slane %v540, 4
      %v543 = vor.u32 %v542, %v538
      %v544 = vrot.slane %v543, 4
      %v546 = vshll.u32 %v369, 16
      %v548 = vrot.slane %v546, 5
      %v549 = vsel %vm381, %v544, %v548
      %v551 = vshrl.u32 %v341, 16
      %v553 = vrot.slane %v551, 4
      %v554 = vshll.u32 %v341, 16
      %v556 = vrot.slane %v554, 5
      %v557 = vor.u32 %v553, %v556
      %v558 = vrot.slane %v557, 4
      %v560 = vshll.u32 %v342, 16
      %v562 = vrot.slane %v560, 5
      %v563 = vsel %vm381, %v558, %v562
      %v564 = vshrl.u32 %v342, 16
      %v566 = vrot.slane %v564, 4
      %v567 = vor.u32 %v566, %v562
      %v568 = vrot.slane %v567, 4
      %v570 = vshll.u32 %v370, 16
      %v572 = vrot.slane %v570, 5
      %v573 = vsel %vm381, %v568, %v572
      %v575 = vshrl.u32 %v343, 16
      %v577 = vrot.slane %v575, 4
      %v578 = vshll.u32 %v343, 16
      %v580 = vrot.slane %v578, 5
      %v581 = vor.u32 %v577, %v580
      %v582 = vrot.slane %v581, 4
      %v584 = vshll.u32 %v344, 16
      %v586 = vrot.slane %v584, 5
      %v587 = vsel %vm381, %v582, %v586
      %v588 = vshrl.u32 %v344, 16
      %v590 = vrot.slane %v588, 4
      %v591 = vor.u32 %v590, %v586
      %v592 = vrot.slane %v591, 4
      %v594 = vshll.u32 %v371, 16
      %v596 = vrot.slane %v594, 5
      %v597 = vsel %vm381, %v592, %v596
      %v599 = vshrl.u32 %v345, 16
      %v601 = vrot.slane %v599, 4
      %v602 = vshll.u32 %v345, 16
      %v604 = vrot.slane %v602, 5
      %v605 = vor.u32 %v601, %v604
      %v606 = vrot.slane %v605, 4
      %v608 = vshll.u32 %v346, 16
      %v610 = vrot.slane %v608, 5
      %v611 = vsel %vm381, %v606, %v610
      %v612 = vshrl.u32 %v346, 16
      %v614 = vrot.slane %v612, 4
      %v615 = vor.u32 %v614, %v610
      %v616 = vrot.slane %v615, 4
      %v618 = vshll.u32 %v372, 16
      %v620 = vrot.slane %v618, 5
      %v621 = vsel %vm381, %v616, %v620
      %v623 = vshrl.u32 %v347, 16
      %v625 = vrot.slane %v623, 4
      %v626 = vshll.u32 %v347, 16
      %v628 = vrot.slane %v626, 5
      %v629 = vor.u32 %v625, %v628
      %v630 = vrot.slane %v629, 4
      %v632 = vshll.u32 %v348, 16
      %v634 = vrot.slane %v632, 5
      %v635 = vsel %vm381, %v630, %v634
      %v636 = vshrl.u32 %v348, 16
      %v638 = vrot.slane %v636, 4
      %v639 = vor.u32 %v638, %v634
      %v640 = vrot.slane %v639, 4
      %v642 = vshll.u32 %v373, 16
      %v644 = vrot.slane %v642, 5
      %v645 = vsel %vm381, %v640, %v644
      %v647 = vshrl.u32 %v349, 16
      %v649 = vrot.slane %v647, 4
      %v650 = vshll.u32 %v349, 16
      %v652 = vrot.slane %v650, 5
      %v653 = vor.u32 %v649, %v652
      %v654 = vrot.slane %v653, 4
      %v656 = vshll.u32 %v350, 16
      %v658 = vrot.slane %v656, 5
      %v659 = vsel %vm381, %v654, %v658
      %v660 = vshrl.u32 %v350, 16
      %v662 = vrot.slane %v660, 4
      %v663 = vor.u32 %v662, %v658
      %v664 = vrot.slane %v663, 4
      %v666 = vshll.u32 %v374, 16
      %v668 = vrot.slane %v666, 5
      %v669 = vsel %vm381, %v664, %v668
      %v671 = vshrl.u32 %v351, 16
      %v673 = vrot.slane %v671, 4
      %v674 = vshll.u32 %v351, 16
      %v676 = vrot.slane %v674, 5
      %v677 = vor.u32 %v673, %v676
      %v678 = vrot.slane %v677, 4
      %v680 = vshll.u32 %v352, 16
      %v682 = vrot.slane %v680, 5
      %v683 = vsel %vm381, %v678, %v682
      %v684 = vshrl.u32 %v352, 16
      %v686 = vrot.slane %v684, 4
      %v687 = vor.u32 %v686, %v682
      %v688 = vrot.slane %v687, 4
      %v690 = vshll.u32 %v375, 16
      %v692 = vrot.slane %v690, 5
      %v693 = vsel %vm381, %v688, %v692
      %v695 = vshrl.u32 %v353, 16
      %v697 = vrot.slane %v695, 4
      %v698 = vshll.u32 %v353, 16
      %v700 = vrot.slane %v698, 5
      %v701 = vor.u32 %v697, %v700
      %v702 = vrot.slane %v701, 4
      %v704 = vshll.u32 %v354, 16
      %v706 = vrot.slane %v704, 5
      %v707 = vsel %vm381, %v702, %v706
      %v708 = vshrl.u32 %v354, 16
      %v710 = vrot.slane %v708, 4
      %v711 = vor.u32 %v710, %v706
      %v712 = vrot.slane %v711, 4
      %v714 = vshll.u32 %v376, 16
      %v716 = vrot.slane %v714, 5
      %v717 = vsel %vm381, %v712, %v716
      %v719 = vshrl.u32 %v355, 16
      %v721 = vrot.slane %v719, 4
      %v722 = vshll.u32 %v355, 16
      %v724 = vrot.slane %v722, 5
      %v725 = vor.u32 %v721, %v724
      %v726 = vrot.slane %v725, 4
      %v728 = vshll.u32 %v356, 16
      %v730 = vrot.slane %v728, 5
      %v731 = vsel %vm381, %v726, %v730
      %v732 = vshrl.u32 %v356, 16
      %v734 = vrot.slane %v732, 4
      %v735 = vor.u32 %v734, %v730
      %v736 = vrot.slane %v735, 4
      %v738 = vshll.u32 %v377, 16
      %v740 = vrot.slane %v738, 5
      %v741 = vsel %vm381, %v736, %v740
      %v743 = vshrl.u32 %v357, 16
      %v745 = vrot.slane %v743, 4
      %v746 = vshll.u32 %v357, 16
      %v748 = vrot.slane %v746, 5
      %v749 = vor.u32 %v745, %v748
      %v750 = vrot.slane %v749, 4
      %v752 = vshll.u32 %v358, 16
      %v754 = vrot.slane %v752, 5
      %v755 = vsel %vm381, %v750, %v754
      %v756 = vshrl.u32 %v358, 16
      %v758 = vrot.slane %v756, 4
      %v759 = vor.u32 %v758, %v754
      %v760 = vrot.slane %v759, 4
      %v762 = vshll.u32 %v378, 16
      %v764 = vrot.slane %v762, 5
      %v765 = vsel %vm381, %v760, %v764
      %s766 = scalar_lea.vmem %s2, 16
      %v767 = vld [vmem:[%s766] sm:$0xf]
      %v768 = vld [vmem:[%s766 + $0x4] sm:$0xf]
      %v769 = vld [vmem:[%s766 + $0x8] sm:$0xf]
      %v770 = vld [vmem:[%s766 + $0xc] sm:$0xf]
      %v771 = vunpack.c.l.b16 %v395
      %v772 = vunpack.c.l.b16 %v405
      %v773 = vunpack.c.l.b16 %v419
      %v774 = vunpack.c.l.b16 %v429
      %v775 = vunpack.c.l.b16 %v443
      %v776 = vunpack.c.l.b16 %v453
      %v777 = vunpack.c.l.b16 %v467
      %v778 = vunpack.c.l.b16 %v477
      %v779 = vunpack.c.l.b16 %v491
      %v780 = vunpack.c.l.b16 %v501
      %v781 = vunpack.c.l.b16 %v515
      %v782 = vunpack.c.l.b16 %v525
      %v783 = vunpack.c.l.b16 %v539
      %v784 = vunpack.c.l.b16 %v549
      %v785 = vunpack.c.l.b16 %v563
      %v786 = vunpack.c.l.b16 %v573
      %v787 = vunpack.c.l.b16 %v587
      %v788 = vunpack.c.l.b16 %v597
      %v789 = vunpack.c.l.b16 %v611
      %v790 = vunpack.c.l.b16 %v621
      %v791 = vunpack.c.l.b16 %v635
      %v792 = vunpack.c.l.b16 %v645
      %v793 = vunpack.c.l.b16 %v659
      %v794 = vunpack.c.l.b16 %v669
      %v795 = vunpack.c.l.b16 %v683
      %v796 = vunpack.c.l.b16 %v693
      %v797 = vunpack.c.l.b16 %v707
      %v798 = vunpack.c.l.b16 %v717
      %v799 = vunpack.c.l.b16 %v731
      %v800 = vunpack.c.l.b16 %v741
      %v801 = vunpack.c.l.b16 %v755
      %v802 = vunpack.c.l.b16 %v765
      %v803 = vpack.c.b16 %v772, %v771
      %v804 = vpack.c.b16 %v774, %v773
      %v805 = vpack.c.b16 %v776, %v775
      %v806 = vpack.c.b16 %v778, %v777
      %v807 = vpack.c.b16 %v780, %v779
      %v808 = vpack.c.b16 %v782, %v781
      %v809 = vpack.c.b16 %v784, %v783
      %v810 = vpack.c.b16 %v786, %v785
      %v811 = vpack.c.b16 %v788, %v787
      %v812 = vpack.c.b16 %v790, %v789
      %v813 = vpack.c.b16 %v792, %v791
      %v814 = vpack.c.b16 %v794, %v793
      %v815 = vpack.c.b16 %v796, %v795
      %v816 = vpack.c.b16 %v798, %v797
      %v817 = vpack.c.b16 %v800, %v799
      %v818 = vpack.c.b16 %v802, %v801
      %v823 = vunpack.c.l.b16 %v767
      %v824 = vunpack.c.l.b16 %v768
      %v825 = vunpack.c.l.b16 %v769
      %v826 = vunpack.c.l.b16 %v770
      %v827 = vpack.c.b16 %v824, %v823
      %v828 = vpack.c.b16 %v826, %v825
      %vm831 = vcmask 261120
      %v833 = vsel %vm831, %v803, 0
      %v836 = vsel %vm831, %v804, 0
      %v839 = vsel %vm831, %v805, 0
      %v842 = vsel %vm831, %v806, 0
      %v845 = vsel %vm831, %v807, 0
      %v848 = vsel %vm831, %v808, 0
      %v851 = vsel %vm831, %v809, 0
      %v854 = vsel %vm831, %v810, 0
      %v857 = vsel %vm831, %v811, 0
      %v860 = vsel %vm831, %v812, 0
      %v863 = vsel %vm831, %v813, 0
      %v866 = vsel %vm831, %v814, 0
      %v869 = vsel %vm831, %v815, 0
      %v872 = vsel %vm831, %v816, 0
      %v875 = vsel %vm831, %v817, 0
      %v878 = vsel %vm831, %v818, 0
      %880 = vmatprep.subr.bf16.mxu0 0
      %881 = vmatpush1.bf16.msra.mxu0 0
      %882 = vmatprep.subr.bf16.mxu0 0
      %883 = vmatpush1.bf16.msra.mxu0 0
      %884 = vmatprep.subr.bf16.mxu0 0
      %885 = vmatpush1.bf16.msra.mxu0 0
      %886 = vmatprep.subr.bf16.mxu0 0
      %887 = vmatpush1.bf16.msra.mxu0 0
      %888 = vmatprep.subr.bf16.mxu0 0
      %889 = vmatpush1.bf16.msra.mxu0 0
      %890 = vmatprep.subr.bf16.mxu0 0
      %891 = vmatpush1.bf16.msra.mxu0 0
      %892 = vmatprep.subr.bf16.mxu0 0
      %893 = vmatpush1.bf16.msra.mxu0 %v828
      %894 = vmatprep.subr.bf16.mxu0 0
      %895 = vmatpush1.bf16.msra.mxu0 %v827
      %896 = vmatprep.subr.bf16.mxu0 0
      %897 = vmatpush2.bf16.msra.mxu0 0
      %898 = vmatprep.subr.bf16.mxu0 0
      %899 = vmatpush2.bf16.msra.mxu0 0
      %900 = vmatprep.subr.bf16.mxu0 0
      %901 = vmatpush2.bf16.msra.mxu0 0
      %902 = vmatprep.subr.bf16.mxu0 0
      %903 = vmatpush2.bf16.msra.mxu0 0
      %904 = vmatprep.subr.bf16.mxu0 0
      %905 = vmatpush2.bf16.msra.mxu0 0
      %906 = vmatprep.subr.bf16.mxu0 0
      %907 = vmatpush2.bf16.msra.mxu0 0
      %908 = vmatprep.subr.bf16.mxu0 0
      %909 = vmatpush2.bf16.msra.mxu0 0
      %910 = vmatprep.subr.bf16.mxu0 0
      %911 = vmatpush2.bf16.msra.mxu0 0
      %912 = vmatprep.mubr.bf16.mxu0 0
      %913 = vmatmul.mubr.bf16.gmra.mxu0 %v833
      %v914 = vpop.f32.mrf.mxu0
      %v915 = vadd.f32 0.0, %v914
      %v916 = vpop.f32.mrf.mxu0
      %v917 = vpop.f32.mrf.mxu0
      %v918 = vadd.f32 0.0, %v917
      %v919 = vpop.f32.mrf.mxu0
      %920 = vmatprep.mubr.bf16.mxu0 0
      %921 = vmatmul.mubr.bf16.gmra.mxu0 %v836
      %v922 = vpop.f32.mrf.mxu0
      %v923 = vadd.f32 0.0, %v922
      %v924 = vpop.f32.mrf.mxu0
      %v925 = vpop.f32.mrf.mxu0
      %v926 = vadd.f32 0.0, %v925
      %v927 = vpop.f32.mrf.mxu0
      %928 = vmatprep.mubr.bf16.mxu0 0
      %929 = vmatmul.mubr.bf16.gmra.mxu0 %v839
      %v930 = vpop.f32.mrf.mxu0
      %v931 = vadd.f32 0.0, %v930
      %v932 = vpop.f32.mrf.mxu0
      %v933 = vpop.f32.mrf.mxu0
      %v934 = vadd.f32 0.0, %v933
      %v935 = vpop.f32.mrf.mxu0
      %936 = vmatprep.mubr.bf16.mxu0 0
      %937 = vmatmul.mubr.bf16.gmra.mxu0 %v842
      %v938 = vpop.f32.mrf.mxu0
      %v939 = vadd.f32 0.0, %v938
      %v940 = vpop.f32.mrf.mxu0
      %v941 = vpop.f32.mrf.mxu0
      %v942 = vadd.f32 0.0, %v941
      %v943 = vpop.f32.mrf.mxu0
      %944 = vmatprep.mubr.bf16.mxu0 0
      %945 = vmatmul.mubr.bf16.gmra.mxu0 %v845
      %v946 = vpop.f32.mrf.mxu0
      %v947 = vadd.f32 0.0, %v946
      %v948 = vpop.f32.mrf.mxu0
      %v949 = vpop.f32.mrf.mxu0
      %v950 = vadd.f32 0.0, %v949
      %v951 = vpop.f32.mrf.mxu0
      %952 = vmatprep.mubr.bf16.mxu0 0
      %953 = vmatmul.mubr.bf16.gmra.mxu0 %v848
      %v954 = vpop.f32.mrf.mxu0
      %v955 = vadd.f32 0.0, %v954
      %v956 = vpop.f32.mrf.mxu0
      %v957 = vpop.f32.mrf.mxu0
      %v958 = vadd.f32 0.0, %v957
      %v959 = vpop.f32.mrf.mxu0
      %960 = vmatprep.mubr.bf16.mxu0 0
      %961 = vmatmul.mubr.bf16.gmra.mxu0 %v851
      %v962 = vpop.f32.mrf.mxu0
      %v963 = vadd.f32 0.0, %v962
      %v964 = vpop.f32.mrf.mxu0
      %v965 = vpop.f32.mrf.mxu0
      %v966 = vadd.f32 0.0, %v965
      %v967 = vpop.f32.mrf.mxu0
      %968 = vmatprep.mubr.bf16.mxu0 0
      %969 = vmatmul.mubr.bf16.gmra.mxu0 %v854
      %v970 = vpop.f32.mrf.mxu0
      %v971 = vadd.f32 0.0, %v970
      %v972 = vpop.f32.mrf.mxu0
      %v973 = vpop.f32.mrf.mxu0
      %v974 = vadd.f32 0.0, %v973
      %v975 = vpop.f32.mrf.mxu0
      %976 = vmatprep.mubr.bf16.mxu0 0
      %977 = vmatmul.mubr.bf16.gmra.mxu0 %v857
      %v978 = vpop.f32.mrf.mxu0
      %v979 = vadd.f32 0.0, %v978
      %v980 = vpop.f32.mrf.mxu0
      %v981 = vpop.f32.mrf.mxu0
      %v982 = vadd.f32 0.0, %v981
      %v983 = vpop.f32.mrf.mxu0
      %984 = vmatprep.mubr.bf16.mxu0 0
      %985 = vmatmul.mubr.bf16.gmra.mxu0 %v860
      %v986 = vpop.f32.mrf.mxu0
      %v987 = vadd.f32 0.0, %v986
      %v988 = vpop.f32.mrf.mxu0
      %v989 = vpop.f32.mrf.mxu0
      %v990 = vadd.f32 0.0, %v989
      %v991 = vpop.f32.mrf.mxu0
      %992 = vmatprep.mubr.bf16.mxu0 0
      %993 = vmatmul.mubr.bf16.gmra.mxu0 %v863
      %v994 = vpop.f32.mrf.mxu0
      %v995 = vadd.f32 0.0, %v994
      %v996 = vpop.f32.mrf.mxu0
      %v997 = vpop.f32.mrf.mxu0
      %v998 = vadd.f32 0.0, %v997
      %v999 = vpop.f32.mrf.mxu0
      %1000 = vmatprep.mubr.bf16.mxu0 0
      %1001 = vmatmul.mubr.bf16.gmra.mxu0 %v866
      %v1002 = vpop.f32.mrf.mxu0
      %v1003 = vadd.f32 0.0, %v1002
      %v1004 = vpop.f32.mrf.mxu0
      %v1005 = vpop.f32.mrf.mxu0
      %v1006 = vadd.f32 0.0, %v1005
      %v1007 = vpop.f32.mrf.mxu0
      %1008 = vmatprep.mubr.bf16.mxu0 0
      %1009 = vmatmul.mubr.bf16.gmra.mxu0 %v869
      %v1010 = vpop.f32.mrf.mxu0
      %v1011 = vadd.f32 0.0, %v1010
      %v1012 = vpop.f32.mrf.mxu0
      %v1013 = vpop.f32.mrf.mxu0
      %v1014 = vadd.f32 0.0, %v1013
      %v1015 = vpop.f32.mrf.mxu0
      %1016 = vmatprep.mubr.bf16.mxu0 0
      %1017 = vmatmul.mubr.bf16.gmra.mxu0 %v872
      %v1018 = vpop.f32.mrf.mxu0
      %v1019 = vadd.f32 0.0, %v1018
      %v1020 = vpop.f32.mrf.mxu0
      %v1021 = vpop.f32.mrf.mxu0
      %v1022 = vadd.f32 0.0, %v1021
      %v1023 = vpop.f32.mrf.mxu0
      %1024 = vmatprep.mubr.bf16.mxu0 0
      %1025 = vmatmul.mubr.bf16.gmra.mxu0 %v875
      %v1026 = vpop.f32.mrf.mxu0
      %v1027 = vadd.f32 0.0, %v1026
      %v1028 = vpop.f32.mrf.mxu0
      %v1029 = vpop.f32.mrf.mxu0
      %v1030 = vadd.f32 0.0, %v1029
      %v1031 = vpop.f32.mrf.mxu0
      %1032 = vmatprep.mubr.bf16.mxu0 0
      %1033 = vmatmul.mubr.bf16.gmra.mxu0 %v878
      %v1034 = vpop.f32.mrf.mxu0
      %v1035 = vadd.f32 0.0, %v1034
      %v1036 = vpop.f32.mrf.mxu0
      %v1037 = vpop.f32.mrf.mxu0
      %v1038 = vadd.f32 0.0, %v1037
      %v1039 = vpop.f32.mrf.mxu0
      %1040 = vdwg.mxu0
      %v1073 = vunpack.c.l.b16 %v327
      %v1074 = vunpack.c.l.b16 %v328
      %v1075 = vunpack.c.l.b16 %v329
      %v1076 = vunpack.c.l.b16 %v330
      %v1077 = vunpack.c.l.b16 %v331
      %v1078 = vunpack.c.l.b16 %v332
      %v1079 = vunpack.c.l.b16 %v333
      %v1080 = vunpack.c.l.b16 %v334
      %v1081 = vunpack.c.l.b16 %v335
      %v1082 = vunpack.c.l.b16 %v336
      %v1083 = vunpack.c.l.b16 %v337
      %v1084 = vunpack.c.l.b16 %v338
      %v1085 = vunpack.c.l.b16 %v339
      %v1086 = vunpack.c.l.b16 %v340
      %v1087 = vunpack.c.l.b16 %v341
      %v1088 = vunpack.c.l.b16 %v342
      %v1089 = vunpack.c.l.b16 %v343
      %v1090 = vunpack.c.l.b16 %v344
      %v1091 = vunpack.c.l.b16 %v345
      %v1092 = vunpack.c.l.b16 %v346
      %v1093 = vunpack.c.l.b16 %v347
      %v1094 = vunpack.c.l.b16 %v348
      %v1095 = vunpack.c.l.b16 %v349
      %v1096 = vunpack.c.l.b16 %v350
      %v1097 = vunpack.c.l.b16 %v351
      %v1098 = vunpack.c.l.b16 %v352
      %v1099 = vunpack.c.l.b16 %v353
      %v1100 = vunpack.c.l.b16 %v354
      %v1101 = vunpack.c.l.b16 %v355
      %v1102 = vunpack.c.l.b16 %v356
      %v1103 = vunpack.c.l.b16 %v357
      %v1104 = vunpack.c.l.b16 %v358
      %v1105 = vpack.c.b16 %v1074, %v1073
      %v1106 = vpack.c.b16 %v1076, %v1075
      %v1107 = vpack.c.b16 %v1078, %v1077
      %v1108 = vpack.c.b16 %v1080, %v1079
      %v1109 = vpack.c.b16 %v1082, %v1081
      %v1110 = vpack.c.b16 %v1084, %v1083
      %v1111 = vpack.c.b16 %v1086, %v1085
      %v1112 = vpack.c.b16 %v1088, %v1087
      %v1113 = vpack.c.b16 %v1090, %v1089
      %v1114 = vpack.c.b16 %v1092, %v1091
      %v1115 = vpack.c.b16 %v1094, %v1093
      %v1116 = vpack.c.b16 %v1096, %v1095
      %v1117 = vpack.c.b16 %v1098, %v1097
      %v1118 = vpack.c.b16 %v1100, %v1099
      %v1119 = vpack.c.b16 %v1102, %v1101
      %v1120 = vpack.c.b16 %v1104, %v1103
      %v1125 = vunpack.c.l.b16 %v359
      %v1126 = vunpack.c.l.b16 %v360
      %v1127 = vunpack.c.l.b16 %v361
      %v1128 = vunpack.c.l.b16 %v362
      %v1129 = vpack.c.b16 %v1126, %v1125
      %v1130 = vpack.c.b16 %v1128, %v1127
      %v1134 = vsel %vm831, %v1105, 0
      %v1137 = vsel %vm831, %v1106, 0
      %v1140 = vsel %vm831, %v1107, 0
      %v1143 = vsel %vm831, %v1108, 0
      %v1146 = vsel %vm831, %v1109, 0
      %v1149 = vsel %vm831, %v1110, 0
      %v1152 = vsel %vm831, %v1111, 0
      %v1155 = vsel %vm831, %v1112, 0
      %v1158 = vsel %vm831, %v1113, 0
      %v1161 = vsel %vm831, %v1114, 0
      %v1164 = vsel %vm831, %v1115, 0
      %v1167 = vsel %vm831, %v1116, 0
      %v1170 = vsel %vm831, %v1117, 0
      %v1173 = vsel %vm831, %v1118, 0
      %v1176 = vsel %vm831, %v1119, 0
      %v1179 = vsel %vm831, %v1120, 0
      %1181 = vmatprep.subr.bf16.mxu0 0
      %1182 = vmatpush1.bf16.msra.mxu0 0
      %1183 = vmatprep.subr.bf16.mxu0 0
      %1184 = vmatpush1.bf16.msra.mxu0 0
      %1185 = vmatprep.subr.bf16.mxu0 0
      %1186 = vmatpush1.bf16.msra.mxu0 0
      %1187 = vmatprep.subr.bf16.mxu0 0
      %1188 = vmatpush1.bf16.msra.mxu0 0
      %1189 = vmatprep.subr.bf16.mxu0 0
      %1190 = vmatpush1.bf16.msra.mxu0 0
      %1191 = vmatprep.subr.bf16.mxu0 0
      %1192 = vmatpush1.bf16.msra.mxu0 0
      %1193 = vmatprep.subr.bf16.mxu0 0
      %1194 = vmatpush1.bf16.msra.mxu0 %v1130
      %1195 = vmatprep.subr.bf16.mxu0 0
      %1196 = vmatpush1.bf16.msra.mxu0 %v1129
      %1197 = vmatprep.subr.bf16.mxu0 0
      %1198 = vmatpush2.bf16.msra.mxu0 0
      %1199 = vmatprep.subr.bf16.mxu0 0
      %1200 = vmatpush2.bf16.msra.mxu0 0
      %1201 = vmatprep.subr.bf16.mxu0 0
      %1202 = vmatpush2.bf16.msra.mxu0 0
      %1203 = vmatprep.subr.bf16.mxu0 0
      %1204 = vmatpush2.bf16.msra.mxu0 0
      %1205 = vmatprep.subr.bf16.mxu0 0
      %1206 = vmatpush2.bf16.msra.mxu0 0
      %1207 = vmatprep.subr.bf16.mxu0 0
      %1208 = vmatpush2.bf16.msra.mxu0 0
      %1209 = vmatprep.subr.bf16.mxu0 0
      %1210 = vmatpush2.bf16.msra.mxu0 0
      %1211 = vmatprep.subr.bf16.mxu0 0
      %1212 = vmatpush2.bf16.msra.mxu0 0
      %1213 = vmatprep.mubr.bf16.mxu0 0
      %1214 = vmatmul.mubr.bf16.gmra.mxu0 %v1134
      %v1215 = vpop.f32.mrf.mxu0
      %v1216 = vadd.f32 %v915, %v1215
      %v1217 = vpop.f32.mrf.mxu0
      %v1218 = vpop.f32.mrf.mxu0
      %v1219 = vadd.f32 %v918, %v1218
      %v1220 = vpop.f32.mrf.mxu0
      %1221 = vmatprep.mubr.bf16.mxu0 0
      %1222 = vmatmul.mubr.bf16.gmra.mxu0 %v1137
      %v1223 = vpop.f32.mrf.mxu0
      %v1224 = vadd.f32 %v923, %v1223
      %v1225 = vpop.f32.mrf.mxu0
      %v1226 = vpop.f32.mrf.mxu0
      %v1227 = vadd.f32 %v926, %v1226
      %v1228 = vpop.f32.mrf.mxu0
      %1229 = vmatprep.mubr.bf16.mxu0 0
      %1230 = vmatmul.mubr.bf16.gmra.mxu0 %v1140
      %v1231 = vpop.f32.mrf.mxu0
      %v1232 = vadd.f32 %v931, %v1231
      %v1233 = vpop.f32.mrf.mxu0
      %v1234 = vpop.f32.mrf.mxu0
      %v1235 = vadd.f32 %v934, %v1234
      %v1236 = vpop.f32.mrf.mxu0
      %1237 = vmatprep.mubr.bf16.mxu0 0
      %1238 = vmatmul.mubr.bf16.gmra.mxu0 %v1143
      %v1239 = vpop.f32.mrf.mxu0
      %v1240 = vadd.f32 %v939, %v1239
      %v1241 = vpop.f32.mrf.mxu0
      %v1242 = vpop.f32.mrf.mxu0
      %v1243 = vadd.f32 %v942, %v1242
      %v1244 = vpop.f32.mrf.mxu0
      %1245 = vmatprep.mubr.bf16.mxu0 0
      %1246 = vmatmul.mubr.bf16.gmra.mxu0 %v1146
      %v1247 = vpop.f32.mrf.mxu0
      %v1248 = vadd.f32 %v947, %v1247
      %v1249 = vpop.f32.mrf.mxu0
      %v1250 = vpop.f32.mrf.mxu0
      %v1251 = vadd.f32 %v950, %v1250
      %v1252 = vpop.f32.mrf.mxu0
      %1253 = vmatprep.mubr.bf16.mxu0 0
      %1254 = vmatmul.mubr.bf16.gmra.mxu0 %v1149
      %v1255 = vpop.f32.mrf.mxu0
      %v1256 = vadd.f32 %v955, %v1255
      %v1257 = vpop.f32.mrf.mxu0
      %v1258 = vpop.f32.mrf.mxu0
      %v1259 = vadd.f32 %v958, %v1258
      %v1260 = vpop.f32.mrf.mxu0
      %1261 = vmatprep.mubr.bf16.mxu0 0
      %1262 = vmatmul.mubr.bf16.gmra.mxu0 %v1152
      %v1263 = vpop.f32.mrf.mxu0
      %v1264 = vadd.f32 %v963, %v1263
      %v1265 = vpop.f32.mrf.mxu0
      %v1266 = vpop.f32.mrf.mxu0
      %v1267 = vadd.f32 %v966, %v1266
      %v1268 = vpop.f32.mrf.mxu0
      %1269 = vmatprep.mubr.bf16.mxu0 0
      %1270 = vmatmul.mubr.bf16.gmra.mxu0 %v1155
      %v1271 = vpop.f32.mrf.mxu0
      %v1272 = vadd.f32 %v971, %v1271
      %v1273 = vpop.f32.mrf.mxu0
      %v1274 = vpop.f32.mrf.mxu0
      %v1275 = vadd.f32 %v974, %v1274
      %v1276 = vpop.f32.mrf.mxu0
      %1277 = vmatprep.mubr.bf16.mxu0 0
      %1278 = vmatmul.mubr.bf16.gmra.mxu0 %v1158
      %v1279 = vpop.f32.mrf.mxu0
      %v1280 = vadd.f32 %v979, %v1279
      %v1281 = vpop.f32.mrf.mxu0
      %v1282 = vpop.f32.mrf.mxu0
      %v1283 = vadd.f32 %v982, %v1282
      %v1284 = vpop.f32.mrf.mxu0
      %1285 = vmatprep.mubr.bf16.mxu0 0
      %1286 = vmatmul.mubr.bf16.gmra.mxu0 %v1161
      %v1287 = vpop.f32.mrf.mxu0
      %v1288 = vadd.f32 %v987, %v1287
      %v1289 = vpop.f32.mrf.mxu0
      %v1290 = vpop.f32.mrf.mxu0
      %v1291 = vadd.f32 %v990, %v1290
      %v1292 = vpop.f32.mrf.mxu0
      %1293 = vmatprep.mubr.bf16.mxu0 0
      %1294 = vmatmul.mubr.bf16.gmra.mxu0 %v1164
      %v1295 = vpop.f32.mrf.mxu0
      %v1296 = vadd.f32 %v995, %v1295
      %v1297 = vpop.f32.mrf.mxu0
      %v1298 = vpop.f32.mrf.mxu0
      %v1299 = vadd.f32 %v998, %v1298
      %v1300 = vpop.f32.mrf.mxu0
      %1301 = vmatprep.mubr.bf16.mxu0 0
      %1302 = vmatmul.mubr.bf16.gmra.mxu0 %v1167
      %v1303 = vpop.f32.mrf.mxu0
      %v1304 = vadd.f32 %v1003, %v1303
      %v1305 = vpop.f32.mrf.mxu0
      %v1306 = vpop.f32.mrf.mxu0
      %v1307 = vadd.f32 %v1006, %v1306
      %v1308 = vpop.f32.mrf.mxu0
      %1309 = vmatprep.mubr.bf16.mxu0 0
      %1310 = vmatmul.mubr.bf16.gmra.mxu0 %v1170
      %v1311 = vpop.f32.mrf.mxu0
      %v1312 = vadd.f32 %v1011, %v1311
      %v1313 = vpop.f32.mrf.mxu0
      %v1314 = vpop.f32.mrf.mxu0
      %v1315 = vadd.f32 %v1014, %v1314
      %v1316 = vpop.f32.mrf.mxu0
      %1317 = vmatprep.mubr.bf16.mxu0 0
      %1318 = vmatmul.mubr.bf16.gmra.mxu0 %v1173
      %v1319 = vpop.f32.mrf.mxu0
      %v1320 = vadd.f32 %v1019, %v1319
      %v1321 = vpop.f32.mrf.mxu0
      %v1322 = vpop.f32.mrf.mxu0
      %v1323 = vadd.f32 %v1022, %v1322
      %v1324 = vpop.f32.mrf.mxu0
      %1325 = vmatprep.mubr.bf16.mxu0 0
      %1326 = vmatmul.mubr.bf16.gmra.mxu0 %v1176
      %v1327 = vpop.f32.mrf.mxu0
      %v1328 = vadd.f32 %v1027, %v1327
      %v1329 = vpop.f32.mrf.mxu0
      %v1330 = vpop.f32.mrf.mxu0
      %v1331 = vadd.f32 %v1030, %v1330
      %v1332 = vpop.f32.mrf.mxu0
      %1333 = vmatprep.mubr.bf16.mxu0 0
      %1334 = vmatmul.mubr.bf16.gmra.mxu0 %v1179
      %v1335 = vpop.f32.mrf.mxu0
      %v1336 = vadd.f32 %v1035, %v1335
      %v1337 = vpop.f32.mrf.mxu0
      %v1338 = vpop.f32.mrf.mxu0
      %v1339 = vadd.f32 %v1038, %v1338
      %v1340 = vpop.f32.mrf.mxu0
      %1341 = vdwg.mxu0
      %v1342 = vld [vmem:[%s315] sm:$0xe]
      %v1343 = vld [vmem:[%s315 + $0xc] sm:$0xe]
      %v1344 = vld [vmem:[%s315 + $0x18] sm:$0xe]
      %v1345 = vld [vmem:[%s315 + $0x24] sm:$0xe]
      %v1346 = vld [vmem:[%s315 + $0x30] sm:$0xe]
      %v1347 = vld [vmem:[%s315 + $0x3c] sm:$0xe]
      %v1348 = vld [vmem:[%s315 + $0x48] sm:$0xe]
      %v1349 = vld [vmem:[%s315 + $0x54] sm:$0xe]
      %v1350 = vld [vmem:[%s315 + $0x60] sm:$0xe]
      %v1351 = vld [vmem:[%s315 + $0x6c] sm:$0xe]
      %v1352 = vld [vmem:[%s315 + $0x78] sm:$0xe]
      %v1353 = vld [vmem:[%s315 + $0x84] sm:$0xe]
      %v1354 = vld [vmem:[%s315 + $0x90] sm:$0xe]
      %v1355 = vld [vmem:[%s315 + $0x9c] sm:$0xe]
      %v1356 = vld [vmem:[%s315 + $0xa8] sm:$0xe]
      %v1357 = vld [vmem:[%s315 + $0xb4] sm:$0xe]
      %vm1390 = vcmask 1042432
      %vm1391 = vcmask 1046532
      %vm1392 = vmor %vm1390, %vm1391
      %v1393 = vrot.slane %v1342, 5
      %v1394 = vrot.slane %v1393, 4
      %v1395 = vrot.slane %v328, 5
      %v1396 = vsel %vm1392, %v1394, %v1395
      %v1397 = vrot.slane %v1395, 4
      %v1398 = vrot.slane %v363, 5
      %v1399 = vsel %vm1392, %v1397, %v1398
      %v1400 = vrot.slane %v1343, 5
      %v1401 = vrot.slane %v1400, 4
      %v1402 = vrot.slane %v330, 5
      %v1403 = vsel %vm1392, %v1401, %v1402
      %v1404 = vrot.slane %v1402, 4
      %v1405 = vrot.slane %v364, 5
      %v1406 = vsel %vm1392, %v1404, %v1405
      %v1407 = vrot.slane %v1344, 5
      %v1408 = vrot.slane %v1407, 4
      %v1409 = vrot.slane %v332, 5
      %v1410 = vsel %vm1392, %v1408, %v1409
      %v1411 = vrot.slane %v1409, 4
      %v1412 = vrot.slane %v365, 5
      %v1413 = vsel %vm1392, %v1411, %v1412
      %v1414 = vrot.slane %v1345, 5
      %v1415 = vrot.slane %v1414, 4
      %v1416 = vrot.slane %v334, 5
      %v1417 = vsel %vm1392, %v1415, %v1416
      %v1418 = vrot.slane %v1416, 4
      %v1419 = vrot.slane %v366, 5
      %v1420 = vsel %vm1392, %v1418, %v1419
      %v1421 = vrot.slane %v1346, 5
      %v1422 = vrot.slane %v1421, 4
      %v1423 = vrot.slane %v336, 5
      %v1424 = vsel %vm1392, %v1422, %v1423
      %v1425 = vrot.slane %v1423, 4
      %v1426 = vrot.slane %v367, 5
      %v1427 = vsel %vm1392, %v1425, %v1426
      %v1428 = vrot.slane %v1347, 5
      %v1429 = vrot.slane %v1428, 4
      %v1430 = vrot.slane %v338, 5
      %v1431 = vsel %vm1392, %v1429, %v1430
      %v1432 = vrot.slane %v1430, 4
      %v1433 = vrot.slane %v368, 5
      %v1434 = vsel %vm1392, %v1432, %v1433
      %v1435 = vrot.slane %v1348, 5
      %v1436 = vrot.slane %v1435, 4
      %v1437 = vrot.slane %v340, 5
      %v1438 = vsel %vm1392, %v1436, %v1437
      %v1439 = vrot.slane %v1437, 4
      %v1440 = vrot.slane %v369, 5
      %v1441 = vsel %vm1392, %v1439, %v1440
      %v1442 = vrot.slane %v1349, 5
      %v1443 = vrot.slane %v1442, 4
      %v1444 = vrot.slane %v342, 5
      %v1445 = vsel %vm1392, %v1443, %v1444
      %v1446 = vrot.slane %v1444, 4
      %v1447 = vrot.slane %v370, 5
      %v1448 = vsel %vm1392, %v1446, %v1447
      %v1449 = vrot.slane %v1350, 5
      %v1450 = vrot.slane %v1449, 4
      %v1451 = vrot.slane %v344, 5
      %v1452 = vsel %vm1392, %v1450, %v1451
      %v1453 = vrot.slane %v1451, 4
      %v1454 = vrot.slane %v371, 5
      %v1455 = vsel %vm1392, %v1453, %v1454
      %v1456 = vrot.slane %v1351, 5
      %v1457 = vrot.slane %v1456, 4
      %v1458 = vrot.slane %v346, 5
      %v1459 = vsel %vm1392, %v1457, %v1458
      %v1460 = vrot.slane %v1458, 4
      %v1461 = vrot.slane %v372, 5
      %v1462 = vsel %vm1392, %v1460, %v1461
      %v1463 = vrot.slane %v1352, 5
      %v1464 = vrot.slane %v1463, 4
      %v1465 = vrot.slane %v348, 5
      %v1466 = vsel %vm1392, %v1464, %v1465
      %v1467 = vrot.slane %v1465, 4
      %v1468 = vrot.slane %v373, 5
      %v1469 = vsel %vm1392, %v1467, %v1468
      %v1470 = vrot.slane %v1353, 5
      %v1471 = vrot.slane %v1470, 4
      %v1472 = vrot.slane %v350, 5
      %v1473 = vsel %vm1392, %v1471, %v1472
      %v1474 = vrot.slane %v1472, 4
      %v1475 = vrot.slane %v374, 5
      %v1476 = vsel %vm1392, %v1474, %v1475
      %v1477 = vrot.slane %v1354, 5
      %v1478 = vrot.slane %v1477, 4
      %v1479 = vrot.slane %v352, 5
      %v1480 = vsel %vm1392, %v1478, %v1479
      %v1481 = vrot.slane %v1479, 4
      %v1482 = vrot.slane %v375, 5
      %v1483 = vsel %vm1392, %v1481, %v1482
      %v1484 = vrot.slane %v1355, 5
      %v1485 = vrot.slane %v1484, 4
      %v1486 = vrot.slane %v354, 5
      %v1487 = vsel %vm1392, %v1485, %v1486
      %v1488 = vrot.slane %v1486, 4
      %v1489 = vrot.slane %v376, 5
      %v1490 = vsel %vm1392, %v1488, %v1489
      %v1491 = vrot.slane %v1356, 5
      %v1492 = vrot.slane %v1491, 4
      %v1493 = vrot.slane %v356, 5
      %v1494 = vsel %vm1392, %v1492, %v1493
      %v1495 = vrot.slane %v1493, 4
      %v1496 = vrot.slane %v377, 5
      %v1497 = vsel %vm1392, %v1495, %v1496
      %v1498 = vrot.slane %v1357, 5
      %v1499 = vrot.slane %v1498, 4
      %v1500 = vrot.slane %v358, 5
      %v1501 = vsel %vm1392, %v1499, %v1500
      %v1502 = vrot.slane %v1500, 4
      %v1503 = vrot.slane %v378, 5
      %v1504 = vsel %vm1392, %v1502, %v1503
      %s1505 = scalar_lea.vmem %s2, 32
      %v1506 = vld [vmem:[%s1505] sm:$0xf]
      %v1507 = vld [vmem:[%s1505 + $0x4] sm:$0xf]
      %v1508 = vld [vmem:[%s1505 + $0x8] sm:$0xf]
      %v1509 = vld [vmem:[%s1505 + $0xc] sm:$0xf]
      %v1510 = vunpack.c.l.b16 %v1396
      %v1511 = vunpack.c.l.b16 %v1399
      %v1512 = vunpack.c.l.b16 %v1403
      %v1513 = vunpack.c.l.b16 %v1406
      %v1514 = vunpack.c.l.b16 %v1410
      %v1515 = vunpack.c.l.b16 %v1413
      %v1516 = vunpack.c.l.b16 %v1417
      %v1517 = vunpack.c.l.b16 %v1420
      %v1518 = vunpack.c.l.b16 %v1424
      %v1519 = vunpack.c.l.b16 %v1427
      %v1520 = vunpack.c.l.b16 %v1431
      %v1521 = vunpack.c.l.b16 %v1434
      %v1522 = vunpack.c.l.b16 %v1438
      %v1523 = vunpack.c.l.b16 %v1441
      %v1524 = vunpack.c.l.b16 %v1445
      %v1525 = vunpack.c.l.b16 %v1448
      %v1526 = vunpack.c.l.b16 %v1452
      %v1527 = vunpack.c.l.b16 %v1455
      %v1528 = vunpack.c.l.b16 %v1459
      %v1529 = vunpack.c.l.b16 %v1462
      %v1530 = vunpack.c.l.b16 %v1466
      %v1531 = vunpack.c.l.b16 %v1469
      %v1532 = vunpack.c.l.b16 %v1473
      %v1533 = vunpack.c.l.b16 %v1476
      %v1534 = vunpack.c.l.b16 %v1480
      %v1535 = vunpack.c.l.b16 %v1483
      %v1536 = vunpack.c.l.b16 %v1487
      %v1537 = vunpack.c.l.b16 %v1490
      %v1538 = vunpack.c.l.b16 %v1494
      %v1539 = vunpack.c.l.b16 %v1497
      %v1540 = vunpack.c.l.b16 %v1501
      %v1541 = vunpack.c.l.b16 %v1504
      %v1542 = vpack.c.b16 %v1511, %v1510
      %v1543 = vpack.c.b16 %v1513, %v1512
      %v1544 = vpack.c.b16 %v1515, %v1514
      %v1545 = vpack.c.b16 %v1517, %v1516
      %v1546 = vpack.c.b16 %v1519, %v1518
      %v1547 = vpack.c.b16 %v1521, %v1520
      %v1548 = vpack.c.b16 %v1523, %v1522
      %v1549 = vpack.c.b16 %v1525, %v1524
      %v1550 = vpack.c.b16 %v1527, %v1526
      %v1551 = vpack.c.b16 %v1529, %v1528
      %v1552 = vpack.c.b16 %v1531, %v1530
      %v1553 = vpack.c.b16 %v1533, %v1532
      %v1554 = vpack.c.b16 %v1535, %v1534
      %v1555 = vpack.c.b16 %v1537, %v1536
      %v1556 = vpack.c.b16 %v1539, %v1538
      %v1557 = vpack.c.b16 %v1541, %v1540
      %v1562 = vunpack.c.l.b16 %v1506
      %v1563 = vunpack.c.l.b16 %v1507
      %v1564 = vunpack.c.l.b16 %v1508
      %v1565 = vunpack.c.l.b16 %v1509
      %v1566 = vpack.c.b16 %v1563, %v1562
      %v1567 = vpack.c.b16 %v1565, %v1564
      %v1571 = vsel %vm831, %v1542, 0
      %v1574 = vsel %vm831, %v1543, 0
      %v1577 = vsel %vm831, %v1544, 0
      %v1580 = vsel %vm831, %v1545, 0
      %v1583 = vsel %vm831, %v1546, 0
      %v1586 = vsel %vm831, %v1547, 0
      %v1589 = vsel %vm831, %v1548, 0
      %v1592 = vsel %vm831, %v1549, 0
      %v1595 = vsel %vm831, %v1550, 0
      %v1598 = vsel %vm831, %v1551, 0
      %v1601 = vsel %vm831, %v1552, 0
      %v1604 = vsel %vm831, %v1553, 0
      %v1607 = vsel %vm831, %v1554, 0
      %v1610 = vsel %vm831, %v1555, 0
      %v1613 = vsel %vm831, %v1556, 0
      %v1616 = vsel %vm831, %v1557, 0
      %1618 = vmatprep.subr.bf16.mxu0 0
      %1619 = vmatpush1.bf16.msra.mxu0 0
      %1620 = vmatprep.subr.bf16.mxu0 0
      %1621 = vmatpush1.bf16.msra.mxu0 0
      %1622 = vmatprep.subr.bf16.mxu0 0
      %1623 = vmatpush1.bf16.msra.mxu0 0
      %1624 = vmatprep.subr.bf16.mxu0 0
      %1625 = vmatpush1.bf16.msra.mxu0 0
      %1626 = vmatprep.subr.bf16.mxu0 0
      %1627 = vmatpush1.bf16.msra.mxu0 0
      %1628 = vmatprep.subr.bf16.mxu0 0
      %1629 = vmatpush1.bf16.msra.mxu0 0
      %1630 = vmatprep.subr.bf16.mxu0 0
      %1631 = vmatpush1.bf16.msra.mxu0 %v1567
      %1632 = vmatprep.subr.bf16.mxu0 0
      %1633 = vmatpush1.bf16.msra.mxu0 %v1566
      %1634 = vmatprep.subr.bf16.mxu0 0
      %1635 = vmatpush2.bf16.msra.mxu0 0
      %1636 = vmatprep.subr.bf16.mxu0 0
      %1637 = vmatpush2.bf16.msra.mxu0 0
      %1638 = vmatprep.subr.bf16.mxu0 0
      %1639 = vmatpush2.bf16.msra.mxu0 0
      %1640 = vmatprep.subr.bf16.mxu0 0
      %1641 = vmatpush2.bf16.msra.mxu0 0
      %1642 = vmatprep.subr.bf16.mxu0 0
      %1643 = vmatpush2.bf16.msra.mxu0 0
      %1644 = vmatprep.subr.bf16.mxu0 0
      %1645 = vmatpush2.bf16.msra.mxu0 0
      %1646 = vmatprep.subr.bf16.mxu0 0
      %1647 = vmatpush2.bf16.msra.mxu0 0
      %1648 = vmatprep.subr.bf16.mxu0 0
      %1649 = vmatpush2.bf16.msra.mxu0 0
      %1650 = vmatprep.mubr.bf16.mxu0 0
      %1651 = vmatmul.mubr.bf16.gmra.mxu0 %v1571
      %v1652 = vpop.f32.mrf.mxu0
      %v1653 = vadd.f32 0.0, %v1652
      %v1654 = vpop.f32.mrf.mxu0
      %v1655 = vpop.f32.mrf.mxu0
      %v1656 = vadd.f32 0.0, %v1655
      %v1657 = vpop.f32.mrf.mxu0
      %1658 = vmatprep.mubr.bf16.mxu0 0
      %1659 = vmatmul.mubr.bf16.gmra.mxu0 %v1574
      %v1660 = vpop.f32.mrf.mxu0
      %v1661 = vadd.f32 0.0, %v1660
      %v1662 = vpop.f32.mrf.mxu0
      %v1663 = vpop.f32.mrf.mxu0
      %v1664 = vadd.f32 0.0, %v1663
      %v1665 = vpop.f32.mrf.mxu0
      %1666 = vmatprep.mubr.bf16.mxu0 0
      %1667 = vmatmul.mubr.bf16.gmra.mxu0 %v1577
      %v1668 = vpop.f32.mrf.mxu0
      %v1669 = vadd.f32 0.0, %v1668
      %v1670 = vpop.f32.mrf.mxu0
      %v1671 = vpop.f32.mrf.mxu0
      %v1672 = vadd.f32 0.0, %v1671
      %v1673 = vpop.f32.mrf.mxu0
      %1674 = vmatprep.mubr.bf16.mxu0 0
      %1675 = vmatmul.mubr.bf16.gmra.mxu0 %v1580
      %v1676 = vpop.f32.mrf.mxu0
      %v1677 = vadd.f32 0.0, %v1676
      %v1678 = vpop.f32.mrf.mxu0
      %v1679 = vpop.f32.mrf.mxu0
      %v1680 = vadd.f32 0.0, %v1679
      %v1681 = vpop.f32.mrf.mxu0
      %1682 = vmatprep.mubr.bf16.mxu0 0
      %1683 = vmatmul.mubr.bf16.gmra.mxu0 %v1583
      %v1684 = vpop.f32.mrf.mxu0
      %v1685 = vadd.f32 0.0, %v1684
      %v1686 = vpop.f32.mrf.mxu0
      %v1687 = vpop.f32.mrf.mxu0
      %v1688 = vadd.f32 0.0, %v1687
      %v1689 = vpop.f32.mrf.mxu0
      %1690 = vmatprep.mubr.bf16.mxu0 0
      %1691 = vmatmul.mubr.bf16.gmra.mxu0 %v1586
      %v1692 = vpop.f32.mrf.mxu0
      %v1693 = vadd.f32 0.0, %v1692
      %v1694 = vpop.f32.mrf.mxu0
      %v1695 = vpop.f32.mrf.mxu0
      %v1696 = vadd.f32 0.0, %v1695
      %v1697 = vpop.f32.mrf.mxu0
      %1698 = vmatprep.mubr.bf16.mxu0 0
      %1699 = vmatmul.mubr.bf16.gmra.mxu0 %v1589
      %v1700 = vpop.f32.mrf.mxu0
      %v1701 = vadd.f32 0.0, %v1700
      %v1702 = vpop.f32.mrf.mxu0
      %v1703 = vpop.f32.mrf.mxu0
      %v1704 = vadd.f32 0.0, %v1703
      %v1705 = vpop.f32.mrf.mxu0
      %1706 = vmatprep.mubr.bf16.mxu0 0
      %1707 = vmatmul.mubr.bf16.gmra.mxu0 %v1592
      %v1708 = vpop.f32.mrf.mxu0
      %v1709 = vadd.f32 0.0, %v1708
      %v1710 = vpop.f32.mrf.mxu0
      %v1711 = vpop.f32.mrf.mxu0
      %v1712 = vadd.f32 0.0, %v1711
      %v1713 = vpop.f32.mrf.mxu0
      %1714 = vmatprep.mubr.bf16.mxu0 0
      %1715 = vmatmul.mubr.bf16.gmra.mxu0 %v1595
      %v1716 = vpop.f32.mrf.mxu0
      %v1717 = vadd.f32 0.0, %v1716
      %v1718 = vpop.f32.mrf.mxu0
      %v1719 = vpop.f32.mrf.mxu0
      %v1720 = vadd.f32 0.0, %v1719
      %v1721 = vpop.f32.mrf.mxu0
      %1722 = vmatprep.mubr.bf16.mxu0 0
      %1723 = vmatmul.mubr.bf16.gmra.mxu0 %v1598
      %v1724 = vpop.f32.mrf.mxu0
      %v1725 = vadd.f32 0.0, %v1724
      %v1726 = vpop.f32.mrf.mxu0
      %v1727 = vpop.f32.mrf.mxu0
      %v1728 = vadd.f32 0.0, %v1727
      %v1729 = vpop.f32.mrf.mxu0
      %1730 = vmatprep.mubr.bf16.mxu0 0
      %1731 = vmatmul.mubr.bf16.gmra.mxu0 %v1601
      %v1732 = vpop.f32.mrf.mxu0
      %v1733 = vadd.f32 0.0, %v1732
      %v1734 = vpop.f32.mrf.mxu0
      %v1735 = vpop.f32.mrf.mxu0
      %v1736 = vadd.f32 0.0, %v1735
      %v1737 = vpop.f32.mrf.mxu0
      %1738 = vmatprep.mubr.bf16.mxu0 0
      %1739 = vmatmul.mubr.bf16.gmra.mxu0 %v1604
      %v1740 = vpop.f32.mrf.mxu0
      %v1741 = vadd.f32 0.0, %v1740
      %v1742 = vpop.f32.mrf.mxu0
      %v1743 = vpop.f32.mrf.mxu0
      %v1744 = vadd.f32 0.0, %v1743
      %v1745 = vpop.f32.mrf.mxu0
      %1746 = vmatprep.mubr.bf16.mxu0 0
      %1747 = vmatmul.mubr.bf16.gmra.mxu0 %v1607
      %v1748 = vpop.f32.mrf.mxu0
      %v1749 = vadd.f32 0.0, %v1748
      %v1750 = vpop.f32.mrf.mxu0
      %v1751 = vpop.f32.mrf.mxu0
      %v1752 = vadd.f32 0.0, %v1751
      %v1753 = vpop.f32.mrf.mxu0
      %1754 = vmatprep.mubr.bf16.mxu0 0
      %1755 = vmatmul.mubr.bf16.gmra.mxu0 %v1610
      %v1756 = vpop.f32.mrf.mxu0
      %v1757 = vadd.f32 0.0, %v1756
      %v1758 = vpop.f32.mrf.mxu0
      %v1759 = vpop.f32.mrf.mxu0
      %v1760 = vadd.f32 0.0, %v1759
      %v1761 = vpop.f32.mrf.mxu0
      %1762 = vmatprep.mubr.bf16.mxu0 0
      %1763 = vmatmul.mubr.bf16.gmra.mxu0 %v1613
      %v1764 = vpop.f32.mrf.mxu0
      %v1765 = vadd.f32 0.0, %v1764
      %v1766 = vpop.f32.mrf.mxu0
      %v1767 = vpop.f32.mrf.mxu0
      %v1768 = vadd.f32 0.0, %v1767
      %v1769 = vpop.f32.mrf.mxu0
      %1770 = vmatprep.mubr.bf16.mxu0 0
      %1771 = vmatmul.mubr.bf16.gmra.mxu0 %v1616
      %v1772 = vpop.f32.mrf.mxu0
      %v1773 = vadd.f32 0.0, %v1772
      %v1774 = vpop.f32.mrf.mxu0
      %v1775 = vpop.f32.mrf.mxu0
      %v1776 = vadd.f32 0.0, %v1775
      %v1777 = vpop.f32.mrf.mxu0
      %1778 = vdwg.mxu0
      %v1779 = vadd.f32 %v1216, %v1653
      %v1780 = vadd.f32 %v1219, %v1656
      %v1781 = vadd.f32 %v1224, %v1661
      %v1782 = vadd.f32 %v1227, %v1664
      %v1783 = vadd.f32 %v1232, %v1669
      %v1784 = vadd.f32 %v1235, %v1672
      %v1785 = vadd.f32 %v1240, %v1677
      %v1786 = vadd.f32 %v1243, %v1680
      %v1787 = vadd.f32 %v1248, %v1685
      %v1788 = vadd.f32 %v1251, %v1688
      %v1789 = vadd.f32 %v1256, %v1693
      %v1790 = vadd.f32 %v1259, %v1696
      %v1791 = vadd.f32 %v1264, %v1701
      %v1792 = vadd.f32 %v1267, %v1704
      %v1793 = vadd.f32 %v1272, %v1709
      %v1794 = vadd.f32 %v1275, %v1712
      %v1795 = vadd.f32 %v1280, %v1717
      %v1796 = vadd.f32 %v1283, %v1720
      %v1797 = vadd.f32 %v1288, %v1725
      %v1798 = vadd.f32 %v1291, %v1728
      %v1799 = vadd.f32 %v1296, %v1733
      %v1800 = vadd.f32 %v1299, %v1736
      %v1801 = vadd.f32 %v1304, %v1741
      %v1802 = vadd.f32 %v1307, %v1744
      %v1803 = vadd.f32 %v1312, %v1749
      %v1804 = vadd.f32 %v1315, %v1752
      %v1805 = vadd.f32 %v1320, %v1757
      %v1806 = vadd.f32 %v1323, %v1760
      %v1807 = vadd.f32 %v1328, %v1765
      %v1808 = vadd.f32 %v1331, %v1768
      %v1809 = vadd.f32 %v1336, %v1773
      %v1810 = vadd.f32 %v1339, %v1776
      %s1811 = scalar_lea.vmem %s315, 12
      %v1812 = vld [vmem:[%s1811] sm:$0xf]
      %v1813 = vld [vmem:[%s1811 + $0x4] sm:$0xf]
      %v1814 = vld [vmem:[%s1811 + $0xc] sm:$0xf]
      %v1815 = vld [vmem:[%s1811 + $0x10] sm:$0xf]
      %v1816 = vld [vmem:[%s1811 + $0x18] sm:$0xf]
      %v1817 = vld [vmem:[%s1811 + $0x1c] sm:$0xf]
      %v1818 = vld [vmem:[%s1811 + $0x24] sm:$0xf]
      %v1819 = vld [vmem:[%s1811 + $0x28] sm:$0xf]
      %v1820 = vld [vmem:[%s1811 + $0x30] sm:$0xf]
      %v1821 = vld [vmem:[%s1811 + $0x34] sm:$0xf]
      %v1822 = vld [vmem:[%s1811 + $0x3c] sm:$0xf]
      %v1823 = vld [vmem:[%s1811 + $0x40] sm:$0xf]
      %v1824 = vld [vmem:[%s1811 + $0x48] sm:$0xf]
      %v1825 = vld [vmem:[%s1811 + $0x4c] sm:$0xf]
      %v1826 = vld [vmem:[%s1811 + $0x54] sm:$0xf]
      %v1827 = vld [vmem:[%s1811 + $0x58] sm:$0xf]
      %v1828 = vld [vmem:[%s1811 + $0x60] sm:$0xf]
      %v1829 = vld [vmem:[%s1811 + $0x64] sm:$0xf]
      %v1830 = vld [vmem:[%s1811 + $0x6c] sm:$0xf]
      %v1831 = vld [vmem:[%s1811 + $0x70] sm:$0xf]
      %v1832 = vld [vmem:[%s1811 + $0x78] sm:$0xf]
      %v1833 = vld [vmem:[%s1811 + $0x7c] sm:$0xf]
      %v1834 = vld [vmem:[%s1811 + $0x84] sm:$0xf]
      %v1835 = vld [vmem:[%s1811 + $0x88] sm:$0xf]
      %v1836 = vld [vmem:[%s1811 + $0x90] sm:$0xf]
      %v1837 = vld [vmem:[%s1811 + $0x94] sm:$0xf]
      %v1838 = vld [vmem:[%s1811 + $0x9c] sm:$0xf]
      %v1839 = vld [vmem:[%s1811 + $0xa0] sm:$0xf]
      %v1840 = vld [vmem:[%s1811 + $0xa8] sm:$0xf]
      %v1841 = vld [vmem:[%s1811 + $0xac] sm:$0xf]
      %v1842 = vld [vmem:[%s1811 + $0xb4] sm:$0xf]
      %v1843 = vld [vmem:[%s1811 + $0xb8] sm:$0xf]
      %s1844 = scalar_lea.vmem %s2, 48
      %v1845 = vld [vmem:[%s1844] sm:$0xf]
      %v1846 = vld [vmem:[%s1844 + $0x4] sm:$0xf]
      %v1847 = vld [vmem:[%s1844 + $0x8] sm:$0xf]
      %v1848 = vld [vmem:[%s1844 + $0xc] sm:$0xf]
      %v1881 = vunpack.c.l.b16 %v1812
      %v1882 = vunpack.c.l.b16 %v1813
      %v1883 = vunpack.c.l.b16 %v1814
      %v1884 = vunpack.c.l.b16 %v1815
      %v1885 = vunpack.c.l.b16 %v1816
      %v1886 = vunpack.c.l.b16 %v1817
      %v1887 = vunpack.c.l.b16 %v1818
      %v1888 = vunpack.c.l.b16 %v1819
      %v1889 = vunpack.c.l.b16 %v1820
      %v1890 = vunpack.c.l.b16 %v1821
      %v1891 = vunpack.c.l.b16 %v1822
      %v1892 = vunpack.c.l.b16 %v1823
      %v1893 = vunpack.c.l.b16 %v1824
      %v1894 = vunpack.c.l.b16 %v1825
      %v1895 = vunpack.c.l.b16 %v1826
      %v1896 = vunpack.c.l.b16 %v1827
      %v1897 = vunpack.c.l.b16 %v1828
      %v1898 = vunpack.c.l.b16 %v1829
      %v1899 = vunpack.c.l.b16 %v1830
      %v1900 = vunpack.c.l.b16 %v1831
      %v1901 = vunpack.c.l.b16 %v1832
      %v1902 = vunpack.c.l.b16 %v1833
      %v1903 = vunpack.c.l.b16 %v1834
      %v1904 = vunpack.c.l.b16 %v1835
      %v1905 = vunpack.c.l.b16 %v1836
      %v1906 = vunpack.c.l.b16 %v1837
      %v1907 = vunpack.c.l.b16 %v1838
      %v1908 = vunpack.c.l.b16 %v1839
      %v1909 = vunpack.c.l.b16 %v1840
      %v1910 = vunpack.c.l.b16 %v1841
      %v1911 = vunpack.c.l.b16 %v1842
      %v1912 = vunpack.c.l.b16 %v1843
      %v1913 = vpack.c.b16 %v1882, %v1881
      %v1914 = vpack.c.b16 %v1884, %v1883
      %v1915 = vpack.c.b16 %v1886, %v1885
      %v1916 = vpack.c.b16 %v1888, %v1887
      %v1917 = vpack.c.b16 %v1890, %v1889
      %v1918 = vpack.c.b16 %v1892, %v1891
      %v1919 = vpack.c.b16 %v1894, %v1893
      %v1920 = vpack.c.b16 %v1896, %v1895
      %v1921 = vpack.c.b16 %v1898, %v1897
      %v1922 = vpack.c.b16 %v1900, %v1899
      %v1923 = vpack.c.b16 %v1902, %v1901
      %v1924 = vpack.c.b16 %v1904, %v1903
      %v1925 = vpack.c.b16 %v1906, %v1905
      %v1926 = vpack.c.b16 %v1908, %v1907
      %v1927 = vpack.c.b16 %v1910, %v1909
      %v1928 = vpack.c.b16 %v1912, %v1911
      %v1933 = vunpack.c.l.b16 %v1845
      %v1934 = vunpack.c.l.b16 %v1846
      %v1935 = vunpack.c.l.b16 %v1847
      %v1936 = vunpack.c.l.b16 %v1848
      %v1937 = vpack.c.b16 %v1934, %v1933
      %v1938 = vpack.c.b16 %v1936, %v1935
      %v1942 = vsel %vm831, %v1913, 0
      %v1945 = vsel %vm831, %v1914, 0
      %v1948 = vsel %vm831, %v1915, 0
      %v1951 = vsel %vm831, %v1916, 0
      %v1954 = vsel %vm831, %v1917, 0
      %v1957 = vsel %vm831, %v1918, 0
      %v1960 = vsel %vm831, %v1919, 0
      %v1963 = vsel %vm831, %v1920, 0
      %v1966 = vsel %vm831, %v1921, 0
      %v1969 = vsel %vm831, %v1922, 0
      %v1972 = vsel %vm831, %v1923, 0
      %v1975 = vsel %vm831, %v1924, 0
      %v1978 = vsel %vm831, %v1925, 0
      %v1981 = vsel %vm831, %v1926, 0
      %v1984 = vsel %vm831, %v1927, 0
      %v1987 = vsel %vm831, %v1928, 0
      %1989 = vmatprep.subr.bf16.mxu0 0
      %1990 = vmatpush1.bf16.msra.mxu0 0
      %1991 = vmatprep.subr.bf16.mxu0 0
      %1992 = vmatpush1.bf16.msra.mxu0 0
      %1993 = vmatprep.subr.bf16.mxu0 0
      %1994 = vmatpush1.bf16.msra.mxu0 0
      %1995 = vmatprep.subr.bf16.mxu0 0
      %1996 = vmatpush1.bf16.msra.mxu0 0
      %1997 = vmatprep.subr.bf16.mxu0 0
      %1998 = vmatpush1.bf16.msra.mxu0 0
      %1999 = vmatprep.subr.bf16.mxu0 0
      %2000 = vmatpush1.bf16.msra.mxu0 0
      %2001 = vmatprep.subr.bf16.mxu0 0
      %2002 = vmatpush1.bf16.msra.mxu0 %v1938
      %2003 = vmatprep.subr.bf16.mxu0 0
      %2004 = vmatpush1.bf16.msra.mxu0 %v1937
      %2005 = vmatprep.subr.bf16.mxu0 0
      %2006 = vmatpush2.bf16.msra.mxu0 0
      %2007 = vmatprep.subr.bf16.mxu0 0
      %2008 = vmatpush2.bf16.msra.mxu0 0
      %2009 = vmatprep.subr.bf16.mxu0 0
      %2010 = vmatpush2.bf16.msra.mxu0 0
      %2011 = vmatprep.subr.bf16.mxu0 0
      %2012 = vmatpush2.bf16.msra.mxu0 0
      %2013 = vmatprep.subr.bf16.mxu0 0
      %2014 = vmatpush2.bf16.msra.mxu0 0
      %2015 = vmatprep.subr.bf16.mxu0 0
      %2016 = vmatpush2.bf16.msra.mxu0 0
      %2017 = vmatprep.subr.bf16.mxu0 0
      %2018 = vmatpush2.bf16.msra.mxu0 0
      %2019 = vmatprep.subr.bf16.mxu0 0
      %2020 = vmatpush2.bf16.msra.mxu0 0
      %2021 = vmatprep.mubr.bf16.mxu0 0
      %2022 = vmatmul.mubr.bf16.gmra.mxu0 %v1942
      %v2023 = vpop.f32.mrf.mxu0
      %v2024 = vadd.f32 0.0, %v2023
      %v2025 = vpop.f32.mrf.mxu0
      %v2026 = vpop.f32.mrf.mxu0
      %v2027 = vadd.f32 0.0, %v2026
      %v2028 = vpop.f32.mrf.mxu0
      %2029 = vmatprep.mubr.bf16.mxu0 0
      %2030 = vmatmul.mubr.bf16.gmra.mxu0 %v1945
      %v2031 = vpop.f32.mrf.mxu0
      %v2032 = vadd.f32 0.0, %v2031
      %v2033 = vpop.f32.mrf.mxu0
      %v2034 = vpop.f32.mrf.mxu0
      %v2035 = vadd.f32 0.0, %v2034
      %v2036 = vpop.f32.mrf.mxu0
      %2037 = vmatprep.mubr.bf16.mxu0 0
      %2038 = vmatmul.mubr.bf16.gmra.mxu0 %v1948
      %v2039 = vpop.f32.mrf.mxu0
      %v2040 = vadd.f32 0.0, %v2039
      %v2041 = vpop.f32.mrf.mxu0
      %v2042 = vpop.f32.mrf.mxu0
      %v2043 = vadd.f32 0.0, %v2042
      %v2044 = vpop.f32.mrf.mxu0
      %2045 = vmatprep.mubr.bf16.mxu0 0
      %2046 = vmatmul.mubr.bf16.gmra.mxu0 %v1951
      %v2047 = vpop.f32.mrf.mxu0
      %v2048 = vadd.f32 0.0, %v2047
      %v2049 = vpop.f32.mrf.mxu0
      %v2050 = vpop.f32.mrf.mxu0
      %v2051 = vadd.f32 0.0, %v2050
      %v2052 = vpop.f32.mrf.mxu0
      %2053 = vmatprep.mubr.bf16.mxu0 0
      %2054 = vmatmul.mubr.bf16.gmra.mxu0 %v1954
      %v2055 = vpop.f32.mrf.mxu0
      %v2056 = vadd.f32 0.0, %v2055
      %v2057 = vpop.f32.mrf.mxu0
      %v2058 = vpop.f32.mrf.mxu0
      %v2059 = vadd.f32 0.0, %v2058
      %v2060 = vpop.f32.mrf.mxu0
      %2061 = vmatprep.mubr.bf16.mxu0 0
      %2062 = vmatmul.mubr.bf16.gmra.mxu0 %v1957
      %v2063 = vpop.f32.mrf.mxu0
      %v2064 = vadd.f32 0.0, %v2063
      %v2065 = vpop.f32.mrf.mxu0
      %v2066 = vpop.f32.mrf.mxu0
      %v2067 = vadd.f32 0.0, %v2066
      %v2068 = vpop.f32.mrf.mxu0
      %2069 = vmatprep.mubr.bf16.mxu0 0
      %2070 = vmatmul.mubr.bf16.gmra.mxu0 %v1960
      %v2071 = vpop.f32.mrf.mxu0
      %v2072 = vadd.f32 0.0, %v2071
      %v2073 = vpop.f32.mrf.mxu0
      %v2074 = vpop.f32.mrf.mxu0
      %v2075 = vadd.f32 0.0, %v2074
      %v2076 = vpop.f32.mrf.mxu0
      %2077 = vmatprep.mubr.bf16.mxu0 0
      %2078 = vmatmul.mubr.bf16.gmra.mxu0 %v1963
      %v2079 = vpop.f32.mrf.mxu0
      %v2080 = vadd.f32 0.0, %v2079
      %v2081 = vpop.f32.mrf.mxu0
      %v2082 = vpop.f32.mrf.mxu0
      %v2083 = vadd.f32 0.0, %v2082
      %v2084 = vpop.f32.mrf.mxu0
      %2085 = vmatprep.mubr.bf16.mxu0 0
      %2086 = vmatmul.mubr.bf16.gmra.mxu0 %v1966
      %v2087 = vpop.f32.mrf.mxu0
      %v2088 = vadd.f32 0.0, %v2087
      %v2089 = vpop.f32.mrf.mxu0
      %v2090 = vpop.f32.mrf.mxu0
      %v2091 = vadd.f32 0.0, %v2090
      %v2092 = vpop.f32.mrf.mxu0
      %2093 = vmatprep.mubr.bf16.mxu0 0
      %2094 = vmatmul.mubr.bf16.gmra.mxu0 %v1969
      %v2095 = vpop.f32.mrf.mxu0
      %v2096 = vadd.f32 0.0, %v2095
      %v2097 = vpop.f32.mrf.mxu0
      %v2098 = vpop.f32.mrf.mxu0
      %v2099 = vadd.f32 0.0, %v2098
      %v2100 = vpop.f32.mrf.mxu0
      %2101 = vmatprep.mubr.bf16.mxu0 0
      %2102 = vmatmul.mubr.bf16.gmra.mxu0 %v1972
      %v2103 = vpop.f32.mrf.mxu0
      %v2104 = vadd.f32 0.0, %v2103
      %v2105 = vpop.f32.mrf.mxu0
      %v2106 = vpop.f32.mrf.mxu0
      %v2107 = vadd.f32 0.0, %v2106
      %v2108 = vpop.f32.mrf.mxu0
      %2109 = vmatprep.mubr.bf16.mxu0 0
      %2110 = vmatmul.mubr.bf16.gmra.mxu0 %v1975
      %v2111 = vpop.f32.mrf.mxu0
      %v2112 = vadd.f32 0.0, %v2111
      %v2113 = vpop.f32.mrf.mxu0
      %v2114 = vpop.f32.mrf.mxu0
      %v2115 = vadd.f32 0.0, %v2114
      %v2116 = vpop.f32.mrf.mxu0
      %2117 = vmatprep.mubr.bf16.mxu0 0
      %2118 = vmatmul.mubr.bf16.gmra.mxu0 %v1978
      %v2119 = vpop.f32.mrf.mxu0
      %v2120 = vadd.f32 0.0, %v2119
      %v2121 = vpop.f32.mrf.mxu0
      %v2122 = vpop.f32.mrf.mxu0
      %v2123 = vadd.f32 0.0, %v2122
      %v2124 = vpop.f32.mrf.mxu0
      %2125 = vmatprep.mubr.bf16.mxu0 0
      %2126 = vmatmul.mubr.bf16.gmra.mxu0 %v1981
      %v2127 = vpop.f32.mrf.mxu0
      %v2128 = vadd.f32 0.0, %v2127
      %v2129 = vpop.f32.mrf.mxu0
      %v2130 = vpop.f32.mrf.mxu0
      %v2131 = vadd.f32 0.0, %v2130
      %v2132 = vpop.f32.mrf.mxu0
      %2133 = vmatprep.mubr.bf16.mxu0 0
      %2134 = vmatmul.mubr.bf16.gmra.mxu0 %v1984
      %v2135 = vpop.f32.mrf.mxu0
      %v2136 = vadd.f32 0.0, %v2135
      %v2137 = vpop.f32.mrf.mxu0
      %v2138 = vpop.f32.mrf.mxu0
      %v2139 = vadd.f32 0.0, %v2138
      %v2140 = vpop.f32.mrf.mxu0
      %2141 = vmatprep.mubr.bf16.mxu0 0
      %2142 = vmatmul.mubr.bf16.gmra.mxu0 %v1987
      %v2143 = vpop.f32.mrf.mxu0
      %v2144 = vadd.f32 0.0, %v2143
      %v2145 = vpop.f32.mrf.mxu0
      %v2146 = vpop.f32.mrf.mxu0
      %v2147 = vadd.f32 0.0, %v2146
      %v2148 = vpop.f32.mrf.mxu0
      %2149 = vdwg.mxu0
      %v2150 = vadd.f32 %v1779, %v2024
      %v2151 = vadd.f32 %v1780, %v2027
      %v2152 = vadd.f32 %v1781, %v2032
      %v2153 = vadd.f32 %v1782, %v2035
      %v2154 = vadd.f32 %v1783, %v2040
      %v2155 = vadd.f32 %v1784, %v2043
      %v2156 = vadd.f32 %v1785, %v2048
      %v2157 = vadd.f32 %v1786, %v2051
      %v2158 = vadd.f32 %v1787, %v2056
      %v2159 = vadd.f32 %v1788, %v2059
      %v2160 = vadd.f32 %v1789, %v2064
      %v2161 = vadd.f32 %v1790, %v2067
      %v2162 = vadd.f32 %v1791, %v2072
      %v2163 = vadd.f32 %v1792, %v2075
      %v2164 = vadd.f32 %v1793, %v2080
      %v2165 = vadd.f32 %v1794, %v2083
      %v2166 = vadd.f32 %v1795, %v2088
      %v2167 = vadd.f32 %v1796, %v2091
      %v2168 = vadd.f32 %v1797, %v2096
      %v2169 = vadd.f32 %v1798, %v2099
      %v2170 = vadd.f32 %v1799, %v2104
      %v2171 = vadd.f32 %v1800, %v2107
      %v2172 = vadd.f32 %v1801, %v2112
      %v2173 = vadd.f32 %v1802, %v2115
      %v2174 = vadd.f32 %v1803, %v2120
      %v2175 = vadd.f32 %v1804, %v2123
      %v2176 = vadd.f32 %v1805, %v2128
      %v2177 = vadd.f32 %v1806, %v2131
      %v2178 = vadd.f32 %v1807, %v2136
      %v2179 = vadd.f32 %v1808, %v2139
      %v2180 = vadd.f32 %v1809, %v2144
      %v2181 = vadd.f32 %v1810, %v2147
      %v2182 = vld [vmem:[%s1811] sm:$0xf]
      %v2183 = vld [vmem:[%s1811 + $0x4] sm:$0xf]
      %v2184 = vld [vmem:[%s1811 + $0x8] sm:$0x1]
      %v2185 = vld [vmem:[%s1811 + $0xc] sm:$0xf]
      %v2186 = vld [vmem:[%s1811 + $0x10] sm:$0xf]
      %v2187 = vld [vmem:[%s1811 + $0x14] sm:$0x1]
      %v2188 = vld [vmem:[%s1811 + $0x18] sm:$0xf]
      %v2189 = vld [vmem:[%s1811 + $0x1c] sm:$0xf]
      %v2190 = vld [vmem:[%s1811 + $0x20] sm:$0x1]
      %v2191 = vld [vmem:[%s1811 + $0x24] sm:$0xf]
      %v2192 = vld [vmem:[%s1811 + $0x28] sm:$0xf]
      %v2193 = vld [vmem:[%s1811 + $0x2c] sm:$0x1]
      %v2194 = vld [vmem:[%s1811 + $0x30] sm:$0xf]
      %v2195 = vld [vmem:[%s1811 + $0x34] sm:$0xf]
      %v2196 = vld [vmem:[%s1811 + $0x38] sm:$0x1]
      %v2197 = vld [vmem:[%s1811 + $0x3c] sm:$0xf]
      %v2198 = vld [vmem:[%s1811 + $0x40] sm:$0xf]
      %v2199 = vld [vmem:[%s1811 + $0x44] sm:$0x1]
      %v2200 = vld [vmem:[%s1811 + $0x48] sm:$0xf]
      %v2201 = vld [vmem:[%s1811 + $0x4c] sm:$0xf]
      %v2202 = vld [vmem:[%s1811 + $0x50] sm:$0x1]
      %v2203 = vld [vmem:[%s1811 + $0x54] sm:$0xf]
      %v2204 = vld [vmem:[%s1811 + $0x58] sm:$0xf]
      %v2205 = vld [vmem:[%s1811 + $0x5c] sm:$0x1]
      %v2206 = vld [vmem:[%s1811 + $0x60] sm:$0xf]
      %v2207 = vld [vmem:[%s1811 + $0x64] sm:$0xf]
      %v2208 = vld [vmem:[%s1811 + $0x68] sm:$0x1]
      %v2209 = vld [vmem:[%s1811 + $0x6c] sm:$0xf]
      %v2210 = vld [vmem:[%s1811 + $0x70] sm:$0xf]
      %v2211 = vld [vmem:[%s1811 + $0x74] sm:$0x1]
      %v2212 = vld [vmem:[%s1811 + $0x78] sm:$0xf]
      %v2213 = vld [vmem:[%s1811 + $0x7c] sm:$0xf]
      %v2214 = vld [vmem:[%s1811 + $0x80] sm:$0x1]
      %v2215 = vld [vmem:[%s1811 + $0x84] sm:$0xf]
      %v2216 = vld [vmem:[%s1811 + $0x88] sm:$0xf]
      %v2217 = vld [vmem:[%s1811 + $0x8c] sm:$0x1]
      %v2218 = vld [vmem:[%s1811 + $0x90] sm:$0xf]
      %v2219 = vld [vmem:[%s1811 + $0x94] sm:$0xf]
      %v2220 = vld [vmem:[%s1811 + $0x98] sm:$0x1]
      %v2221 = vld [vmem:[%s1811 + $0x9c] sm:$0xf]
      %v2222 = vld [vmem:[%s1811 + $0xa0] sm:$0xf]
      %v2223 = vld [vmem:[%s1811 + $0xa4] sm:$0x1]
      %v2224 = vld [vmem:[%s1811 + $0xa8] sm:$0xf]
      %v2225 = vld [vmem:[%s1811 + $0xac] sm:$0xf]
      %v2226 = vld [vmem:[%s1811 + $0xb0] sm:$0x1]
      %v2227 = vld [vmem:[%s1811 + $0xb4] sm:$0xf]
      %v2228 = vld [vmem:[%s1811 + $0xb8] sm:$0xf]
      %v2229 = vld [vmem:[%s1811 + $0xbc] sm:$0x1]
      %v2231 = vshrl.u32 %v2182, 16
      %v2233 = vrot.slane %v2231, 4
      %v2234 = vshll.u32 %v2182, 16
      %v2236 = vrot.slane %v2234, 5
      %v2237 = vor.u32 %v2233, %v2236
      %v2238 = vrot.slane %v2237, 4
      %v2240 = vshll.u32 %v2183, 16
      %v2242 = vrot.slane %v2240, 5
      %v2243 = vsel %vm381, %v2238, %v2242
      %v2244 = vshrl.u32 %v2183, 16
      %v2246 = vrot.slane %v2244, 4
      %v2247 = vor.u32 %v2246, %v2242
      %v2248 = vrot.slane %v2247, 4
      %v2250 = vshll.u32 %v2184, 16
      %v2252 = vrot.slane %v2250, 5
      %v2253 = vsel %vm381, %v2248, %v2252
      %v2255 = vshrl.u32 %v2185, 16
      %v2257 = vrot.slane %v2255, 4
      %v2258 = vshll.u32 %v2185, 16
      %v2260 = vrot.slane %v2258, 5
      %v2261 = vor.u32 %v2257, %v2260
      %v2262 = vrot.slane %v2261, 4
      %v2264 = vshll.u32 %v2186, 16
      %v2266 = vrot.slane %v2264, 5
      %v2267 = vsel %vm381, %v2262, %v2266
      %v2268 = vshrl.u32 %v2186, 16
      %v2270 = vrot.slane %v2268, 4
      %v2271 = vor.u32 %v2270, %v2266
      %v2272 = vrot.slane %v2271, 4
      %v2274 = vshll.u32 %v2187, 16
      %v2276 = vrot.slane %v2274, 5
      %v2277 = vsel %vm381, %v2272, %v2276
      %v2279 = vshrl.u32 %v2188, 16
      %v2281 = vrot.slane %v2279, 4
      %v2282 = vshll.u32 %v2188, 16
      %v2284 = vrot.slane %v2282, 5
      %v2285 = vor.u32 %v2281, %v2284
      %v2286 = vrot.slane %v2285, 4
      %v2288 = vshll.u32 %v2189, 16
      %v2290 = vrot.slane %v2288, 5
      %v2291 = vsel %vm381, %v2286, %v2290
      %v2292 = vshrl.u32 %v2189, 16
      %v2294 = vrot.slane %v2292, 4
      %v2295 = vor.u32 %v2294, %v2290
      %v2296 = vrot.slane %v2295, 4
      %v2298 = vshll.u32 %v2190, 16
      %v2300 = vrot.slane %v2298, 5
      %v2301 = vsel %vm381, %v2296, %v2300
      %v2303 = vshrl.u32 %v2191, 16
      %v2305 = vrot.slane %v2303, 4
      %v2306 = vshll.u32 %v2191, 16
      %v2308 = vrot.slane %v2306, 5
      %v2309 = vor.u32 %v2305, %v2308
      %v2310 = vrot.slane %v2309, 4
      %v2312 = vshll.u32 %v2192, 16
      %v2314 = vrot.slane %v2312, 5
      %v2315 = vsel %vm381, %v2310, %v2314
      %v2316 = vshrl.u32 %v2192, 16
      %v2318 = vrot.slane %v2316, 4
      %v2319 = vor.u32 %v2318, %v2314
      %v2320 = vrot.slane %v2319, 4
      %v2322 = vshll.u32 %v2193, 16
      %v2324 = vrot.slane %v2322, 5
      %v2325 = vsel %vm381, %v2320, %v2324
      %v2327 = vshrl.u32 %v2194, 16
      %v2329 = vrot.slane %v2327, 4
      %v2330 = vshll.u32 %v2194, 16
      %v2332 = vrot.slane %v2330, 5
      %v2333 = vor.u32 %v2329, %v2332
      %v2334 = vrot.slane %v2333, 4
      %v2336 = vshll.u32 %v2195, 16
      %v2338 = vrot.slane %v2336, 5
      %v2339 = vsel %vm381, %v2334, %v2338
      %v2340 = vshrl.u32 %v2195, 16
      %v2342 = vrot.slane %v2340, 4
      %v2343 = vor.u32 %v2342, %v2338
      %v2344 = vrot.slane %v2343, 4
      %v2346 = vshll.u32 %v2196, 16
      %v2348 = vrot.slane %v2346, 5
      %v2349 = vsel %vm381, %v2344, %v2348
      %v2351 = vshrl.u32 %v2197, 16
      %v2353 = vrot.slane %v2351, 4
      %v2354 = vshll.u32 %v2197, 16
      %v2356 = vrot.slane %v2354, 5
      %v2357 = vor.u32 %v2353, %v2356
      %v2358 = vrot.slane %v2357, 4
      %v2360 = vshll.u32 %v2198, 16
      %v2362 = vrot.slane %v2360, 5
      %v2363 = vsel %vm381, %v2358, %v2362
      %v2364 = vshrl.u32 %v2198, 16
      %v2366 = vrot.slane %v2364, 4
      %v2367 = vor.u32 %v2366, %v2362
      %v2368 = vrot.slane %v2367, 4
      %v2370 = vshll.u32 %v2199, 16
      %v2372 = vrot.slane %v2370, 5
      %v2373 = vsel %vm381, %v2368, %v2372
      %v2375 = vshrl.u32 %v2200, 16
      %v2377 = vrot.slane %v2375, 4
      %v2378 = vshll.u32 %v2200, 16
      %v2380 = vrot.slane %v2378, 5
      %v2381 = vor.u32 %v2377, %v2380
      %v2382 = vrot.slane %v2381, 4
      %v2384 = vshll.u32 %v2201, 16
      %v2386 = vrot.slane %v2384, 5
      %v2387 = vsel %vm381, %v2382, %v2386
      %v2388 = vshrl.u32 %v2201, 16
      %v2390 = vrot.slane %v2388, 4
      %v2391 = vor.u32 %v2390, %v2386
      %v2392 = vrot.slane %v2391, 4
      %v2394 = vshll.u32 %v2202, 16
      %v2396 = vrot.slane %v2394, 5
      %v2397 = vsel %vm381, %v2392, %v2396
      %v2399 = vshrl.u32 %v2203, 16
      %v2401 = vrot.slane %v2399, 4
      %v2402 = vshll.u32 %v2203, 16
      %v2404 = vrot.slane %v2402, 5
      %v2405 = vor.u32 %v2401, %v2404
      %v2406 = vrot.slane %v2405, 4
      %v2408 = vshll.u32 %v2204, 16
      %v2410 = vrot.slane %v2408, 5
      %v2411 = vsel %vm381, %v2406, %v2410
      %v2412 = vshrl.u32 %v2204, 16
      %v2414 = vrot.slane %v2412, 4
      %v2415 = vor.u32 %v2414, %v2410
      %v2416 = vrot.slane %v2415, 4
      %v2418 = vshll.u32 %v2205, 16
      %v2420 = vrot.slane %v2418, 5
      %v2421 = vsel %vm381, %v2416, %v2420
      %v2423 = vshrl.u32 %v2206, 16
      %v2425 = vrot.slane %v2423, 4
      %v2426 = vshll.u32 %v2206, 16
      %v2428 = vrot.slane %v2426, 5
      %v2429 = vor.u32 %v2425, %v2428
      %v2430 = vrot.slane %v2429, 4
      %v2432 = vshll.u32 %v2207, 16
      %v2434 = vrot.slane %v2432, 5
      %v2435 = vsel %vm381, %v2430, %v2434
      %v2436 = vshrl.u32 %v2207, 16
      %v2438 = vrot.slane %v2436, 4
      %v2439 = vor.u32 %v2438, %v2434
      %v2440 = vrot.slane %v2439, 4
      %v2442 = vshll.u32 %v2208, 16
      %v2444 = vrot.slane %v2442, 5
      %v2445 = vsel %vm381, %v2440, %v2444
      %v2447 = vshrl.u32 %v2209, 16
      %v2449 = vrot.slane %v2447, 4
      %v2450 = vshll.u32 %v2209, 16
      %v2452 = vrot.slane %v2450, 5
      %v2453 = vor.u32 %v2449, %v2452
      %v2454 = vrot.slane %v2453, 4
      %v2456 = vshll.u32 %v2210, 16
      %v2458 = vrot.slane %v2456, 5
      %v2459 = vsel %vm381, %v2454, %v2458
      %v2460 = vshrl.u32 %v2210, 16
      %v2462 = vrot.slane %v2460, 4
      %v2463 = vor.u32 %v2462, %v2458
      %v2464 = vrot.slane %v2463, 4
      %v2466 = vshll.u32 %v2211, 16
      %v2468 = vrot.slane %v2466, 5
      %v2469 = vsel %vm381, %v2464, %v2468
      %v2471 = vshrl.u32 %v2212, 16
      %v2473 = vrot.slane %v2471, 4
      %v2474 = vshll.u32 %v2212, 16
      %v2476 = vrot.slane %v2474, 5
      %v2477 = vor.u32 %v2473, %v2476
      %v2478 = vrot.slane %v2477, 4
      %v2480 = vshll.u32 %v2213, 16
      %v2482 = vrot.slane %v2480, 5
      %v2483 = vsel %vm381, %v2478, %v2482
      %v2484 = vshrl.u32 %v2213, 16
      %v2486 = vrot.slane %v2484, 4
      %v2487 = vor.u32 %v2486, %v2482
      %v2488 = vrot.slane %v2487, 4
      %v2490 = vshll.u32 %v2214, 16
      %v2492 = vrot.slane %v2490, 5
      %v2493 = vsel %vm381, %v2488, %v2492
      %v2495 = vshrl.u32 %v2215, 16
      %v2497 = vrot.slane %v2495, 4
      %v2498 = vshll.u32 %v2215, 16
      %v2500 = vrot.slane %v2498, 5
      %v2501 = vor.u32 %v2497, %v2500
      %v2502 = vrot.slane %v2501, 4
      %v2504 = vshll.u32 %v2216, 16
      %v2506 = vrot.slane %v2504, 5
      %v2507 = vsel %vm381, %v2502, %v2506
      %v2508 = vshrl.u32 %v2216, 16
      %v2510 = vrot.slane %v2508, 4
      %v2511 = vor.u32 %v2510, %v2506
      %v2512 = vrot.slane %v2511, 4
      %v2514 = vshll.u32 %v2217, 16
      %v2516 = vrot.slane %v2514, 5
      %v2517 = vsel %vm381, %v2512, %v2516
      %v2519 = vshrl.u32 %v2218, 16
      %v2521 = vrot.slane %v2519, 4
      %v2522 = vshll.u32 %v2218, 16
      %v2524 = vrot.slane %v2522, 5
      %v2525 = vor.u32 %v2521, %v2524
      %v2526 = vrot.slane %v2525, 4
      %v2528 = vshll.u32 %v2219, 16
      %v2530 = vrot.slane %v2528, 5
      %v2531 = vsel %vm381, %v2526, %v2530
      %v2532 = vshrl.u32 %v2219, 16
      %v2534 = vrot.slane %v2532, 4
      %v2535 = vor.u32 %v2534, %v2530
      %v2536 = vrot.slane %v2535, 4
      %v2538 = vshll.u32 %v2220, 16
      %v2540 = vrot.slane %v2538, 5
      %v2541 = vsel %vm381, %v2536, %v2540
      %v2543 = vshrl.u32 %v2221, 16
      %v2545 = vrot.slane %v2543, 4
      %v2546 = vshll.u32 %v2221, 16
      %v2548 = vrot.slane %v2546, 5
      %v2549 = vor.u32 %v2545, %v2548
      %v2550 = vrot.slane %v2549, 4
      %v2552 = vshll.u32 %v2222, 16
      %v2554 = vrot.slane %v2552, 5
      %v2555 = vsel %vm381, %v2550, %v2554
      %v2556 = vshrl.u32 %v2222, 16
      %v2558 = vrot.slane %v2556, 4
      %v2559 = vor.u32 %v2558, %v2554
      %v2560 = vrot.slane %v2559, 4
      %v2562 = vshll.u32 %v2223, 16
      %v2564 = vrot.slane %v2562, 5
      %v2565 = vsel %vm381, %v2560, %v2564
      %v2567 = vshrl.u32 %v2224, 16
      %v2569 = vrot.slane %v2567, 4
      %v2570 = vshll.u32 %v2224, 16
      %v2572 = vrot.slane %v2570, 5
      %v2573 = vor.u32 %v2569, %v2572
      %v2574 = vrot.slane %v2573, 4
      %v2576 = vshll.u32 %v2225, 16
      %v2578 = vrot.slane %v2576, 5
      %v2579 = vsel %vm381, %v2574, %v2578
      %v2580 = vshrl.u32 %v2225, 16
      %v2582 = vrot.slane %v2580, 4
      %v2583 = vor.u32 %v2582, %v2578
      %v2584 = vrot.slane %v2583, 4
      %v2586 = vshll.u32 %v2226, 16
      %v2588 = vrot.slane %v2586, 5
      %v2589 = vsel %vm381, %v2584, %v2588
      %v2591 = vshrl.u32 %v2227, 16
      %v2593 = vrot.slane %v2591, 4
      %v2594 = vshll.u32 %v2227, 16
      %v2596 = vrot.slane %v2594, 5
      %v2597 = vor.u32 %v2593, %v2596
      %v2598 = vrot.slane %v2597, 4
      %v2600 = vshll.u32 %v2228, 16
      %v2602 = vrot.slane %v2600, 5
      %v2603 = vsel %vm381, %v2598, %v2602
      %v2604 = vshrl.u32 %v2228, 16
      %v2606 = vrot.slane %v2604, 4
      %v2607 = vor.u32 %v2606, %v2602
      %v2608 = vrot.slane %v2607, 4
      %v2610 = vshll.u32 %v2229, 16
      %v2612 = vrot.slane %v2610, 5
      %v2613 = vsel %vm381, %v2608, %v2612
      %s2614 = scalar_lea.vmem %s2, 64
      %v2615 = vld [vmem:[%s2614] sm:$0xf]
      %v2616 = vld [vmem:[%s2614 + $0x4] sm:$0xf]
      %v2617 = vld [vmem:[%s2614 + $0x8] sm:$0xf]
      %v2618 = vld [vmem:[%s2614 + $0xc] sm:$0xf]
      %v2619 = vunpack.c.l.b16 %v2243
      %v2620 = vunpack.c.l.b16 %v2253
      %v2621 = vunpack.c.l.b16 %v2267
      %v2622 = vunpack.c.l.b16 %v2277
      %v2623 = vunpack.c.l.b16 %v2291
      %v2624 = vunpack.c.l.b16 %v2301
      %v2625 = vunpack.c.l.b16 %v2315
      %v2626 = vunpack.c.l.b16 %v2325
      %v2627 = vunpack.c.l.b16 %v2339
      %v2628 = vunpack.c.l.b16 %v2349
      %v2629 = vunpack.c.l.b16 %v2363
      %v2630 = vunpack.c.l.b16 %v2373
      %v2631 = vunpack.c.l.b16 %v2387
      %v2632 = vunpack.c.l.b16 %v2397
      %v2633 = vunpack.c.l.b16 %v2411
      %v2634 = vunpack.c.l.b16 %v2421
      %v2635 = vunpack.c.l.b16 %v2435
      %v2636 = vunpack.c.l.b16 %v2445
      %v2637 = vunpack.c.l.b16 %v2459
      %v2638 = vunpack.c.l.b16 %v2469
      %v2639 = vunpack.c.l.b16 %v2483
      %v2640 = vunpack.c.l.b16 %v2493
      %v2641 = vunpack.c.l.b16 %v2507
      %v2642 = vunpack.c.l.b16 %v2517
      %v2643 = vunpack.c.l.b16 %v2531
      %v2644 = vunpack.c.l.b16 %v2541
      %v2645 = vunpack.c.l.b16 %v2555
      %v2646 = vunpack.c.l.b16 %v2565
      %v2647 = vunpack.c.l.b16 %v2579
      %v2648 = vunpack.c.l.b16 %v2589
      %v2649 = vunpack.c.l.b16 %v2603
      %v2650 = vunpack.c.l.b16 %v2613
      %v2651 = vpack.c.b16 %v2620, %v2619
      %v2652 = vpack.c.b16 %v2622, %v2621
      %v2653 = vpack.c.b16 %v2624, %v2623
      %v2654 = vpack.c.b16 %v2626, %v2625
      %v2655 = vpack.c.b16 %v2628, %v2627
      %v2656 = vpack.c.b16 %v2630, %v2629
      %v2657 = vpack.c.b16 %v2632, %v2631
      %v2658 = vpack.c.b16 %v2634, %v2633
      %v2659 = vpack.c.b16 %v2636, %v2635
      %v2660 = vpack.c.b16 %v2638, %v2637
      %v2661 = vpack.c.b16 %v2640, %v2639
      %v2662 = vpack.c.b16 %v2642, %v2641
      %v2663 = vpack.c.b16 %v2644, %v2643
      %v2664 = vpack.c.b16 %v2646, %v2645
      %v2665 = vpack.c.b16 %v2648, %v2647
      %v2666 = vpack.c.b16 %v2650, %v2649
      %v2671 = vunpack.c.l.b16 %v2615
      %v2672 = vunpack.c.l.b16 %v2616
      %v2673 = vunpack.c.l.b16 %v2617
      %v2674 = vunpack.c.l.b16 %v2618
      %v2675 = vpack.c.b16 %v2672, %v2671
      %v2676 = vpack.c.b16 %v2674, %v2673
      %v2680 = vsel %vm831, %v2651, 0
      %v2683 = vsel %vm831, %v2652, 0
      %v2686 = vsel %vm831, %v2653, 0
      %v2689 = vsel %vm831, %v2654, 0
      %v2692 = vsel %vm831, %v2655, 0
      %v2695 = vsel %vm831, %v2656, 0
      %v2698 = vsel %vm831, %v2657, 0
      %v2701 = vsel %vm831, %v2658, 0
      %v2704 = vsel %vm831, %v2659, 0
      %v2707 = vsel %vm831, %v2660, 0
      %v2710 = vsel %vm831, %v2661, 0
      %v2713 = vsel %vm831, %v2662, 0
      %v2716 = vsel %vm831, %v2663, 0
      %v2719 = vsel %vm831, %v2664, 0
      %v2722 = vsel %vm831, %v2665, 0
      %v2725 = vsel %vm831, %v2666, 0
      %2727 = vmatprep.subr.bf16.mxu0 0
      %2728 = vmatpush1.bf16.msra.mxu0 0
      %2729 = vmatprep.subr.bf16.mxu0 0
      %2730 = vmatpush1.bf16.msra.mxu0 0
      %2731 = vmatprep.subr.bf16.mxu0 0
      %2732 = vmatpush1.bf16.msra.mxu0 0
      %2733 = vmatprep.subr.bf16.mxu0 0
      %2734 = vmatpush1.bf16.msra.mxu0 0
      %2735 = vmatprep.subr.bf16.mxu0 0
      %2736 = vmatpush1.bf16.msra.mxu0 0
      %2737 = vmatprep.subr.bf16.mxu0 0
      %2738 = vmatpush1.bf16.msra.mxu0 0
      %2739 = vmatprep.subr.bf16.mxu0 0
      %2740 = vmatpush1.bf16.msra.mxu0 %v2676
      %2741 = vmatprep.subr.bf16.mxu0 0
      %2742 = vmatpush1.bf16.msra.mxu0 %v2675
      %2743 = vmatprep.subr.bf16.mxu0 0
      %2744 = vmatpush2.bf16.msra.mxu0 0
      %2745 = vmatprep.subr.bf16.mxu0 0
      %2746 = vmatpush2.bf16.msra.mxu0 0
      %2747 = vmatprep.subr.bf16.mxu0 0
      %2748 = vmatpush2.bf16.msra.mxu0 0
      %2749 = vmatprep.subr.bf16.mxu0 0
      %2750 = vmatpush2.bf16.msra.mxu0 0
      %2751 = vmatprep.subr.bf16.mxu0 0
      %2752 = vmatpush2.bf16.msra.mxu0 0
      %2753 = vmatprep.subr.bf16.mxu0 0
      %2754 = vmatpush2.bf16.msra.mxu0 0
      %2755 = vmatprep.subr.bf16.mxu0 0
      %2756 = vmatpush2.bf16.msra.mxu0 0
      %2757 = vmatprep.subr.bf16.mxu0 0
      %2758 = vmatpush2.bf16.msra.mxu0 0
      %2759 = vmatprep.mubr.bf16.mxu0 0
      %2760 = vmatmul.mubr.bf16.gmra.mxu0 %v2680
      %v2761 = vpop.f32.mrf.mxu0
      %v2762 = vadd.f32 0.0, %v2761
      %v2763 = vpop.f32.mrf.mxu0
      %v2764 = vpop.f32.mrf.mxu0
      %v2765 = vadd.f32 0.0, %v2764
      %v2766 = vpop.f32.mrf.mxu0
      %2767 = vmatprep.mubr.bf16.mxu0 0
      %2768 = vmatmul.mubr.bf16.gmra.mxu0 %v2683
      %v2769 = vpop.f32.mrf.mxu0
      %v2770 = vadd.f32 0.0, %v2769
      %v2771 = vpop.f32.mrf.mxu0
      %v2772 = vpop.f32.mrf.mxu0
      %v2773 = vadd.f32 0.0, %v2772
      %v2774 = vpop.f32.mrf.mxu0
      %2775 = vmatprep.mubr.bf16.mxu0 0
      %2776 = vmatmul.mubr.bf16.gmra.mxu0 %v2686
      %v2777 = vpop.f32.mrf.mxu0
      %v2778 = vadd.f32 0.0, %v2777
      %v2779 = vpop.f32.mrf.mxu0
      %v2780 = vpop.f32.mrf.mxu0
      %v2781 = vadd.f32 0.0, %v2780
      %v2782 = vpop.f32.mrf.mxu0
      %2783 = vmatprep.mubr.bf16.mxu0 0
      %2784 = vmatmul.mubr.bf16.gmra.mxu0 %v2689
      %v2785 = vpop.f32.mrf.mxu0
      %v2786 = vadd.f32 0.0, %v2785
      %v2787 = vpop.f32.mrf.mxu0
      %v2788 = vpop.f32.mrf.mxu0
      %v2789 = vadd.f32 0.0, %v2788
      %v2790 = vpop.f32.mrf.mxu0
      %2791 = vmatprep.mubr.bf16.mxu0 0
      %2792 = vmatmul.mubr.bf16.gmra.mxu0 %v2692
      %v2793 = vpop.f32.mrf.mxu0
      %v2794 = vadd.f32 0.0, %v2793
      %v2795 = vpop.f32.mrf.mxu0
      %v2796 = vpop.f32.mrf.mxu0
      %v2797 = vadd.f32 0.0, %v2796
      %v2798 = vpop.f32.mrf.mxu0
      %2799 = vmatprep.mubr.bf16.mxu0 0
      %2800 = vmatmul.mubr.bf16.gmra.mxu0 %v2695
      %v2801 = vpop.f32.mrf.mxu0
      %v2802 = vadd.f32 0.0, %v2801
      %v2803 = vpop.f32.mrf.mxu0
      %v2804 = vpop.f32.mrf.mxu0
      %v2805 = vadd.f32 0.0, %v2804
      %v2806 = vpop.f32.mrf.mxu0
      %2807 = vmatprep.mubr.bf16.mxu0 0
      %2808 = vmatmul.mubr.bf16.gmra.mxu0 %v2698
      %v2809 = vpop.f32.mrf.mxu0
      %v2810 = vadd.f32 0.0, %v2809
      %v2811 = vpop.f32.mrf.mxu0
      %v2812 = vpop.f32.mrf.mxu0
      %v2813 = vadd.f32 0.0, %v2812
      %v2814 = vpop.f32.mrf.mxu0
      %2815 = vmatprep.mubr.bf16.mxu0 0
      %2816 = vmatmul.mubr.bf16.gmra.mxu0 %v2701
      %v2817 = vpop.f32.mrf.mxu0
      %v2818 = vadd.f32 0.0, %v2817
      %v2819 = vpop.f32.mrf.mxu0
      %v2820 = vpop.f32.mrf.mxu0
      %v2821 = vadd.f32 0.0, %v2820
      %v2822 = vpop.f32.mrf.mxu0
      %2823 = vmatprep.mubr.bf16.mxu0 0
      %2824 = vmatmul.mubr.bf16.gmra.mxu0 %v2704
      %v2825 = vpop.f32.mrf.mxu0
      %v2826 = vadd.f32 0.0, %v2825
      %v2827 = vpop.f32.mrf.mxu0
      %v2828 = vpop.f32.mrf.mxu0
      %v2829 = vadd.f32 0.0, %v2828
      %v2830 = vpop.f32.mrf.mxu0
      %2831 = vmatprep.mubr.bf16.mxu0 0
      %2832 = vmatmul.mubr.bf16.gmra.mxu0 %v2707
      %v2833 = vpop.f32.mrf.mxu0
      %v2834 = vadd.f32 0.0, %v2833
      %v2835 = vpop.f32.mrf.mxu0
      %v2836 = vpop.f32.mrf.mxu0
      %v2837 = vadd.f32 0.0, %v2836
      %v2838 = vpop.f32.mrf.mxu0
      %2839 = vmatprep.mubr.bf16.mxu0 0
      %2840 = vmatmul.mubr.bf16.gmra.mxu0 %v2710
      %v2841 = vpop.f32.mrf.mxu0
      %v2842 = vadd.f32 0.0, %v2841
      %v2843 = vpop.f32.mrf.mxu0
      %v2844 = vpop.f32.mrf.mxu0
      %v2845 = vadd.f32 0.0, %v2844
      %v2846 = vpop.f32.mrf.mxu0
      %2847 = vmatprep.mubr.bf16.mxu0 0
      %2848 = vmatmul.mubr.bf16.gmra.mxu0 %v2713
      %v2849 = vpop.f32.mrf.mxu0
      %v2850 = vadd.f32 0.0, %v2849
      %v2851 = vpop.f32.mrf.mxu0
      %v2852 = vpop.f32.mrf.mxu0
      %v2853 = vadd.f32 0.0, %v2852
      %v2854 = vpop.f32.mrf.mxu0
      %2855 = vmatprep.mubr.bf16.mxu0 0
      %2856 = vmatmul.mubr.bf16.gmra.mxu0 %v2716
      %v2857 = vpop.f32.mrf.mxu0
      %v2858 = vadd.f32 0.0, %v2857
      %v2859 = vpop.f32.mrf.mxu0
      %v2860 = vpop.f32.mrf.mxu0
      %v2861 = vadd.f32 0.0, %v2860
      %v2862 = vpop.f32.mrf.mxu0
      %2863 = vmatprep.mubr.bf16.mxu0 0
      %2864 = vmatmul.mubr.bf16.gmra.mxu0 %v2719
      %v2865 = vpop.f32.mrf.mxu0
      %v2866 = vadd.f32 0.0, %v2865
      %v2867 = vpop.f32.mrf.mxu0
      %v2868 = vpop.f32.mrf.mxu0
      %v2869 = vadd.f32 0.0, %v2868
      %v2870 = vpop.f32.mrf.mxu0
      %2871 = vmatprep.mubr.bf16.mxu0 0
      %2872 = vmatmul.mubr.bf16.gmra.mxu0 %v2722
      %v2873 = vpop.f32.mrf.mxu0
      %v2874 = vadd.f32 0.0, %v2873
      %v2875 = vpop.f32.mrf.mxu0
      %v2876 = vpop.f32.mrf.mxu0
      %v2877 = vadd.f32 0.0, %v2876
      %v2878 = vpop.f32.mrf.mxu0
      %2879 = vmatprep.mubr.bf16.mxu0 0
      %2880 = vmatmul.mubr.bf16.gmra.mxu0 %v2725
      %v2881 = vpop.f32.mrf.mxu0
      %v2882 = vadd.f32 0.0, %v2881
      %v2883 = vpop.f32.mrf.mxu0
      %v2884 = vpop.f32.mrf.mxu0
      %v2885 = vadd.f32 0.0, %v2884
      %v2886 = vpop.f32.mrf.mxu0
      %2887 = vdwg.mxu0
      %v2888 = vadd.f32 %v2150, %v2762
      %v2889 = vadd.f32 %v2151, %v2765
      %v2890 = vadd.f32 %v2152, %v2770
      %v2891 = vadd.f32 %v2153, %v2773
      %v2892 = vadd.f32 %v2154, %v2778
      %v2893 = vadd.f32 %v2155, %v2781
      %v2894 = vadd.f32 %v2156, %v2786
      %v2895 = vadd.f32 %v2157, %v2789
      %v2896 = vadd.f32 %v2158, %v2794
      %v2897 = vadd.f32 %v2159, %v2797
      %v2898 = vadd.f32 %v2160, %v2802
      %v2899 = vadd.f32 %v2161, %v2805
      %v2900 = vadd.f32 %v2162, %v2810
      %v2901 = vadd.f32 %v2163, %v2813
      %v2902 = vadd.f32 %v2164, %v2818
      %v2903 = vadd.f32 %v2165, %v2821
      %v2904 = vadd.f32 %v2166, %v2826
      %v2905 = vadd.f32 %v2167, %v2829
      %v2906 = vadd.f32 %v2168, %v2834
      %v2907 = vadd.f32 %v2169, %v2837
      %v2908 = vadd.f32 %v2170, %v2842
      %v2909 = vadd.f32 %v2171, %v2845
      %v2910 = vadd.f32 %v2172, %v2850
      %v2911 = vadd.f32 %v2173, %v2853
      %v2912 = vadd.f32 %v2174, %v2858
      %v2913 = vadd.f32 %v2175, %v2861
      %v2914 = vadd.f32 %v2176, %v2866
      %v2915 = vadd.f32 %v2177, %v2869
      %v2916 = vadd.f32 %v2178, %v2874
      %v2917 = vadd.f32 %v2179, %v2877
      %v2918 = vadd.f32 %v2180, %v2882
      %v2919 = vadd.f32 %v2181, %v2885
      %v2920 = vld [vmem:[%s1811] sm:$0xe]
      %v2921 = vld [vmem:[%s1811 + $0xc] sm:$0xe]
      %v2922 = vld [vmem:[%s1811 + $0x18] sm:$0xe]
      %v2923 = vld [vmem:[%s1811 + $0x24] sm:$0xe]
      %v2924 = vld [vmem:[%s1811 + $0x30] sm:$0xe]
      %v2925 = vld [vmem:[%s1811 + $0x3c] sm:$0xe]
      %v2926 = vld [vmem:[%s1811 + $0x48] sm:$0xe]
      %v2927 = vld [vmem:[%s1811 + $0x54] sm:$0xe]
      %v2928 = vld [vmem:[%s1811 + $0x60] sm:$0xe]
      %v2929 = vld [vmem:[%s1811 + $0x6c] sm:$0xe]
      %v2930 = vld [vmem:[%s1811 + $0x78] sm:$0xe]
      %v2931 = vld [vmem:[%s1811 + $0x84] sm:$0xe]
      %v2932 = vld [vmem:[%s1811 + $0x90] sm:$0xe]
      %v2933 = vld [vmem:[%s1811 + $0x9c] sm:$0xe]
      %v2934 = vld [vmem:[%s1811 + $0xa8] sm:$0xe]
      %v2935 = vld [vmem:[%s1811 + $0xb4] sm:$0xe]
      %v2984 = vrot.slane %v2920, 5
      %v2985 = vrot.slane %v2984, 4
      %v2986 = vrot.slane %v2183, 5
      %v2987 = vsel %vm1392, %v2985, %v2986
      %v2988 = vrot.slane %v2986, 4
      %v2989 = vrot.slane %v2184, 5
      %v2990 = vsel %vm1392, %v2988, %v2989
      %v2991 = vrot.slane %v2921, 5
      %v2992 = vrot.slane %v2991, 4
      %v2993 = vrot.slane %v2186, 5
      %v2994 = vsel %vm1392, %v2992, %v2993
      %v2995 = vrot.slane %v2993, 4
      %v2996 = vrot.slane %v2187, 5
      %v2997 = vsel %vm1392, %v2995, %v2996
      %v2998 = vrot.slane %v2922, 5
      %v2999 = vrot.slane %v2998, 4
      %v3000 = vrot.slane %v2189, 5
      %v3001 = vsel %vm1392, %v2999, %v3000
      %v3002 = vrot.slane %v3000, 4
      %v3003 = vrot.slane %v2190, 5
      %v3004 = vsel %vm1392, %v3002, %v3003
      %v3005 = vrot.slane %v2923, 5
      %v3006 = vrot.slane %v3005, 4
      %v3007 = vrot.slane %v2192, 5
      %v3008 = vsel %vm1392, %v3006, %v3007
      %v3009 = vrot.slane %v3007, 4
      %v3010 = vrot.slane %v2193, 5
      %v3011 = vsel %vm1392, %v3009, %v3010
      %v3012 = vrot.slane %v2924, 5
      %v3013 = vrot.slane %v3012, 4
      %v3014 = vrot.slane %v2195, 5
      %v3015 = vsel %vm1392, %v3013, %v3014
      %v3016 = vrot.slane %v3014, 4
      %v3017 = vrot.slane %v2196, 5
      %v3018 = vsel %vm1392, %v3016, %v3017
      %v3019 = vrot.slane %v2925, 5
      %v3020 = vrot.slane %v3019, 4
      %v3021 = vrot.slane %v2198, 5
      %v3022 = vsel %vm1392, %v3020, %v3021
      %v3023 = vrot.slane %v3021, 4
      %v3024 = vrot.slane %v2199, 5
      %v3025 = vsel %vm1392, %v3023, %v3024
      %v3026 = vrot.slane %v2926, 5
      %v3027 = vrot.slane %v3026, 4
      %v3028 = vrot.slane %v2201, 5
      %v3029 = vsel %vm1392, %v3027, %v3028
      %v3030 = vrot.slane %v3028, 4
      %v3031 = vrot.slane %v2202, 5
      %v3032 = vsel %vm1392, %v3030, %v3031
      %v3033 = vrot.slane %v2927, 5
      %v3034 = vrot.slane %v3033, 4
      %v3035 = vrot.slane %v2204, 5
      %v3036 = vsel %vm1392, %v3034, %v3035
      %v3037 = vrot.slane %v3035, 4
      %v3038 = vrot.slane %v2205, 5
      %v3039 = vsel %vm1392, %v3037, %v3038
      %v3040 = vrot.slane %v2928, 5
      %v3041 = vrot.slane %v3040, 4
      %v3042 = vrot.slane %v2207, 5
      %v3043 = vsel %vm1392, %v3041, %v3042
      %v3044 = vrot.slane %v3042, 4
      %v3045 = vrot.slane %v2208, 5
      %v3046 = vsel %vm1392, %v3044, %v3045
      %v3047 = vrot.slane %v2929, 5
      %v3048 = vrot.slane %v3047, 4
      %v3049 = vrot.slane %v2210, 5
      %v3050 = vsel %vm1392, %v3048, %v3049
      %v3051 = vrot.slane %v3049, 4
      %v3052 = vrot.slane %v2211, 5
      %v3053 = vsel %vm1392, %v3051, %v3052
      %v3054 = vrot.slane %v2930, 5
      %v3055 = vrot.slane %v3054, 4
      %v3056 = vrot.slane %v2213, 5
      %v3057 = vsel %vm1392, %v3055, %v3056
      %v3058 = vrot.slane %v3056, 4
      %v3059 = vrot.slane %v2214, 5
      %v3060 = vsel %vm1392, %v3058, %v3059
      %v3061 = vrot.slane %v2931, 5
      %v3062 = vrot.slane %v3061, 4
      %v3063 = vrot.slane %v2216, 5
      %v3064 = vsel %vm1392, %v3062, %v3063
      %v3065 = vrot.slane %v3063, 4
      %v3066 = vrot.slane %v2217, 5
      %v3067 = vsel %vm1392, %v3065, %v3066
      %v3068 = vrot.slane %v2932, 5
      %v3069 = vrot.slane %v3068, 4
      %v3070 = vrot.slane %v2219, 5
      %v3071 = vsel %vm1392, %v3069, %v3070
      %v3072 = vrot.slane %v3070, 4
      %v3073 = vrot.slane %v2220, 5
      %v3074 = vsel %vm1392, %v3072, %v3073
      %v3075 = vrot.slane %v2933, 5
      %v3076 = vrot.slane %v3075, 4
      %v3077 = vrot.slane %v2222, 5
      %v3078 = vsel %vm1392, %v3076, %v3077
      %v3079 = vrot.slane %v3077, 4
      %v3080 = vrot.slane %v2223, 5
      %v3081 = vsel %vm1392, %v3079, %v3080
      %v3082 = vrot.slane %v2934, 5
      %v3083 = vrot.slane %v3082, 4
      %v3084 = vrot.slane %v2225, 5
      %v3085 = vsel %vm1392, %v3083, %v3084
      %v3086 = vrot.slane %v3084, 4
      %v3087 = vrot.slane %v2226, 5
      %v3088 = vsel %vm1392, %v3086, %v3087
      %v3089 = vrot.slane %v2935, 5
      %v3090 = vrot.slane %v3089, 4
      %v3091 = vrot.slane %v2228, 5
      %v3092 = vsel %vm1392, %v3090, %v3091
      %v3093 = vrot.slane %v3091, 4
      %v3094 = vrot.slane %v2229, 5
      %v3095 = vsel %vm1392, %v3093, %v3094
      %s3096 = scalar_lea.vmem %s2, 80
      %v3097 = vld [vmem:[%s3096] sm:$0xf]
      %v3098 = vld [vmem:[%s3096 + $0x4] sm:$0xf]
      %v3099 = vld [vmem:[%s3096 + $0x8] sm:$0xf]
      %v3100 = vld [vmem:[%s3096 + $0xc] sm:$0xf]
      %v3101 = vunpack.c.l.b16 %v2987
      %v3102 = vunpack.c.l.b16 %v2990
      %v3103 = vunpack.c.l.b16 %v2994
      %v3104 = vunpack.c.l.b16 %v2997
      %v3105 = vunpack.c.l.b16 %v3001
      %v3106 = vunpack.c.l.b16 %v3004
      %v3107 = vunpack.c.l.b16 %v3008
      %v3108 = vunpack.c.l.b16 %v3011
      %v3109 = vunpack.c.l.b16 %v3015
      %v3110 = vunpack.c.l.b16 %v3018
      %v3111 = vunpack.c.l.b16 %v3022
      %v3112 = vunpack.c.l.b16 %v3025
      %v3113 = vunpack.c.l.b16 %v3029
      %v3114 = vunpack.c.l.b16 %v3032
      %v3115 = vunpack.c.l.b16 %v3036
      %v3116 = vunpack.c.l.b16 %v3039
      %v3117 = vunpack.c.l.b16 %v3043
      %v3118 = vunpack.c.l.b16 %v3046
      %v3119 = vunpack.c.l.b16 %v3050
      %v3120 = vunpack.c.l.b16 %v3053
      %v3121 = vunpack.c.l.b16 %v3057
      %v3122 = vunpack.c.l.b16 %v3060
      %v3123 = vunpack.c.l.b16 %v3064
      %v3124 = vunpack.c.l.b16 %v3067
      %v3125 = vunpack.c.l.b16 %v3071
      %v3126 = vunpack.c.l.b16 %v3074
      %v3127 = vunpack.c.l.b16 %v3078
      %v3128 = vunpack.c.l.b16 %v3081
      %v3129 = vunpack.c.l.b16 %v3085
      %v3130 = vunpack.c.l.b16 %v3088
      %v3131 = vunpack.c.l.b16 %v3092
      %v3132 = vunpack.c.l.b16 %v3095
      %v3133 = vpack.c.b16 %v3102, %v3101
      %v3134 = vpack.c.b16 %v3104, %v3103
      %v3135 = vpack.c.b16 %v3106, %v3105
      %v3136 = vpack.c.b16 %v3108, %v3107
      %v3137 = vpack.c.b16 %v3110, %v3109
      %v3138 = vpack.c.b16 %v3112, %v3111
      %v3139 = vpack.c.b16 %v3114, %v3113
      %v3140 = vpack.c.b16 %v3116, %v3115
      %v3141 = vpack.c.b16 %v3118, %v3117
      %v3142 = vpack.c.b16 %v3120, %v3119
      %v3143 = vpack.c.b16 %v3122, %v3121
      %v3144 = vpack.c.b16 %v3124, %v3123
      %v3145 = vpack.c.b16 %v3126, %v3125
      %v3146 = vpack.c.b16 %v3128, %v3127
      %v3147 = vpack.c.b16 %v3130, %v3129
      %v3148 = vpack.c.b16 %v3132, %v3131
      %v3153 = vunpack.c.l.b16 %v3097
      %v3154 = vunpack.c.l.b16 %v3098
      %v3155 = vunpack.c.l.b16 %v3099
      %v3156 = vunpack.c.l.b16 %v3100
      %v3157 = vpack.c.b16 %v3154, %v3153
      %v3158 = vpack.c.b16 %v3156, %v3155
      %v3162 = vsel %vm831, %v3133, 0
      %v3165 = vsel %vm831, %v3134, 0
      %v3168 = vsel %vm831, %v3135, 0
      %v3171 = vsel %vm831, %v3136, 0
      %v3174 = vsel %vm831, %v3137, 0
      %v3177 = vsel %vm831, %v3138, 0
      %v3180 = vsel %vm831, %v3139, 0
      %v3183 = vsel %vm831, %v3140, 0
      %v3186 = vsel %vm831, %v3141, 0
      %v3189 = vsel %vm831, %v3142, 0
      %v3192 = vsel %vm831, %v3143, 0
      %v3195 = vsel %vm831, %v3144, 0
      %v3198 = vsel %vm831, %v3145, 0
      %v3201 = vsel %vm831, %v3146, 0
      %v3204 = vsel %vm831, %v3147, 0
      %v3207 = vsel %vm831, %v3148, 0
      %3209 = vmatprep.subr.bf16.mxu0 0
      %3210 = vmatpush1.bf16.msra.mxu0 0
      %3211 = vmatprep.subr.bf16.mxu0 0
      %3212 = vmatpush1.bf16.msra.mxu0 0
      %3213 = vmatprep.subr.bf16.mxu0 0
      %3214 = vmatpush1.bf16.msra.mxu0 0
      %3215 = vmatprep.subr.bf16.mxu0 0
      %3216 = vmatpush1.bf16.msra.mxu0 0
      %3217 = vmatprep.subr.bf16.mxu0 0
      %3218 = vmatpush1.bf16.msra.mxu0 0
      %3219 = vmatprep.subr.bf16.mxu0 0
      %3220 = vmatpush1.bf16.msra.mxu0 0
      %3221 = vmatprep.subr.bf16.mxu0 0
      %3222 = vmatpush1.bf16.msra.mxu0 %v3158
      %3223 = vmatprep.subr.bf16.mxu0 0
      %3224 = vmatpush1.bf16.msra.mxu0 %v3157
      %3225 = vmatprep.subr.bf16.mxu0 0
      %3226 = vmatpush2.bf16.msra.mxu0 0
      %3227 = vmatprep.subr.bf16.mxu0 0
      %3228 = vmatpush2.bf16.msra.mxu0 0
      %3229 = vmatprep.subr.bf16.mxu0 0
      %3230 = vmatpush2.bf16.msra.mxu0 0
      %3231 = vmatprep.subr.bf16.mxu0 0
      %3232 = vmatpush2.bf16.msra.mxu0 0
      %3233 = vmatprep.subr.bf16.mxu0 0
      %3234 = vmatpush2.bf16.msra.mxu0 0
      %3235 = vmatprep.subr.bf16.mxu0 0
      %3236 = vmatpush2.bf16.msra.mxu0 0
      %3237 = vmatprep.subr.bf16.mxu0 0
      %3238 = vmatpush2.bf16.msra.mxu0 0
      %3239 = vmatprep.subr.bf16.mxu0 0
      %3240 = vmatpush2.bf16.msra.mxu0 0
      %3241 = vmatprep.mubr.bf16.mxu0 0
      %3242 = vmatmul.mubr.bf16.gmra.mxu0 %v3162
      %v3243 = vpop.f32.mrf.mxu0
      %v3244 = vadd.f32 0.0, %v3243
      %v3245 = vpop.f32.mrf.mxu0
      %v3246 = vpop.f32.mrf.mxu0
      %v3247 = vadd.f32 0.0, %v3246
      %v3248 = vpop.f32.mrf.mxu0
      %3249 = vmatprep.mubr.bf16.mxu0 0
      %3250 = vmatmul.mubr.bf16.gmra.mxu0 %v3165
      %v3251 = vpop.f32.mrf.mxu0
      %v3252 = vadd.f32 0.0, %v3251
      %v3253 = vpop.f32.mrf.mxu0
      %v3254 = vpop.f32.mrf.mxu0
      %v3255 = vadd.f32 0.0, %v3254
      %v3256 = vpop.f32.mrf.mxu0
      %3257 = vmatprep.mubr.bf16.mxu0 0
      %3258 = vmatmul.mubr.bf16.gmra.mxu0 %v3168
      %v3259 = vpop.f32.mrf.mxu0
      %v3260 = vadd.f32 0.0, %v3259
      %v3261 = vpop.f32.mrf.mxu0
      %v3262 = vpop.f32.mrf.mxu0
      %v3263 = vadd.f32 0.0, %v3262
      %v3264 = vpop.f32.mrf.mxu0
      %3265 = vmatprep.mubr.bf16.mxu0 0
      %3266 = vmatmul.mubr.bf16.gmra.mxu0 %v3171
      %v3267 = vpop.f32.mrf.mxu0
      %v3268 = vadd.f32 0.0, %v3267
      %v3269 = vpop.f32.mrf.mxu0
      %v3270 = vpop.f32.mrf.mxu0
      %v3271 = vadd.f32 0.0, %v3270
      %v3272 = vpop.f32.mrf.mxu0
      %3273 = vmatprep.mubr.bf16.mxu0 0
      %3274 = vmatmul.mubr.bf16.gmra.mxu0 %v3174
      %v3275 = vpop.f32.mrf.mxu0
      %v3276 = vadd.f32 0.0, %v3275
      %v3277 = vpop.f32.mrf.mxu0
      %v3278 = vpop.f32.mrf.mxu0
      %v3279 = vadd.f32 0.0, %v3278
      %v3280 = vpop.f32.mrf.mxu0
      %3281 = vmatprep.mubr.bf16.mxu0 0
      %3282 = vmatmul.mubr.bf16.gmra.mxu0 %v3177
      %v3283 = vpop.f32.mrf.mxu0
      %v3284 = vadd.f32 0.0, %v3283
      %v3285 = vpop.f32.mrf.mxu0
      %v3286 = vpop.f32.mrf.mxu0
      %v3287 = vadd.f32 0.0, %v3286
      %v3288 = vpop.f32.mrf.mxu0
      %3289 = vmatprep.mubr.bf16.mxu0 0
      %3290 = vmatmul.mubr.bf16.gmra.mxu0 %v3180
      %v3291 = vpop.f32.mrf.mxu0
      %v3292 = vadd.f32 0.0, %v3291
      %v3293 = vpop.f32.mrf.mxu0
      %v3294 = vpop.f32.mrf.mxu0
      %v3295 = vadd.f32 0.0, %v3294
      %v3296 = vpop.f32.mrf.mxu0
      %3297 = vmatprep.mubr.bf16.mxu0 0
      %3298 = vmatmul.mubr.bf16.gmra.mxu0 %v3183
      %v3299 = vpop.f32.mrf.mxu0
      %v3300 = vadd.f32 0.0, %v3299
      %v3301 = vpop.f32.mrf.mxu0
      %v3302 = vpop.f32.mrf.mxu0
      %v3303 = vadd.f32 0.0, %v3302
      %v3304 = vpop.f32.mrf.mxu0
      %3305 = vmatprep.mubr.bf16.mxu0 0
      %3306 = vmatmul.mubr.bf16.gmra.mxu0 %v3186
      %v3307 = vpop.f32.mrf.mxu0
      %v3308 = vadd.f32 0.0, %v3307
      %v3309 = vpop.f32.mrf.mxu0
      %v3310 = vpop.f32.mrf.mxu0
      %v3311 = vadd.f32 0.0, %v3310
      %v3312 = vpop.f32.mrf.mxu0
      %3313 = vmatprep.mubr.bf16.mxu0 0
      %3314 = vmatmul.mubr.bf16.gmra.mxu0 %v3189
      %v3315 = vpop.f32.mrf.mxu0
      %v3316 = vadd.f32 0.0, %v3315
      %v3317 = vpop.f32.mrf.mxu0
      %v3318 = vpop.f32.mrf.mxu0
      %v3319 = vadd.f32 0.0, %v3318
      %v3320 = vpop.f32.mrf.mxu0
      %3321 = vmatprep.mubr.bf16.mxu0 0
      %3322 = vmatmul.mubr.bf16.gmra.mxu0 %v3192
      %v3323 = vpop.f32.mrf.mxu0
      %v3324 = vadd.f32 0.0, %v3323
      %v3325 = vpop.f32.mrf.mxu0
      %v3326 = vpop.f32.mrf.mxu0
      %v3327 = vadd.f32 0.0, %v3326
      %v3328 = vpop.f32.mrf.mxu0
      %3329 = vmatprep.mubr.bf16.mxu0 0
      %3330 = vmatmul.mubr.bf16.gmra.mxu0 %v3195
      %v3331 = vpop.f32.mrf.mxu0
      %v3332 = vadd.f32 0.0, %v3331
      %v3333 = vpop.f32.mrf.mxu0
      %v3334 = vpop.f32.mrf.mxu0
      %v3335 = vadd.f32 0.0, %v3334
      %v3336 = vpop.f32.mrf.mxu0
      %3337 = vmatprep.mubr.bf16.mxu0 0
      %3338 = vmatmul.mubr.bf16.gmra.mxu0 %v3198
      %v3339 = vpop.f32.mrf.mxu0
      %v3340 = vadd.f32 0.0, %v3339
      %v3341 = vpop.f32.mrf.mxu0
      %v3342 = vpop.f32.mrf.mxu0
      %v3343 = vadd.f32 0.0, %v3342
      %v3344 = vpop.f32.mrf.mxu0
      %3345 = vmatprep.mubr.bf16.mxu0 0
      %3346 = vmatmul.mubr.bf16.gmra.mxu0 %v3201
      %v3347 = vpop.f32.mrf.mxu0
      %v3348 = vadd.f32 0.0, %v3347
      %v3349 = vpop.f32.mrf.mxu0
      %v3350 = vpop.f32.mrf.mxu0
      %v3351 = vadd.f32 0.0, %v3350
      %v3352 = vpop.f32.mrf.mxu0
      %3353 = vmatprep.mubr.bf16.mxu0 0
      %3354 = vmatmul.mubr.bf16.gmra.mxu0 %v3204
      %v3355 = vpop.f32.mrf.mxu0
      %v3356 = vadd.f32 0.0, %v3355
      %v3357 = vpop.f32.mrf.mxu0
      %v3358 = vpop.f32.mrf.mxu0
      %v3359 = vadd.f32 0.0, %v3358
      %v3360 = vpop.f32.mrf.mxu0
      %3361 = vmatprep.mubr.bf16.mxu0 0
      %3362 = vmatmul.mubr.bf16.gmra.mxu0 %v3207
      %v3363 = vpop.f32.mrf.mxu0
      %v3364 = vadd.f32 0.0, %v3363
      %v3365 = vpop.f32.mrf.mxu0
      %v3366 = vpop.f32.mrf.mxu0
      %v3367 = vadd.f32 0.0, %v3366
      %v3368 = vpop.f32.mrf.mxu0
      %3369 = vdwg.mxu0
      %v3370 = vadd.f32 %v2888, %v3244
      %v3371 = vadd.f32 %v2889, %v3247
      %v3372 = vadd.f32 %v2890, %v3252
      %v3373 = vadd.f32 %v2891, %v3255
      %v3374 = vadd.f32 %v2892, %v3260
      %v3375 = vadd.f32 %v2893, %v3263
      %v3376 = vadd.f32 %v2894, %v3268
      %v3377 = vadd.f32 %v2895, %v3271
      %v3378 = vadd.f32 %v2896, %v3276
      %v3379 = vadd.f32 %v2897, %v3279
      %v3380 = vadd.f32 %v2898, %v3284
      %v3381 = vadd.f32 %v2899, %v3287
      %v3382 = vadd.f32 %v2900, %v3292
      %v3383 = vadd.f32 %v2901, %v3295
      %v3384 = vadd.f32 %v2902, %v3300
      %v3385 = vadd.f32 %v2903, %v3303
      %v3386 = vadd.f32 %v2904, %v3308
      %v3387 = vadd.f32 %v2905, %v3311
      %v3388 = vadd.f32 %v2906, %v3316
      %v3389 = vadd.f32 %v2907, %v3319
      %v3390 = vadd.f32 %v2908, %v3324
      %v3391 = vadd.f32 %v2909, %v3327
      %v3392 = vadd.f32 %v2910, %v3332
      %v3393 = vadd.f32 %v2911, %v3335
      %v3394 = vadd.f32 %v2912, %v3340
      %v3395 = vadd.f32 %v2913, %v3343
      %v3396 = vadd.f32 %v2914, %v3348
      %v3397 = vadd.f32 %v2915, %v3351
      %v3398 = vadd.f32 %v2916, %v3356
      %v3399 = vadd.f32 %v2917, %v3359
      %v3400 = vadd.f32 %v2918, %v3364
      %v3401 = vadd.f32 %v2919, %v3367
      %s3402 = scalar_lea.vmem %s315, 24
      %v3403 = vld [vmem:[%s3402] sm:$0xf]
      %v3404 = vld [vmem:[%s3402 + $0x4] sm:$0xf]
      %v3405 = vld [vmem:[%s3402 + $0xc] sm:$0xf]
      %v3406 = vld [vmem:[%s3402 + $0x10] sm:$0xf]
      %v3407 = vld [vmem:[%s3402 + $0x18] sm:$0xf]
      %v3408 = vld [vmem:[%s3402 + $0x1c] sm:$0xf]
      %v3409 = vld [vmem:[%s3402 + $0x24] sm:$0xf]
      %v3410 = vld [vmem:[%s3402 + $0x28] sm:$0xf]
      %v3411 = vld [vmem:[%s3402 + $0x30] sm:$0xf]
      %v3412 = vld [vmem:[%s3402 + $0x34] sm:$0xf]
      %v3413 = vld [vmem:[%s3402 + $0x3c] sm:$0xf]
      %v3414 = vld [vmem:[%s3402 + $0x40] sm:$0xf]
      %v3415 = vld [vmem:[%s3402 + $0x48] sm:$0xf]
      %v3416 = vld [vmem:[%s3402 + $0x4c] sm:$0xf]
      %v3417 = vld [vmem:[%s3402 + $0x54] sm:$0xf]
      %v3418 = vld [vmem:[%s3402 + $0x58] sm:$0xf]
      %v3419 = vld [vmem:[%s3402 + $0x60] sm:$0xf]
      %v3420 = vld [vmem:[%s3402 + $0x64] sm:$0xf]
      %v3421 = vld [vmem:[%s3402 + $0x6c] sm:$0xf]
      %v3422 = vld [vmem:[%s3402 + $0x70] sm:$0xf]
      %v3423 = vld [vmem:[%s3402 + $0x78] sm:$0xf]
      %v3424 = vld [vmem:[%s3402 + $0x7c] sm:$0xf]
      %v3425 = vld [vmem:[%s3402 + $0x84] sm:$0xf]
      %v3426 = vld [vmem:[%s3402 + $0x88] sm:$0xf]
      %v3427 = vld [vmem:[%s3402 + $0x90] sm:$0xf]
      %v3428 = vld [vmem:[%s3402 + $0x94] sm:$0xf]
      %v3429 = vld [vmem:[%s3402 + $0x9c] sm:$0xf]
      %v3430 = vld [vmem:[%s3402 + $0xa0] sm:$0xf]
      %v3431 = vld [vmem:[%s3402 + $0xa8] sm:$0xf]
      %v3432 = vld [vmem:[%s3402 + $0xac] sm:$0xf]
      %v3433 = vld [vmem:[%s3402 + $0xb4] sm:$0xf]
      %v3434 = vld [vmem:[%s3402 + $0xb8] sm:$0xf]
      %s3435 = scalar_lea.vmem %s2, 96
      %v3436 = vld [vmem:[%s3435] sm:$0xf]
      %v3437 = vld [vmem:[%s3435 + $0x4] sm:$0xf]
      %v3438 = vld [vmem:[%s3435 + $0x8] sm:$0xf]
      %v3439 = vld [vmem:[%s3435 + $0xc] sm:$0xf]
      %v3472 = vunpack.c.l.b16 %v3403
      %v3473 = vunpack.c.l.b16 %v3404
      %v3474 = vunpack.c.l.b16 %v3405
      %v3475 = vunpack.c.l.b16 %v3406
      %v3476 = vunpack.c.l.b16 %v3407
      %v3477 = vunpack.c.l.b16 %v3408
      %v3478 = vunpack.c.l.b16 %v3409
      %v3479 = vunpack.c.l.b16 %v3410
      %v3480 = vunpack.c.l.b16 %v3411
      %v3481 = vunpack.c.l.b16 %v3412
      %v3482 = vunpack.c.l.b16 %v3413
      %v3483 = vunpack.c.l.b16 %v3414
      %v3484 = vunpack.c.l.b16 %v3415
      %v3485 = vunpack.c.l.b16 %v3416
      %v3486 = vunpack.c.l.b16 %v3417
      %v3487 = vunpack.c.l.b16 %v3418
      %v3488 = vunpack.c.l.b16 %v3419
      %v3489 = vunpack.c.l.b16 %v3420
      %v3490 = vunpack.c.l.b16 %v3421
      %v3491 = vunpack.c.l.b16 %v3422
      %v3492 = vunpack.c.l.b16 %v3423
      %v3493 = vunpack.c.l.b16 %v3424
      %v3494 = vunpack.c.l.b16 %v3425
      %v3495 = vunpack.c.l.b16 %v3426
      %v3496 = vunpack.c.l.b16 %v3427
      %v3497 = vunpack.c.l.b16 %v3428
      %v3498 = vunpack.c.l.b16 %v3429
      %v3499 = vunpack.c.l.b16 %v3430
      %v3500 = vunpack.c.l.b16 %v3431
      %v3501 = vunpack.c.l.b16 %v3432
      %v3502 = vunpack.c.l.b16 %v3433
      %v3503 = vunpack.c.l.b16 %v3434
      %v3504 = vpack.c.b16 %v3473, %v3472
      %v3505 = vpack.c.b16 %v3475, %v3474
      %v3506 = vpack.c.b16 %v3477, %v3476
      %v3507 = vpack.c.b16 %v3479, %v3478
      %v3508 = vpack.c.b16 %v3481, %v3480
      %v3509 = vpack.c.b16 %v3483, %v3482
      %v3510 = vpack.c.b16 %v3485, %v3484
      %v3511 = vpack.c.b16 %v3487, %v3486
      %v3512 = vpack.c.b16 %v3489, %v3488
      %v3513 = vpack.c.b16 %v3491, %v3490
      %v3514 = vpack.c.b16 %v3493, %v3492
      %v3515 = vpack.c.b16 %v3495, %v3494
      %v3516 = vpack.c.b16 %v3497, %v3496
      %v3517 = vpack.c.b16 %v3499, %v3498
      %v3518 = vpack.c.b16 %v3501, %v3500
      %v3519 = vpack.c.b16 %v3503, %v3502
      %v3524 = vunpack.c.l.b16 %v3436
      %v3525 = vunpack.c.l.b16 %v3437
      %v3526 = vunpack.c.l.b16 %v3438
      %v3527 = vunpack.c.l.b16 %v3439
      %v3528 = vpack.c.b16 %v3525, %v3524
      %v3529 = vpack.c.b16 %v3527, %v3526
      %v3533 = vsel %vm831, %v3504, 0
      %v3536 = vsel %vm831, %v3505, 0
      %v3539 = vsel %vm831, %v3506, 0
      %v3542 = vsel %vm831, %v3507, 0
      %v3545 = vsel %vm831, %v3508, 0
      %v3548 = vsel %vm831, %v3509, 0
      %v3551 = vsel %vm831, %v3510, 0
      %v3554 = vsel %vm831, %v3511, 0
      %v3557 = vsel %vm831, %v3512, 0
      %v3560 = vsel %vm831, %v3513, 0
      %v3563 = vsel %vm831, %v3514, 0
      %v3566 = vsel %vm831, %v3515, 0
      %v3569 = vsel %vm831, %v3516, 0
      %v3572 = vsel %vm831, %v3517, 0
      %v3575 = vsel %vm831, %v3518, 0
      %v3578 = vsel %vm831, %v3519, 0
      %3580 = vmatprep.subr.bf16.mxu0 0
      %3581 = vmatpush1.bf16.msra.mxu0 0
      %3582 = vmatprep.subr.bf16.mxu0 0
      %3583 = vmatpush1.bf16.msra.mxu0 0
      %3584 = vmatprep.subr.bf16.mxu0 0
      %3585 = vmatpush1.bf16.msra.mxu0 0
      %3586 = vmatprep.subr.bf16.mxu0 0
      %3587 = vmatpush1.bf16.msra.mxu0 0
      %3588 = vmatprep.subr.bf16.mxu0 0
      %3589 = vmatpush1.bf16.msra.mxu0 0
      %3590 = vmatprep.subr.bf16.mxu0 0
      %3591 = vmatpush1.bf16.msra.mxu0 0
      %3592 = vmatprep.subr.bf16.mxu0 0
      %3593 = vmatpush1.bf16.msra.mxu0 %v3529
      %3594 = vmatprep.subr.bf16.mxu0 0
      %3595 = vmatpush1.bf16.msra.mxu0 %v3528
      %3596 = vmatprep.subr.bf16.mxu0 0
      %3597 = vmatpush2.bf16.msra.mxu0 0
      %3598 = vmatprep.subr.bf16.mxu0 0
      %3599 = vmatpush2.bf16.msra.mxu0 0
      %3600 = vmatprep.subr.bf16.mxu0 0
      %3601 = vmatpush2.bf16.msra.mxu0 0
      %3602 = vmatprep.subr.bf16.mxu0 0
      %3603 = vmatpush2.bf16.msra.mxu0 0
      %3604 = vmatprep.subr.bf16.mxu0 0
      %3605 = vmatpush2.bf16.msra.mxu0 0
      %3606 = vmatprep.subr.bf16.mxu0 0
      %3607 = vmatpush2.bf16.msra.mxu0 0
      %3608 = vmatprep.subr.bf16.mxu0 0
      %3609 = vmatpush2.bf16.msra.mxu0 0
      %3610 = vmatprep.subr.bf16.mxu0 0
      %3611 = vmatpush2.bf16.msra.mxu0 0
      %3612 = vmatprep.mubr.bf16.mxu0 0
      %3613 = vmatmul.mubr.bf16.gmra.mxu0 %v3533
      %v3614 = vpop.f32.mrf.mxu0
      %v3615 = vadd.f32 0.0, %v3614
      %v3616 = vpop.f32.mrf.mxu0
      %v3617 = vpop.f32.mrf.mxu0
      %v3618 = vadd.f32 0.0, %v3617
      %v3619 = vpop.f32.mrf.mxu0
      %3620 = vmatprep.mubr.bf16.mxu0 0
      %3621 = vmatmul.mubr.bf16.gmra.mxu0 %v3536
      %v3622 = vpop.f32.mrf.mxu0
      %v3623 = vadd.f32 0.0, %v3622
      %v3624 = vpop.f32.mrf.mxu0
      %v3625 = vpop.f32.mrf.mxu0
      %v3626 = vadd.f32 0.0, %v3625
      %v3627 = vpop.f32.mrf.mxu0
      %3628 = vmatprep.mubr.bf16.mxu0 0
      %3629 = vmatmul.mubr.bf16.gmra.mxu0 %v3539
      %v3630 = vpop.f32.mrf.mxu0
      %v3631 = vadd.f32 0.0, %v3630
      %v3632 = vpop.f32.mrf.mxu0
      %v3633 = vpop.f32.mrf.mxu0
      %v3634 = vadd.f32 0.0, %v3633
      %v3635 = vpop.f32.mrf.mxu0
      %3636 = vmatprep.mubr.bf16.mxu0 0
      %3637 = vmatmul.mubr.bf16.gmra.mxu0 %v3542
      %v3638 = vpop.f32.mrf.mxu0
      %v3639 = vadd.f32 0.0, %v3638
      %v3640 = vpop.f32.mrf.mxu0
      %v3641 = vpop.f32.mrf.mxu0
      %v3642 = vadd.f32 0.0, %v3641
      %v3643 = vpop.f32.mrf.mxu0
      %3644 = vmatprep.mubr.bf16.mxu0 0
      %3645 = vmatmul.mubr.bf16.gmra.mxu0 %v3545
      %v3646 = vpop.f32.mrf.mxu0
      %v3647 = vadd.f32 0.0, %v3646
      %v3648 = vpop.f32.mrf.mxu0
      %v3649 = vpop.f32.mrf.mxu0
      %v3650 = vadd.f32 0.0, %v3649
      %v3651 = vpop.f32.mrf.mxu0
      %3652 = vmatprep.mubr.bf16.mxu0 0
      %3653 = vmatmul.mubr.bf16.gmra.mxu0 %v3548
      %v3654 = vpop.f32.mrf.mxu0
      %v3655 = vadd.f32 0.0, %v3654
      %v3656 = vpop.f32.mrf.mxu0
      %v3657 = vpop.f32.mrf.mxu0
      %v3658 = vadd.f32 0.0, %v3657
      %v3659 = vpop.f32.mrf.mxu0
      %3660 = vmatprep.mubr.bf16.mxu0 0
      %3661 = vmatmul.mubr.bf16.gmra.mxu0 %v3551
      %v3662 = vpop.f32.mrf.mxu0
      %v3663 = vadd.f32 0.0, %v3662
      %v3664 = vpop.f32.mrf.mxu0
      %v3665 = vpop.f32.mrf.mxu0
      %v3666 = vadd.f32 0.0, %v3665
      %v3667 = vpop.f32.mrf.mxu0
      %3668 = vmatprep.mubr.bf16.mxu0 0
      %3669 = vmatmul.mubr.bf16.gmra.mxu0 %v3554
      %v3670 = vpop.f32.mrf.mxu0
      %v3671 = vadd.f32 0.0, %v3670
      %v3672 = vpop.f32.mrf.mxu0
      %v3673 = vpop.f32.mrf.mxu0
      %v3674 = vadd.f32 0.0, %v3673
      %v3675 = vpop.f32.mrf.mxu0
      %3676 = vmatprep.mubr.bf16.mxu0 0
      %3677 = vmatmul.mubr.bf16.gmra.mxu0 %v3557
      %v3678 = vpop.f32.mrf.mxu0
      %v3679 = vadd.f32 0.0, %v3678
      %v3680 = vpop.f32.mrf.mxu0
      %v3681 = vpop.f32.mrf.mxu0
      %v3682 = vadd.f32 0.0, %v3681
      %v3683 = vpop.f32.mrf.mxu0
      %3684 = vmatprep.mubr.bf16.mxu0 0
      %3685 = vmatmul.mubr.bf16.gmra.mxu0 %v3560
      %v3686 = vpop.f32.mrf.mxu0
      %v3687 = vadd.f32 0.0, %v3686
      %v3688 = vpop.f32.mrf.mxu0
      %v3689 = vpop.f32.mrf.mxu0
      %v3690 = vadd.f32 0.0, %v3689
      %v3691 = vpop.f32.mrf.mxu0
      %3692 = vmatprep.mubr.bf16.mxu0 0
      %3693 = vmatmul.mubr.bf16.gmra.mxu0 %v3563
      %v3694 = vpop.f32.mrf.mxu0
      %v3695 = vadd.f32 0.0, %v3694
      %v3696 = vpop.f32.mrf.mxu0
      %v3697 = vpop.f32.mrf.mxu0
      %v3698 = vadd.f32 0.0, %v3697
      %v3699 = vpop.f32.mrf.mxu0
      %3700 = vmatprep.mubr.bf16.mxu0 0
      %3701 = vmatmul.mubr.bf16.gmra.mxu0 %v3566
      %v3702 = vpop.f32.mrf.mxu0
      %v3703 = vadd.f32 0.0, %v3702
      %v3704 = vpop.f32.mrf.mxu0
      %v3705 = vpop.f32.mrf.mxu0
      %v3706 = vadd.f32 0.0, %v3705
      %v3707 = vpop.f32.mrf.mxu0
      %3708 = vmatprep.mubr.bf16.mxu0 0
      %3709 = vmatmul.mubr.bf16.gmra.mxu0 %v3569
      %v3710 = vpop.f32.mrf.mxu0
      %v3711 = vadd.f32 0.0, %v3710
      %v3712 = vpop.f32.mrf.mxu0
      %v3713 = vpop.f32.mrf.mxu0
      %v3714 = vadd.f32 0.0, %v3713
      %v3715 = vpop.f32.mrf.mxu0
      %3716 = vmatprep.mubr.bf16.mxu0 0
      %3717 = vmatmul.mubr.bf16.gmra.mxu0 %v3572
      %v3718 = vpop.f32.mrf.mxu0
      %v3719 = vadd.f32 0.0, %v3718
      %v3720 = vpop.f32.mrf.mxu0
      %v3721 = vpop.f32.mrf.mxu0
      %v3722 = vadd.f32 0.0, %v3721
      %v3723 = vpop.f32.mrf.mxu0
      %3724 = vmatprep.mubr.bf16.mxu0 0
      %3725 = vmatmul.mubr.bf16.gmra.mxu0 %v3575
      %v3726 = vpop.f32.mrf.mxu0
      %v3727 = vadd.f32 0.0, %v3726
      %v3728 = vpop.f32.mrf.mxu0
      %v3729 = vpop.f32.mrf.mxu0
      %v3730 = vadd.f32 0.0, %v3729
      %v3731 = vpop.f32.mrf.mxu0
      %3732 = vmatprep.mubr.bf16.mxu0 0
      %3733 = vmatmul.mubr.bf16.gmra.mxu0 %v3578
      %v3734 = vpop.f32.mrf.mxu0
      %v3735 = vadd.f32 0.0, %v3734
      %v3736 = vpop.f32.mrf.mxu0
      %v3737 = vpop.f32.mrf.mxu0
      %v3738 = vadd.f32 0.0, %v3737
      %v3739 = vpop.f32.mrf.mxu0
      %3740 = vdwg.mxu0
      %v3741 = vadd.f32 %v3370, %v3615
      %v3742 = vadd.f32 %v3371, %v3618
      %v3743 = vadd.f32 %v3372, %v3623
      %v3744 = vadd.f32 %v3373, %v3626
      %v3745 = vadd.f32 %v3374, %v3631
      %v3746 = vadd.f32 %v3375, %v3634
      %v3747 = vadd.f32 %v3376, %v3639
      %v3748 = vadd.f32 %v3377, %v3642
      %v3749 = vadd.f32 %v3378, %v3647
      %v3750 = vadd.f32 %v3379, %v3650
      %v3751 = vadd.f32 %v3380, %v3655
      %v3752 = vadd.f32 %v3381, %v3658
      %v3753 = vadd.f32 %v3382, %v3663
      %v3754 = vadd.f32 %v3383, %v3666
      %v3755 = vadd.f32 %v3384, %v3671
      %v3756 = vadd.f32 %v3385, %v3674
      %v3757 = vadd.f32 %v3386, %v3679
      %v3758 = vadd.f32 %v3387, %v3682
      %v3759 = vadd.f32 %v3388, %v3687
      %v3760 = vadd.f32 %v3389, %v3690
      %v3761 = vadd.f32 %v3390, %v3695
      %v3762 = vadd.f32 %v3391, %v3698
      %v3763 = vadd.f32 %v3392, %v3703
      %v3764 = vadd.f32 %v3393, %v3706
      %v3765 = vadd.f32 %v3394, %v3711
      %v3766 = vadd.f32 %v3395, %v3714
      %v3767 = vadd.f32 %v3396, %v3719
      %v3768 = vadd.f32 %v3397, %v3722
      %v3769 = vadd.f32 %v3398, %v3727
      %v3770 = vadd.f32 %v3399, %v3730
      %v3771 = vadd.f32 %v3400, %v3735
      %v3772 = vadd.f32 %v3401, %v3738
      %v3773 = vld [vmem:[%s3402] sm:$0xf]
      %v3774 = vld [vmem:[%s3402 + $0x4] sm:$0xf]
      %v3775 = vld [vmem:[%s3402 + $0x8] sm:$0x1]
      %v3776 = vld [vmem:[%s3402 + $0xc] sm:$0xf]
      %v3777 = vld [vmem:[%s3402 + $0x10] sm:$0xf]
      %v3778 = vld [vmem:[%s3402 + $0x14] sm:$0x1]
      %v3779 = vld [vmem:[%s3402 + $0x18] sm:$0xf]
      %v3780 = vld [vmem:[%s3402 + $0x1c] sm:$0xf]
      %v3781 = vld [vmem:[%s3402 + $0x20] sm:$0x1]
      %v3782 = vld [vmem:[%s3402 + $0x24] sm:$0xf]
      %v3783 = vld [vmem:[%s3402 + $0x28] sm:$0xf]
      %v3784 = vld [vmem:[%s3402 + $0x2c] sm:$0x1]
      %v3785 = vld [vmem:[%s3402 + $0x30] sm:$0xf]
      %v3786 = vld [vmem:[%s3402 + $0x34] sm:$0xf]
      %v3787 = vld [vmem:[%s3402 + $0x38] sm:$0x1]
      %v3788 = vld [vmem:[%s3402 + $0x3c] sm:$0xf]
      %v3789 = vld [vmem:[%s3402 + $0x40] sm:$0xf]
      %v3790 = vld [vmem:[%s3402 + $0x44] sm:$0x1]
      %v3791 = vld [vmem:[%s3402 + $0x48] sm:$0xf]
      %v3792 = vld [vmem:[%s3402 + $0x4c] sm:$0xf]
      %v3793 = vld [vmem:[%s3402 + $0x50] sm:$0x1]
      %v3794 = vld [vmem:[%s3402 + $0x54] sm:$0xf]
      %v3795 = vld [vmem:[%s3402 + $0x58] sm:$0xf]
      %v3796 = vld [vmem:[%s3402 + $0x5c] sm:$0x1]
      %v3797 = vld [vmem:[%s3402 + $0x60] sm:$0xf]
      %v3798 = vld [vmem:[%s3402 + $0x64] sm:$0xf]
      %v3799 = vld [vmem:[%s3402 + $0x68] sm:$0x1]
      %v3800 = vld [vmem:[%s3402 + $0x6c] sm:$0xf]
      %v3801 = vld [vmem:[%s3402 + $0x70] sm:$0xf]
      %v3802 = vld [vmem:[%s3402 + $0x74] sm:$0x1]
      %v3803 = vld [vmem:[%s3402 + $0x78] sm:$0xf]
      %v3804 = vld [vmem:[%s3402 + $0x7c] sm:$0xf]
      %v3805 = vld [vmem:[%s3402 + $0x80] sm:$0x1]
      %v3806 = vld [vmem:[%s3402 + $0x84] sm:$0xf]
      %v3807 = vld [vmem:[%s3402 + $0x88] sm:$0xf]
      %v3808 = vld [vmem:[%s3402 + $0x8c] sm:$0x1]
      %v3809 = vld [vmem:[%s3402 + $0x90] sm:$0xf]
      %v3810 = vld [vmem:[%s3402 + $0x94] sm:$0xf]
      %v3811 = vld [vmem:[%s3402 + $0x98] sm:$0x1]
      %v3812 = vld [vmem:[%s3402 + $0x9c] sm:$0xf]
      %v3813 = vld [vmem:[%s3402 + $0xa0] sm:$0xf]
      %v3814 = vld [vmem:[%s3402 + $0xa4] sm:$0x1]
      %v3815 = vld [vmem:[%s3402 + $0xa8] sm:$0xf]
      %v3816 = vld [vmem:[%s3402 + $0xac] sm:$0xf]
      %v3817 = vld [vmem:[%s3402 + $0xb0] sm:$0x1]
      %v3818 = vld [vmem:[%s3402 + $0xb4] sm:$0xf]
      %v3819 = vld [vmem:[%s3402 + $0xb8] sm:$0xf]
      %v3820 = vld [vmem:[%s3402 + $0xbc] sm:$0x1]
      %v3822 = vshrl.u32 %v3773, 16
      %v3824 = vrot.slane %v3822, 4
      %v3825 = vshll.u32 %v3773, 16
      %v3827 = vrot.slane %v3825, 5
      %v3828 = vor.u32 %v3824, %v3827
      %v3829 = vrot.slane %v3828, 4
      %v3831 = vshll.u32 %v3774, 16
      %v3833 = vrot.slane %v3831, 5
      %v3834 = vsel %vm381, %v3829, %v3833
      %v3835 = vshrl.u32 %v3774, 16
      %v3837 = vrot.slane %v3835, 4
      %v3838 = vor.u32 %v3837, %v3833
      %v3839 = vrot.slane %v3838, 4
      %v3841 = vshll.u32 %v3775, 16
      %v3843 = vrot.slane %v3841, 5
      %v3844 = vsel %vm381, %v3839, %v3843
      %v3846 = vshrl.u32 %v3776, 16
      %v3848 = vrot.slane %v3846, 4
      %v3849 = vshll.u32 %v3776, 16
      %v3851 = vrot.slane %v3849, 5
      %v3852 = vor.u32 %v3848, %v3851
      %v3853 = vrot.slane %v3852, 4
      %v3855 = vshll.u32 %v3777, 16
      %v3857 = vrot.slane %v3855, 5
      %v3858 = vsel %vm381, %v3853, %v3857
      %v3859 = vshrl.u32 %v3777, 16
      %v3861 = vrot.slane %v3859, 4
      %v3862 = vor.u32 %v3861, %v3857
      %v3863 = vrot.slane %v3862, 4
      %v3865 = vshll.u32 %v3778, 16
      %v3867 = vrot.slane %v3865, 5
      %v3868 = vsel %vm381, %v3863, %v3867
      %v3870 = vshrl.u32 %v3779, 16
      %v3872 = vrot.slane %v3870, 4
      %v3873 = vshll.u32 %v3779, 16
      %v3875 = vrot.slane %v3873, 5
      %v3876 = vor.u32 %v3872, %v3875
      %v3877 = vrot.slane %v3876, 4
      %v3879 = vshll.u32 %v3780, 16
      %v3881 = vrot.slane %v3879, 5
      %v3882 = vsel %vm381, %v3877, %v3881
      %v3883 = vshrl.u32 %v3780, 16
      %v3885 = vrot.slane %v3883, 4
      %v3886 = vor.u32 %v3885, %v3881
      %v3887 = vrot.slane %v3886, 4
      %v3889 = vshll.u32 %v3781, 16
      %v3891 = vrot.slane %v3889, 5
      %v3892 = vsel %vm381, %v3887, %v3891
      %v3894 = vshrl.u32 %v3782, 16
      %v3896 = vrot.slane %v3894, 4
      %v3897 = vshll.u32 %v3782, 16
      %v3899 = vrot.slane %v3897, 5
      %v3900 = vor.u32 %v3896, %v3899
      %v3901 = vrot.slane %v3900, 4
      %v3903 = vshll.u32 %v3783, 16
      %v3905 = vrot.slane %v3903, 5
      %v3906 = vsel %vm381, %v3901, %v3905
      %v3907 = vshrl.u32 %v3783, 16
      %v3909 = vrot.slane %v3907, 4
      %v3910 = vor.u32 %v3909, %v3905
      %v3911 = vrot.slane %v3910, 4
      %v3913 = vshll.u32 %v3784, 16
      %v3915 = vrot.slane %v3913, 5
      %v3916 = vsel %vm381, %v3911, %v3915
      %v3918 = vshrl.u32 %v3785, 16
      %v3920 = vrot.slane %v3918, 4
      %v3921 = vshll.u32 %v3785, 16
      %v3923 = vrot.slane %v3921, 5
      %v3924 = vor.u32 %v3920, %v3923
      %v3925 = vrot.slane %v3924, 4
      %v3927 = vshll.u32 %v3786, 16
      %v3929 = vrot.slane %v3927, 5
      %v3930 = vsel %vm381, %v3925, %v3929
      %v3931 = vshrl.u32 %v3786, 16
      %v3933 = vrot.slane %v3931, 4
      %v3934 = vor.u32 %v3933, %v3929
      %v3935 = vrot.slane %v3934, 4
      %v3937 = vshll.u32 %v3787, 16
      %v3939 = vrot.slane %v3937, 5
      %v3940 = vsel %vm381, %v3935, %v3939
      %v3942 = vshrl.u32 %v3788, 16
      %v3944 = vrot.slane %v3942, 4
      %v3945 = vshll.u32 %v3788, 16
      %v3947 = vrot.slane %v3945, 5
      %v3948 = vor.u32 %v3944, %v3947
      %v3949 = vrot.slane %v3948, 4
      %v3951 = vshll.u32 %v3789, 16
      %v3953 = vrot.slane %v3951, 5
      %v3954 = vsel %vm381, %v3949, %v3953
      %v3955 = vshrl.u32 %v3789, 16
      %v3957 = vrot.slane %v3955, 4
      %v3958 = vor.u32 %v3957, %v3953
      %v3959 = vrot.slane %v3958, 4
      %v3961 = vshll.u32 %v3790, 16
      %v3963 = vrot.slane %v3961, 5
      %v3964 = vsel %vm381, %v3959, %v3963
      %v3966 = vshrl.u32 %v3791, 16
      %v3968 = vrot.slane %v3966, 4
      %v3969 = vshll.u32 %v3791, 16
      %v3971 = vrot.slane %v3969, 5
      %v3972 = vor.u32 %v3968, %v3971
      %v3973 = vrot.slane %v3972, 4
      %v3975 = vshll.u32 %v3792, 16
      %v3977 = vrot.slane %v3975, 5
      %v3978 = vsel %vm381, %v3973, %v3977
      %v3979 = vshrl.u32 %v3792, 16
      %v3981 = vrot.slane %v3979, 4
      %v3982 = vor.u32 %v3981, %v3977
      %v3983 = vrot.slane %v3982, 4
      %v3985 = vshll.u32 %v3793, 16
      %v3987 = vrot.slane %v3985, 5
      %v3988 = vsel %vm381, %v3983, %v3987
      %v3990 = vshrl.u32 %v3794, 16
      %v3992 = vrot.slane %v3990, 4
      %v3993 = vshll.u32 %v3794, 16
      %v3995 = vrot.slane %v3993, 5
      %v3996 = vor.u32 %v3992, %v3995
      %v3997 = vrot.slane %v3996, 4
      %v3999 = vshll.u32 %v3795, 16
      %v4001 = vrot.slane %v3999, 5
      %v4002 = vsel %vm381, %v3997, %v4001
      %v4003 = vshrl.u32 %v3795, 16
      %v4005 = vrot.slane %v4003, 4
      %v4006 = vor.u32 %v4005, %v4001
      %v4007 = vrot.slane %v4006, 4
      %v4009 = vshll.u32 %v3796, 16
      %v4011 = vrot.slane %v4009, 5
      %v4012 = vsel %vm381, %v4007, %v4011
      %v4014 = vshrl.u32 %v3797, 16
      %v4016 = vrot.slane %v4014, 4
      %v4017 = vshll.u32 %v3797, 16
      %v4019 = vrot.slane %v4017, 5
      %v4020 = vor.u32 %v4016, %v4019
      %v4021 = vrot.slane %v4020, 4
      %v4023 = vshll.u32 %v3798, 16
      %v4025 = vrot.slane %v4023, 5
      %v4026 = vsel %vm381, %v4021, %v4025
      %v4027 = vshrl.u32 %v3798, 16
      %v4029 = vrot.slane %v4027, 4
      %v4030 = vor.u32 %v4029, %v4025
      %v4031 = vrot.slane %v4030, 4
      %v4033 = vshll.u32 %v3799, 16
      %v4035 = vrot.slane %v4033, 5
      %v4036 = vsel %vm381, %v4031, %v4035
      %v4038 = vshrl.u32 %v3800, 16
      %v4040 = vrot.slane %v4038, 4
      %v4041 = vshll.u32 %v3800, 16
      %v4043 = vrot.slane %v4041, 5
      %v4044 = vor.u32 %v4040, %v4043
      %v4045 = vrot.slane %v4044, 4
      %v4047 = vshll.u32 %v3801, 16
      %v4049 = vrot.slane %v4047, 5
      %v4050 = vsel %vm381, %v4045, %v4049
      %v4051 = vshrl.u32 %v3801, 16
      %v4053 = vrot.slane %v4051, 4
      %v4054 = vor.u32 %v4053, %v4049
      %v4055 = vrot.slane %v4054, 4
      %v4057 = vshll.u32 %v3802, 16
      %v4059 = vrot.slane %v4057, 5
      %v4060 = vsel %vm381, %v4055, %v4059
      %v4062 = vshrl.u32 %v3803, 16
      %v4064 = vrot.slane %v4062, 4
      %v4065 = vshll.u32 %v3803, 16
      %v4067 = vrot.slane %v4065, 5
      %v4068 = vor.u32 %v4064, %v4067
      %v4069 = vrot.slane %v4068, 4
      %v4071 = vshll.u32 %v3804, 16
      %v4073 = vrot.slane %v4071, 5
      %v4074 = vsel %vm381, %v4069, %v4073
      %v4075 = vshrl.u32 %v3804, 16
      %v4077 = vrot.slane %v4075, 4
      %v4078 = vor.u32 %v4077, %v4073
      %v4079 = vrot.slane %v4078, 4
      %v4081 = vshll.u32 %v3805, 16
      %v4083 = vrot.slane %v4081, 5
      %v4084 = vsel %vm381, %v4079, %v4083
      %v4086 = vshrl.u32 %v3806, 16
      %v4088 = vrot.slane %v4086, 4
      %v4089 = vshll.u32 %v3806, 16
      %v4091 = vrot.slane %v4089, 5
      %v4092 = vor.u32 %v4088, %v4091
      %v4093 = vrot.slane %v4092, 4
      %v4095 = vshll.u32 %v3807, 16
      %v4097 = vrot.slane %v4095, 5
      %v4098 = vsel %vm381, %v4093, %v4097
      %v4099 = vshrl.u32 %v3807, 16
      %v4101 = vrot.slane %v4099, 4
      %v4102 = vor.u32 %v4101, %v4097
      %v4103 = vrot.slane %v4102, 4
      %v4105 = vshll.u32 %v3808, 16
      %v4107 = vrot.slane %v4105, 5
      %v4108 = vsel %vm381, %v4103, %v4107
      %v4110 = vshrl.u32 %v3809, 16
      %v4112 = vrot.slane %v4110, 4
      %v4113 = vshll.u32 %v3809, 16
      %v4115 = vrot.slane %v4113, 5
      %v4116 = vor.u32 %v4112, %v4115
      %v4117 = vrot.slane %v4116, 4
      %v4119 = vshll.u32 %v3810, 16
      %v4121 = vrot.slane %v4119, 5
      %v4122 = vsel %vm381, %v4117, %v4121
      %v4123 = vshrl.u32 %v3810, 16
      %v4125 = vrot.slane %v4123, 4
      %v4126 = vor.u32 %v4125, %v4121
      %v4127 = vrot.slane %v4126, 4
      %v4129 = vshll.u32 %v3811, 16
      %v4131 = vrot.slane %v4129, 5
      %v4132 = vsel %vm381, %v4127, %v4131
      %v4134 = vshrl.u32 %v3812, 16
      %v4136 = vrot.slane %v4134, 4
      %v4137 = vshll.u32 %v3812, 16
      %v4139 = vrot.slane %v4137, 5
      %v4140 = vor.u32 %v4136, %v4139
      %v4141 = vrot.slane %v4140, 4
      %v4143 = vshll.u32 %v3813, 16
      %v4145 = vrot.slane %v4143, 5
      %v4146 = vsel %vm381, %v4141, %v4145
      %v4147 = vshrl.u32 %v3813, 16
      %v4149 = vrot.slane %v4147, 4
      %v4150 = vor.u32 %v4149, %v4145
      %v4151 = vrot.slane %v4150, 4
      %v4153 = vshll.u32 %v3814, 16
      %v4155 = vrot.slane %v4153, 5
      %v4156 = vsel %vm381, %v4151, %v4155
      %v4158 = vshrl.u32 %v3815, 16
      %v4160 = vrot.slane %v4158, 4
      %v4161 = vshll.u32 %v3815, 16
      %v4163 = vrot.slane %v4161, 5
      %v4164 = vor.u32 %v4160, %v4163
      %v4165 = vrot.slane %v4164, 4
      %v4167 = vshll.u32 %v3816, 16
      %v4169 = vrot.slane %v4167, 5
      %v4170 = vsel %vm381, %v4165, %v4169
      %v4171 = vshrl.u32 %v3816, 16
      %v4173 = vrot.slane %v4171, 4
      %v4174 = vor.u32 %v4173, %v4169
      %v4175 = vrot.slane %v4174, 4
      %v4177 = vshll.u32 %v3817, 16
      %v4179 = vrot.slane %v4177, 5
      %v4180 = vsel %vm381, %v4175, %v4179
      %v4182 = vshrl.u32 %v3818, 16
      %v4184 = vrot.slane %v4182, 4
      %v4185 = vshll.u32 %v3818, 16
      %v4187 = vrot.slane %v4185, 5
      %v4188 = vor.u32 %v4184, %v4187
      %v4189 = vrot.slane %v4188, 4
      %v4191 = vshll.u32 %v3819, 16
      %v4193 = vrot.slane %v4191, 5
      %v4194 = vsel %vm381, %v4189, %v4193
      %v4195 = vshrl.u32 %v3819, 16
      %v4197 = vrot.slane %v4195, 4
      %v4198 = vor.u32 %v4197, %v4193
      %v4199 = vrot.slane %v4198, 4
      %v4201 = vshll.u32 %v3820, 16
      %v4203 = vrot.slane %v4201, 5
      %v4204 = vsel %vm381, %v4199, %v4203
      %s4205 = scalar_lea.vmem %s2, 112
      %v4206 = vld [vmem:[%s4205] sm:$0xf]
      %v4207 = vld [vmem:[%s4205 + $0x4] sm:$0xf]
      %v4208 = vld [vmem:[%s4205 + $0x8] sm:$0xf]
      %v4209 = vld [vmem:[%s4205 + $0xc] sm:$0xf]
      %v4210 = vunpack.c.l.b16 %v3834
      %v4211 = vunpack.c.l.b16 %v3844
      %v4212 = vunpack.c.l.b16 %v3858
      %v4213 = vunpack.c.l.b16 %v3868
      %v4214 = vunpack.c.l.b16 %v3882
      %v4215 = vunpack.c.l.b16 %v3892
      %v4216 = vunpack.c.l.b16 %v3906
      %v4217 = vunpack.c.l.b16 %v3916
      %v4218 = vunpack.c.l.b16 %v3930
      %v4219 = vunpack.c.l.b16 %v3940
      %v4220 = vunpack.c.l.b16 %v3954
      %v4221 = vunpack.c.l.b16 %v3964
      %v4222 = vunpack.c.l.b16 %v3978
      %v4223 = vunpack.c.l.b16 %v3988
      %v4224 = vunpack.c.l.b16 %v4002
      %v4225 = vunpack.c.l.b16 %v4012
      %v4226 = vunpack.c.l.b16 %v4026
      %v4227 = vunpack.c.l.b16 %v4036
      %v4228 = vunpack.c.l.b16 %v4050
      %v4229 = vunpack.c.l.b16 %v4060
      %v4230 = vunpack.c.l.b16 %v4074
      %v4231 = vunpack.c.l.b16 %v4084
      %v4232 = vunpack.c.l.b16 %v4098
      %v4233 = vunpack.c.l.b16 %v4108
      %v4234 = vunpack.c.l.b16 %v4122
      %v4235 = vunpack.c.l.b16 %v4132
      %v4236 = vunpack.c.l.b16 %v4146
      %v4237 = vunpack.c.l.b16 %v4156
      %v4238 = vunpack.c.l.b16 %v4170
      %v4239 = vunpack.c.l.b16 %v4180
      %v4240 = vunpack.c.l.b16 %v4194
      %v4241 = vunpack.c.l.b16 %v4204
      %v4242 = vpack.c.b16 %v4211, %v4210
      %v4243 = vpack.c.b16 %v4213, %v4212
      %v4244 = vpack.c.b16 %v4215, %v4214
      %v4245 = vpack.c.b16 %v4217, %v4216
      %v4246 = vpack.c.b16 %v4219, %v4218
      %v4247 = vpack.c.b16 %v4221, %v4220
      %v4248 = vpack.c.b16 %v4223, %v4222
      %v4249 = vpack.c.b16 %v4225, %v4224
      %v4250 = vpack.c.b16 %v4227, %v4226
      %v4251 = vpack.c.b16 %v4229, %v4228
      %v4252 = vpack.c.b16 %v4231, %v4230
      %v4253 = vpack.c.b16 %v4233, %v4232
      %v4254 = vpack.c.b16 %v4235, %v4234
      %v4255 = vpack.c.b16 %v4237, %v4236
      %v4256 = vpack.c.b16 %v4239, %v4238
      %v4257 = vpack.c.b16 %v4241, %v4240
      %v4262 = vunpack.c.l.b16 %v4206
      %v4263 = vunpack.c.l.b16 %v4207
      %v4264 = vunpack.c.l.b16 %v4208
      %v4265 = vunpack.c.l.b16 %v4209
      %v4266 = vpack.c.b16 %v4263, %v4262
      %v4267 = vpack.c.b16 %v4265, %v4264
      %v4271 = vsel %vm831, %v4242, 0
      %v4274 = vsel %vm831, %v4243, 0
      %v4277 = vsel %vm831, %v4244, 0
      %v4280 = vsel %vm831, %v4245, 0
      %v4283 = vsel %vm831, %v4246, 0
      %v4286 = vsel %vm831, %v4247, 0
      %v4289 = vsel %vm831, %v4248, 0
      %v4292 = vsel %vm831, %v4249, 0
      %v4295 = vsel %vm831, %v4250, 0
      %v4298 = vsel %vm831, %v4251, 0
      %v4301 = vsel %vm831, %v4252, 0
      %v4304 = vsel %vm831, %v4253, 0
      %v4307 = vsel %vm831, %v4254, 0
      %v4310 = vsel %vm831, %v4255, 0
      %v4313 = vsel %vm831, %v4256, 0
      %v4316 = vsel %vm831, %v4257, 0
      %4318 = vmatprep.subr.bf16.mxu0 0
      %4319 = vmatpush1.bf16.msra.mxu0 0
      %4320 = vmatprep.subr.bf16.mxu0 0
      %4321 = vmatpush1.bf16.msra.mxu0 0
      %4322 = vmatprep.subr.bf16.mxu0 0
      %4323 = vmatpush1.bf16.msra.mxu0 0
      %4324 = vmatprep.subr.bf16.mxu0 0
      %4325 = vmatpush1.bf16.msra.mxu0 0
      %4326 = vmatprep.subr.bf16.mxu0 0
      %4327 = vmatpush1.bf16.msra.mxu0 0
      %4328 = vmatprep.subr.bf16.mxu0 0
      %4329 = vmatpush1.bf16.msra.mxu0 0
      %4330 = vmatprep.subr.bf16.mxu0 0
      %4331 = vmatpush1.bf16.msra.mxu0 %v4267
      %4332 = vmatprep.subr.bf16.mxu0 0
      %4333 = vmatpush1.bf16.msra.mxu0 %v4266
      %4334 = vmatprep.subr.bf16.mxu0 0
      %4335 = vmatpush2.bf16.msra.mxu0 0
      %4336 = vmatprep.subr.bf16.mxu0 0
      %4337 = vmatpush2.bf16.msra.mxu0 0
      %4338 = vmatprep.subr.bf16.mxu0 0
      %4339 = vmatpush2.bf16.msra.mxu0 0
      %4340 = vmatprep.subr.bf16.mxu0 0
      %4341 = vmatpush2.bf16.msra.mxu0 0
      %4342 = vmatprep.subr.bf16.mxu0 0
      %4343 = vmatpush2.bf16.msra.mxu0 0
      %4344 = vmatprep.subr.bf16.mxu0 0
      %4345 = vmatpush2.bf16.msra.mxu0 0
      %4346 = vmatprep.subr.bf16.mxu0 0
      %4347 = vmatpush2.bf16.msra.mxu0 0
      %4348 = vmatprep.subr.bf16.mxu0 0
      %4349 = vmatpush2.bf16.msra.mxu0 0
      %4350 = vmatprep.mubr.bf16.mxu0 0
      %4351 = vmatmul.mubr.bf16.gmra.mxu0 %v4271
      %v4352 = vpop.f32.mrf.mxu0
      %v4353 = vadd.f32 0.0, %v4352
      %v4354 = vpop.f32.mrf.mxu0
      %v4355 = vpop.f32.mrf.mxu0
      %v4356 = vadd.f32 0.0, %v4355
      %v4357 = vpop.f32.mrf.mxu0
      %4358 = vmatprep.mubr.bf16.mxu0 0
      %4359 = vmatmul.mubr.bf16.gmra.mxu0 %v4274
      %v4360 = vpop.f32.mrf.mxu0
      %v4361 = vadd.f32 0.0, %v4360
      %v4362 = vpop.f32.mrf.mxu0
      %v4363 = vpop.f32.mrf.mxu0
      %v4364 = vadd.f32 0.0, %v4363
      %v4365 = vpop.f32.mrf.mxu0
      %4366 = vmatprep.mubr.bf16.mxu0 0
      %4367 = vmatmul.mubr.bf16.gmra.mxu0 %v4277
      %v4368 = vpop.f32.mrf.mxu0
      %v4369 = vadd.f32 0.0, %v4368
      %v4370 = vpop.f32.mrf.mxu0
      %v4371 = vpop.f32.mrf.mxu0
      %v4372 = vadd.f32 0.0, %v4371
      %v4373 = vpop.f32.mrf.mxu0
      %4374 = vmatprep.mubr.bf16.mxu0 0
      %4375 = vmatmul.mubr.bf16.gmra.mxu0 %v4280
      %v4376 = vpop.f32.mrf.mxu0
      %v4377 = vadd.f32 0.0, %v4376
      %v4378 = vpop.f32.mrf.mxu0
      %v4379 = vpop.f32.mrf.mxu0
      %v4380 = vadd.f32 0.0, %v4379
      %v4381 = vpop.f32.mrf.mxu0
      %4382 = vmatprep.mubr.bf16.mxu0 0
      %4383 = vmatmul.mubr.bf16.gmra.mxu0 %v4283
      %v4384 = vpop.f32.mrf.mxu0
      %v4385 = vadd.f32 0.0, %v4384
      %v4386 = vpop.f32.mrf.mxu0
      %v4387 = vpop.f32.mrf.mxu0
      %v4388 = vadd.f32 0.0, %v4387
      %v4389 = vpop.f32.mrf.mxu0
      %4390 = vmatprep.mubr.bf16.mxu0 0
      %4391 = vmatmul.mubr.bf16.gmra.mxu0 %v4286
      %v4392 = vpop.f32.mrf.mxu0
      %v4393 = vadd.f32 0.0, %v4392
      %v4394 = vpop.f32.mrf.mxu0
      %v4395 = vpop.f32.mrf.mxu0
      %v4396 = vadd.f32 0.0, %v4395
      %v4397 = vpop.f32.mrf.mxu0
      %4398 = vmatprep.mubr.bf16.mxu0 0
      %4399 = vmatmul.mubr.bf16.gmra.mxu0 %v4289
      %v4400 = vpop.f32.mrf.mxu0
      %v4401 = vadd.f32 0.0, %v4400
      %v4402 = vpop.f32.mrf.mxu0
      %v4403 = vpop.f32.mrf.mxu0
      %v4404 = vadd.f32 0.0, %v4403
      %v4405 = vpop.f32.mrf.mxu0
      %4406 = vmatprep.mubr.bf16.mxu0 0
      %4407 = vmatmul.mubr.bf16.gmra.mxu0 %v4292
      %v4408 = vpop.f32.mrf.mxu0
      %v4409 = vadd.f32 0.0, %v4408
      %v4410 = vpop.f32.mrf.mxu0
      %v4411 = vpop.f32.mrf.mxu0
      %v4412 = vadd.f32 0.0, %v4411
      %v4413 = vpop.f32.mrf.mxu0
      %4414 = vmatprep.mubr.bf16.mxu0 0
      %4415 = vmatmul.mubr.bf16.gmra.mxu0 %v4295
      %v4416 = vpop.f32.mrf.mxu0
      %v4417 = vadd.f32 0.0, %v4416
      %v4418 = vpop.f32.mrf.mxu0
      %v4419 = vpop.f32.mrf.mxu0
      %v4420 = vadd.f32 0.0, %v4419
      %v4421 = vpop.f32.mrf.mxu0
      %4422 = vmatprep.mubr.bf16.mxu0 0
      %4423 = vmatmul.mubr.bf16.gmra.mxu0 %v4298
      %v4424 = vpop.f32.mrf.mxu0
      %v4425 = vadd.f32 0.0, %v4424
      %v4426 = vpop.f32.mrf.mxu0
      %v4427 = vpop.f32.mrf.mxu0
      %v4428 = vadd.f32 0.0, %v4427
      %v4429 = vpop.f32.mrf.mxu0
      %4430 = vmatprep.mubr.bf16.mxu0 0
      %4431 = vmatmul.mubr.bf16.gmra.mxu0 %v4301
      %v4432 = vpop.f32.mrf.mxu0
      %v4433 = vadd.f32 0.0, %v4432
      %v4434 = vpop.f32.mrf.mxu0
      %v4435 = vpop.f32.mrf.mxu0
      %v4436 = vadd.f32 0.0, %v4435
      %v4437 = vpop.f32.mrf.mxu0
      %4438 = vmatprep.mubr.bf16.mxu0 0
      %4439 = vmatmul.mubr.bf16.gmra.mxu0 %v4304
      %v4440 = vpop.f32.mrf.mxu0
      %v4441 = vadd.f32 0.0, %v4440
      %v4442 = vpop.f32.mrf.mxu0
      %v4443 = vpop.f32.mrf.mxu0
      %v4444 = vadd.f32 0.0, %v4443
      %v4445 = vpop.f32.mrf.mxu0
      %4446 = vmatprep.mubr.bf16.mxu0 0
      %4447 = vmatmul.mubr.bf16.gmra.mxu0 %v4307
      %v4448 = vpop.f32.mrf.mxu0
      %v4449 = vadd.f32 0.0, %v4448
      %v4450 = vpop.f32.mrf.mxu0
      %v4451 = vpop.f32.mrf.mxu0
      %v4452 = vadd.f32 0.0, %v4451
      %v4453 = vpop.f32.mrf.mxu0
      %4454 = vmatprep.mubr.bf16.mxu0 0
      %4455 = vmatmul.mubr.bf16.gmra.mxu0 %v4310
      %v4456 = vpop.f32.mrf.mxu0
      %v4457 = vadd.f32 0.0, %v4456
      %v4458 = vpop.f32.mrf.mxu0
      %v4459 = vpop.f32.mrf.mxu0
      %v4460 = vadd.f32 0.0, %v4459
      %v4461 = vpop.f32.mrf.mxu0
      %4462 = vmatprep.mubr.bf16.mxu0 0
      %4463 = vmatmul.mubr.bf16.gmra.mxu0 %v4313
      %v4464 = vpop.f32.mrf.mxu0
      %v4465 = vadd.f32 0.0, %v4464
      %v4466 = vpop.f32.mrf.mxu0
      %v4467 = vpop.f32.mrf.mxu0
      %v4468 = vadd.f32 0.0, %v4467
      %v4469 = vpop.f32.mrf.mxu0
      %4470 = vmatprep.mubr.bf16.mxu0 0
      %4471 = vmatmul.mubr.bf16.gmra.mxu0 %v4316
      %v4472 = vpop.f32.mrf.mxu0
      %v4473 = vadd.f32 0.0, %v4472
      %v4474 = vpop.f32.mrf.mxu0
      %v4475 = vpop.f32.mrf.mxu0
      %v4476 = vadd.f32 0.0, %v4475
      %v4477 = vpop.f32.mrf.mxu0
      %4478 = vdwg.mxu0
      %v4479 = vadd.f32 %v3741, %v4353
      %v4480 = vadd.f32 %v3742, %v4356
      %v4481 = vadd.f32 %v3743, %v4361
      %v4482 = vadd.f32 %v3744, %v4364
      %v4483 = vadd.f32 %v3745, %v4369
      %v4484 = vadd.f32 %v3746, %v4372
      %v4485 = vadd.f32 %v3747, %v4377
      %v4486 = vadd.f32 %v3748, %v4380
      %v4487 = vadd.f32 %v3749, %v4385
      %v4488 = vadd.f32 %v3750, %v4388
      %v4489 = vadd.f32 %v3751, %v4393
      %v4490 = vadd.f32 %v3752, %v4396
      %v4491 = vadd.f32 %v3753, %v4401
      %v4492 = vadd.f32 %v3754, %v4404
      %v4493 = vadd.f32 %v3755, %v4409
      %v4494 = vadd.f32 %v3756, %v4412
      %v4495 = vadd.f32 %v3757, %v4417
      %v4496 = vadd.f32 %v3758, %v4420
      %v4497 = vadd.f32 %v3759, %v4425
      %v4498 = vadd.f32 %v3760, %v4428
      %v4499 = vadd.f32 %v3761, %v4433
      %v4500 = vadd.f32 %v3762, %v4436
      %v4501 = vadd.f32 %v3763, %v4441
      %v4502 = vadd.f32 %v3764, %v4444
      %v4503 = vadd.f32 %v3765, %v4449
      %v4504 = vadd.f32 %v3766, %v4452
      %v4505 = vadd.f32 %v3767, %v4457
      %v4506 = vadd.f32 %v3768, %v4460
      %v4507 = vadd.f32 %v3769, %v4465
      %v4508 = vadd.f32 %v3770, %v4468
      %v4509 = vadd.f32 %v3771, %v4473
      %v4510 = vadd.f32 %v3772, %v4476
      %v4511 = vld [vmem:[%s3402] sm:$0xe]
      %v4512 = vld [vmem:[%s3402 + $0xc] sm:$0xe]
      %v4513 = vld [vmem:[%s3402 + $0x18] sm:$0xe]
      %v4514 = vld [vmem:[%s3402 + $0x24] sm:$0xe]
      %v4515 = vld [vmem:[%s3402 + $0x30] sm:$0xe]
      %v4516 = vld [vmem:[%s3402 + $0x3c] sm:$0xe]
      %v4517 = vld [vmem:[%s3402 + $0x48] sm:$0xe]
      %v4518 = vld [vmem:[%s3402 + $0x54] sm:$0xe]
      %v4519 = vld [vmem:[%s3402 + $0x60] sm:$0xe]
      %v4520 = vld [vmem:[%s3402 + $0x6c] sm:$0xe]
      %v4521 = vld [vmem:[%s3402 + $0x78] sm:$0xe]
      %v4522 = vld [vmem:[%s3402 + $0x84] sm:$0xe]
      %v4523 = vld [vmem:[%s3402 + $0x90] sm:$0xe]
      %v4524 = vld [vmem:[%s3402 + $0x9c] sm:$0xe]
      %v4525 = vld [vmem:[%s3402 + $0xa8] sm:$0xe]
      %v4526 = vld [vmem:[%s3402 + $0xb4] sm:$0xe]
      %v4575 = vrot.slane %v4511, 5
      %v4576 = vrot.slane %v4575, 4
      %v4577 = vrot.slane %v3774, 5
      %v4578 = vsel %vm1392, %v4576, %v4577
      %v4579 = vrot.slane %v4577, 4
      %v4580 = vrot.slane %v3775, 5
      %v4581 = vsel %vm1392, %v4579, %v4580
      %v4582 = vrot.slane %v4512, 5
      %v4583 = vrot.slane %v4582, 4
      %v4584 = vrot.slane %v3777, 5
      %v4585 = vsel %vm1392, %v4583, %v4584
      %v4586 = vrot.slane %v4584, 4
      %v4587 = vrot.slane %v3778, 5
      %v4588 = vsel %vm1392, %v4586, %v4587
      %v4589 = vrot.slane %v4513, 5
      %v4590 = vrot.slane %v4589, 4
      %v4591 = vrot.slane %v3780, 5
      %v4592 = vsel %vm1392, %v4590, %v4591
      %v4593 = vrot.slane %v4591, 4
      %v4594 = vrot.slane %v3781, 5
      %v4595 = vsel %vm1392, %v4593, %v4594
      %v4596 = vrot.slane %v4514, 5
      %v4597 = vrot.slane %v4596, 4
      %v4598 = vrot.slane %v3783, 5
      %v4599 = vsel %vm1392, %v4597, %v4598
      %v4600 = vrot.slane %v4598, 4
      %v4601 = vrot.slane %v3784, 5
      %v4602 = vsel %vm1392, %v4600, %v4601
      %v4603 = vrot.slane %v4515, 5
      %v4604 = vrot.slane %v4603, 4
      %v4605 = vrot.slane %v3786, 5
      %v4606 = vsel %vm1392, %v4604, %v4605
      %v4607 = vrot.slane %v4605, 4
      %v4608 = vrot.slane %v3787, 5
      %v4609 = vsel %vm1392, %v4607, %v4608
      %v4610 = vrot.slane %v4516, 5
      %v4611 = vrot.slane %v4610, 4
      %v4612 = vrot.slane %v3789, 5
      %v4613 = vsel %vm1392, %v4611, %v4612
      %v4614 = vrot.slane %v4612, 4
      %v4615 = vrot.slane %v3790, 5
      %v4616 = vsel %vm1392, %v4614, %v4615
      %v4617 = vrot.slane %v4517, 5
      %v4618 = vrot.slane %v4617, 4
      %v4619 = vrot.slane %v3792, 5
      %v4620 = vsel %vm1392, %v4618, %v4619
      %v4621 = vrot.slane %v4619, 4
      %v4622 = vrot.slane %v3793, 5
      %v4623 = vsel %vm1392, %v4621, %v4622
      %v4624 = vrot.slane %v4518, 5
      %v4625 = vrot.slane %v4624, 4
      %v4626 = vrot.slane %v3795, 5
      %v4627 = vsel %vm1392, %v4625, %v4626
      %v4628 = vrot.slane %v4626, 4
      %v4629 = vrot.slane %v3796, 5
      %v4630 = vsel %vm1392, %v4628, %v4629
      %v4631 = vrot.slane %v4519, 5
      %v4632 = vrot.slane %v4631, 4
      %v4633 = vrot.slane %v3798, 5
      %v4634 = vsel %vm1392, %v4632, %v4633
      %v4635 = vrot.slane %v4633, 4
      %v4636 = vrot.slane %v3799, 5
      %v4637 = vsel %vm1392, %v4635, %v4636
      %v4638 = vrot.slane %v4520, 5
      %v4639 = vrot.slane %v4638, 4
      %v4640 = vrot.slane %v3801, 5
      %v4641 = vsel %vm1392, %v4639, %v4640
      %v4642 = vrot.slane %v4640, 4
      %v4643 = vrot.slane %v3802, 5
      %v4644 = vsel %vm1392, %v4642, %v4643
      %v4645 = vrot.slane %v4521, 5
      %v4646 = vrot.slane %v4645, 4
      %v4647 = vrot.slane %v3804, 5
      %v4648 = vsel %vm1392, %v4646, %v4647
      %v4649 = vrot.slane %v4647, 4
      %v4650 = vrot.slane %v3805, 5
      %v4651 = vsel %vm1392, %v4649, %v4650
      %v4652 = vrot.slane %v4522, 5
      %v4653 = vrot.slane %v4652, 4
      %v4654 = vrot.slane %v3807, 5
      %v4655 = vsel %vm1392, %v4653, %v4654
      %v4656 = vrot.slane %v4654, 4
      %v4657 = vrot.slane %v3808, 5
      %v4658 = vsel %vm1392, %v4656, %v4657
      %v4659 = vrot.slane %v4523, 5
      %v4660 = vrot.slane %v4659, 4
      %v4661 = vrot.slane %v3810, 5
      %v4662 = vsel %vm1392, %v4660, %v4661
      %v4663 = vrot.slane %v4661, 4
      %v4664 = vrot.slane %v3811, 5
      %v4665 = vsel %vm1392, %v4663, %v4664
      %v4666 = vrot.slane %v4524, 5
      %v4667 = vrot.slane %v4666, 4
      %v4668 = vrot.slane %v3813, 5
      %v4669 = vsel %vm1392, %v4667, %v4668
      %v4670 = vrot.slane %v4668, 4
      %v4671 = vrot.slane %v3814, 5
      %v4672 = vsel %vm1392, %v4670, %v4671
      %v4673 = vrot.slane %v4525, 5
      %v4674 = vrot.slane %v4673, 4
      %v4675 = vrot.slane %v3816, 5
      %v4676 = vsel %vm1392, %v4674, %v4675
      %v4677 = vrot.slane %v4675, 4
      %v4678 = vrot.slane %v3817, 5
      %v4679 = vsel %vm1392, %v4677, %v4678
      %v4680 = vrot.slane %v4526, 5
      %v4681 = vrot.slane %v4680, 4
      %v4682 = vrot.slane %v3819, 5
      %v4683 = vsel %vm1392, %v4681, %v4682
      %v4684 = vrot.slane %v4682, 4
      %v4685 = vrot.slane %v3820, 5
      %v4686 = vsel %vm1392, %v4684, %v4685
      %s4687 = scalar_lea.vmem %s2, 128
      %v4688 = vld [vmem:[%s4687] sm:$0xf]
      %v4689 = vld [vmem:[%s4687 + $0x4] sm:$0xf]
      %v4690 = vld [vmem:[%s4687 + $0x8] sm:$0xf]
      %v4691 = vld [vmem:[%s4687 + $0xc] sm:$0xf]
      %v4692 = vunpack.c.l.b16 %v4578
      %v4693 = vunpack.c.l.b16 %v4581
      %v4694 = vunpack.c.l.b16 %v4585
      %v4695 = vunpack.c.l.b16 %v4588
      %v4696 = vunpack.c.l.b16 %v4592
      %v4697 = vunpack.c.l.b16 %v4595
      %v4698 = vunpack.c.l.b16 %v4599
      %v4699 = vunpack.c.l.b16 %v4602
      %v4700 = vunpack.c.l.b16 %v4606
      %v4701 = vunpack.c.l.b16 %v4609
      %v4702 = vunpack.c.l.b16 %v4613
      %v4703 = vunpack.c.l.b16 %v4616
      %v4704 = vunpack.c.l.b16 %v4620
      %v4705 = vunpack.c.l.b16 %v4623
      %v4706 = vunpack.c.l.b16 %v4627
      %v4707 = vunpack.c.l.b16 %v4630
      %v4708 = vunpack.c.l.b16 %v4634
      %v4709 = vunpack.c.l.b16 %v4637
      %v4710 = vunpack.c.l.b16 %v4641
      %v4711 = vunpack.c.l.b16 %v4644
      %v4712 = vunpack.c.l.b16 %v4648
      %v4713 = vunpack.c.l.b16 %v4651
      %v4714 = vunpack.c.l.b16 %v4655
      %v4715 = vunpack.c.l.b16 %v4658
      %v4716 = vunpack.c.l.b16 %v4662
      %v4717 = vunpack.c.l.b16 %v4665
      %v4718 = vunpack.c.l.b16 %v4669
      %v4719 = vunpack.c.l.b16 %v4672
      %v4720 = vunpack.c.l.b16 %v4676
      %v4721 = vunpack.c.l.b16 %v4679
      %v4722 = vunpack.c.l.b16 %v4683
      %v4723 = vunpack.c.l.b16 %v4686
      %v4724 = vpack.c.b16 %v4693, %v4692
      %v4725 = vpack.c.b16 %v4695, %v4694
      %v4726 = vpack.c.b16 %v4697, %v4696
      %v4727 = vpack.c.b16 %v4699, %v4698
      %v4728 = vpack.c.b16 %v4701, %v4700
      %v4729 = vpack.c.b16 %v4703, %v4702
      %v4730 = vpack.c.b16 %v4705, %v4704
      %v4731 = vpack.c.b16 %v4707, %v4706
      %v4732 = vpack.c.b16 %v4709, %v4708
      %v4733 = vpack.c.b16 %v4711, %v4710
      %v4734 = vpack.c.b16 %v4713, %v4712
      %v4735 = vpack.c.b16 %v4715, %v4714
      %v4736 = vpack.c.b16 %v4717, %v4716
      %v4737 = vpack.c.b16 %v4719, %v4718
      %v4738 = vpack.c.b16 %v4721, %v4720
      %v4739 = vpack.c.b16 %v4723, %v4722
      %v4744 = vunpack.c.l.b16 %v4688
      %v4745 = vunpack.c.l.b16 %v4689
      %v4746 = vunpack.c.l.b16 %v4690
      %v4747 = vunpack.c.l.b16 %v4691
      %v4748 = vpack.c.b16 %v4745, %v4744
      %v4749 = vpack.c.b16 %v4747, %v4746
      %v4753 = vsel %vm831, %v4724, 0
      %v4756 = vsel %vm831, %v4725, 0
      %v4759 = vsel %vm831, %v4726, 0
      %v4762 = vsel %vm831, %v4727, 0
      %v4765 = vsel %vm831, %v4728, 0
      %v4768 = vsel %vm831, %v4729, 0
      %v4771 = vsel %vm831, %v4730, 0
      %v4774 = vsel %vm831, %v4731, 0
      %v4777 = vsel %vm831, %v4732, 0
      %v4780 = vsel %vm831, %v4733, 0
      %v4783 = vsel %vm831, %v4734, 0
      %v4786 = vsel %vm831, %v4735, 0
      %v4789 = vsel %vm831, %v4736, 0
      %v4792 = vsel %vm831, %v4737, 0
      %v4795 = vsel %vm831, %v4738, 0
      %v4798 = vsel %vm831, %v4739, 0
      %4800 = vmatprep.subr.bf16.mxu0 0
      %4801 = vmatpush1.bf16.msra.mxu0 0
      %4802 = vmatprep.subr.bf16.mxu0 0
      %4803 = vmatpush1.bf16.msra.mxu0 0
      %4804 = vmatprep.subr.bf16.mxu0 0
      %4805 = vmatpush1.bf16.msra.mxu0 0
      %4806 = vmatprep.subr.bf16.mxu0 0
      %4807 = vmatpush1.bf16.msra.mxu0 0
      %4808 = vmatprep.subr.bf16.mxu0 0
      %4809 = vmatpush1.bf16.msra.mxu0 0
      %4810 = vmatprep.subr.bf16.mxu0 0
      %4811 = vmatpush1.bf16.msra.mxu0 0
      %4812 = vmatprep.subr.bf16.mxu0 0
      %4813 = vmatpush1.bf16.msra.mxu0 %v4749
      %4814 = vmatprep.subr.bf16.mxu0 0
      %4815 = vmatpush1.bf16.msra.mxu0 %v4748
      %4816 = vmatprep.subr.bf16.mxu0 0
      %4817 = vmatpush2.bf16.msra.mxu0 0
      %4818 = vmatprep.subr.bf16.mxu0 0
      %4819 = vmatpush2.bf16.msra.mxu0 0
      %4820 = vmatprep.subr.bf16.mxu0 0
      %4821 = vmatpush2.bf16.msra.mxu0 0
      %4822 = vmatprep.subr.bf16.mxu0 0
      %4823 = vmatpush2.bf16.msra.mxu0 0
      %4824 = vmatprep.subr.bf16.mxu0 0
      %4825 = vmatpush2.bf16.msra.mxu0 0
      %4826 = vmatprep.subr.bf16.mxu0 0
      %4827 = vmatpush2.bf16.msra.mxu0 0
      %4828 = vmatprep.subr.bf16.mxu0 0
      %4829 = vmatpush2.bf16.msra.mxu0 0
      %4830 = vmatprep.subr.bf16.mxu0 0
      %4831 = vmatpush2.bf16.msra.mxu0 0
      %4832 = vmatprep.mubr.bf16.mxu0 0
      %4833 = vmatmul.mubr.bf16.gmra.mxu0 %v4753
      %v4834 = vpop.f32.mrf.mxu0
      %v4835 = vadd.f32 0.0, %v4834
      %v4836 = vpop.f32.mrf.mxu0
      %v4837 = vpop.f32.mrf.mxu0
      %v4838 = vadd.f32 0.0, %v4837
      %v4839 = vpop.f32.mrf.mxu0
      %4840 = vmatprep.mubr.bf16.mxu0 0
      %4841 = vmatmul.mubr.bf16.gmra.mxu0 %v4756
      %v4842 = vpop.f32.mrf.mxu0
      %v4843 = vadd.f32 0.0, %v4842
      %v4844 = vpop.f32.mrf.mxu0
      %v4845 = vpop.f32.mrf.mxu0
      %v4846 = vadd.f32 0.0, %v4845
      %v4847 = vpop.f32.mrf.mxu0
      %4848 = vmatprep.mubr.bf16.mxu0 0
      %4849 = vmatmul.mubr.bf16.gmra.mxu0 %v4759
      %v4850 = vpop.f32.mrf.mxu0
      %v4851 = vadd.f32 0.0, %v4850
      %v4852 = vpop.f32.mrf.mxu0
      %v4853 = vpop.f32.mrf.mxu0
      %v4854 = vadd.f32 0.0, %v4853
      %v4855 = vpop.f32.mrf.mxu0
      %4856 = vmatprep.mubr.bf16.mxu0 0
      %4857 = vmatmul.mubr.bf16.gmra.mxu0 %v4762
      %v4858 = vpop.f32.mrf.mxu0
      %v4859 = vadd.f32 0.0, %v4858
      %v4860 = vpop.f32.mrf.mxu0
      %v4861 = vpop.f32.mrf.mxu0
      %v4862 = vadd.f32 0.0, %v4861
      %v4863 = vpop.f32.mrf.mxu0
      %4864 = vmatprep.mubr.bf16.mxu0 0
      %4865 = vmatmul.mubr.bf16.gmra.mxu0 %v4765
      %v4866 = vpop.f32.mrf.mxu0
      %v4867 = vadd.f32 0.0, %v4866
      %v4868 = vpop.f32.mrf.mxu0
      %v4869 = vpop.f32.mrf.mxu0
      %v4870 = vadd.f32 0.0, %v4869
      %v4871 = vpop.f32.mrf.mxu0
      %4872 = vmatprep.mubr.bf16.mxu0 0
      %4873 = vmatmul.mubr.bf16.gmra.mxu0 %v4768
      %v4874 = vpop.f32.mrf.mxu0
      %v4875 = vadd.f32 0.0, %v4874
      %v4876 = vpop.f32.mrf.mxu0
      %v4877 = vpop.f32.mrf.mxu0
      %v4878 = vadd.f32 0.0, %v4877
      %v4879 = vpop.f32.mrf.mxu0
      %4880 = vmatprep.mubr.bf16.mxu0 0
      %4881 = vmatmul.mubr.bf16.gmra.mxu0 %v4771
      %v4882 = vpop.f32.mrf.mxu0
      %v4883 = vadd.f32 0.0, %v4882
      %v4884 = vpop.f32.mrf.mxu0
      %v4885 = vpop.f32.mrf.mxu0
      %v4886 = vadd.f32 0.0, %v4885
      %v4887 = vpop.f32.mrf.mxu0
      %4888 = vmatprep.mubr.bf16.mxu0 0
      %4889 = vmatmul.mubr.bf16.gmra.mxu0 %v4774
      %v4890 = vpop.f32.mrf.mxu0
      %v4891 = vadd.f32 0.0, %v4890
      %v4892 = vpop.f32.mrf.mxu0
      %v4893 = vpop.f32.mrf.mxu0
      %v4894 = vadd.f32 0.0, %v4893
      %v4895 = vpop.f32.mrf.mxu0
      %4896 = vmatprep.mubr.bf16.mxu0 0
      %4897 = vmatmul.mubr.bf16.gmra.mxu0 %v4777
      %v4898 = vpop.f32.mrf.mxu0
      %v4899 = vadd.f32 0.0, %v4898
      %v4900 = vpop.f32.mrf.mxu0
      %v4901 = vpop.f32.mrf.mxu0
      %v4902 = vadd.f32 0.0, %v4901
      %v4903 = vpop.f32.mrf.mxu0
      %4904 = vmatprep.mubr.bf16.mxu0 0
      %4905 = vmatmul.mubr.bf16.gmra.mxu0 %v4780
      %v4906 = vpop.f32.mrf.mxu0
      %v4907 = vadd.f32 0.0, %v4906
      %v4908 = vpop.f32.mrf.mxu0
      %v4909 = vpop.f32.mrf.mxu0
      %v4910 = vadd.f32 0.0, %v4909
      %v4911 = vpop.f32.mrf.mxu0
      %4912 = vmatprep.mubr.bf16.mxu0 0
      %4913 = vmatmul.mubr.bf16.gmra.mxu0 %v4783
      %v4914 = vpop.f32.mrf.mxu0
      %v4915 = vadd.f32 0.0, %v4914
      %v4916 = vpop.f32.mrf.mxu0
      %v4917 = vpop.f32.mrf.mxu0
      %v4918 = vadd.f32 0.0, %v4917
      %v4919 = vpop.f32.mrf.mxu0
      %4920 = vmatprep.mubr.bf16.mxu0 0
      %4921 = vmatmul.mubr.bf16.gmra.mxu0 %v4786
      %v4922 = vpop.f32.mrf.mxu0
      %v4923 = vadd.f32 0.0, %v4922
      %v4924 = vpop.f32.mrf.mxu0
      %v4925 = vpop.f32.mrf.mxu0
      %v4926 = vadd.f32 0.0, %v4925
      %v4927 = vpop.f32.mrf.mxu0
      %4928 = vmatprep.mubr.bf16.mxu0 0
      %4929 = vmatmul.mubr.bf16.gmra.mxu0 %v4789
      %v4930 = vpop.f32.mrf.mxu0
      %v4931 = vadd.f32 0.0, %v4930
      %v4932 = vpop.f32.mrf.mxu0
      %v4933 = vpop.f32.mrf.mxu0
      %v4934 = vadd.f32 0.0, %v4933
      %v4935 = vpop.f32.mrf.mxu0
      %4936 = vmatprep.mubr.bf16.mxu0 0
      %4937 = vmatmul.mubr.bf16.gmra.mxu0 %v4792
      %v4938 = vpop.f32.mrf.mxu0
      %v4939 = vadd.f32 0.0, %v4938
      %v4940 = vpop.f32.mrf.mxu0
      %v4941 = vpop.f32.mrf.mxu0
      %v4942 = vadd.f32 0.0, %v4941
      %v4943 = vpop.f32.mrf.mxu0
      %4944 = vmatprep.mubr.bf16.mxu0 0
      %4945 = vmatmul.mubr.bf16.gmra.mxu0 %v4795
      %v4946 = vpop.f32.mrf.mxu0
      %v4947 = vadd.f32 0.0, %v4946
      %v4948 = vpop.f32.mrf.mxu0
      %v4949 = vpop.f32.mrf.mxu0
      %v4950 = vadd.f32 0.0, %v4949
      %v4951 = vpop.f32.mrf.mxu0
      %4952 = vmatprep.mubr.bf16.mxu0 0
      %4953 = vmatmul.mubr.bf16.gmra.mxu0 %v4798
      %v4954 = vpop.f32.mrf.mxu0
      %v4955 = vadd.f32 0.0, %v4954
      %v4956 = vpop.f32.mrf.mxu0
      %v4957 = vpop.f32.mrf.mxu0
      %v4958 = vadd.f32 0.0, %v4957
      %v4959 = vpop.f32.mrf.mxu0
      %4960 = vdwg.mxu0
      %v4961 = vadd.f32 %v4479, %v4835
      %v4962 = vadd.f32 %v4480, %v4838
      %v4963 = vadd.f32 %v4481, %v4843
      %v4964 = vadd.f32 %v4482, %v4846
      %v4965 = vadd.f32 %v4483, %v4851
      %v4966 = vadd.f32 %v4484, %v4854
      %v4967 = vadd.f32 %v4485, %v4859
      %v4968 = vadd.f32 %v4486, %v4862
      %v4969 = vadd.f32 %v4487, %v4867
      %v4970 = vadd.f32 %v4488, %v4870
      %v4971 = vadd.f32 %v4489, %v4875
      %v4972 = vadd.f32 %v4490, %v4878
      %v4973 = vadd.f32 %v4491, %v4883
      %v4974 = vadd.f32 %v4492, %v4886
      %v4975 = vadd.f32 %v4493, %v4891
      %v4976 = vadd.f32 %v4494, %v4894
      %v4977 = vadd.f32 %v4495, %v4899
      %v4978 = vadd.f32 %v4496, %v4902
      %v4979 = vadd.f32 %v4497, %v4907
      %v4980 = vadd.f32 %v4498, %v4910
      %v4981 = vadd.f32 %v4499, %v4915
      %v4982 = vadd.f32 %v4500, %v4918
      %v4983 = vadd.f32 %v4501, %v4923
      %v4984 = vadd.f32 %v4502, %v4926
      %v4985 = vadd.f32 %v4503, %v4931
      %v4986 = vadd.f32 %v4504, %v4934
      %v4987 = vadd.f32 %v4505, %v4939
      %v4988 = vadd.f32 %v4506, %v4942
      %v4989 = vadd.f32 %v4507, %v4947
      %v4990 = vadd.f32 %v4508, %v4950
      %v4991 = vadd.f32 %v4509, %v4955
      %v4992 = vadd.f32 %v4510, %v4958
      %v4993 = vld [vmem:[%s3] sm:$0x1]
      %v4995 = vlaneseq
      %v4996 = vshrl.u32 %v4995, 7
      %v4997 = vsub.s32 0, %v4996
      %v4998 = vrot.slane %v4993, %v4997
      %v5000 = vadd.f32 %v4961, %v4998
      %v5001 = vadd.f32 %v4962, %v4998
      %v5002 = vadd.f32 %v4963, %v4998
      %v5003 = vadd.f32 %v4964, %v4998
      %v5004 = vadd.f32 %v4965, %v4998
      %v5005 = vadd.f32 %v4966, %v4998
      %v5006 = vadd.f32 %v4967, %v4998
      %v5007 = vadd.f32 %v4968, %v4998
      %v5008 = vadd.f32 %v4969, %v4998
      %v5009 = vadd.f32 %v4970, %v4998
      %v5010 = vadd.f32 %v4971, %v4998
      %v5011 = vadd.f32 %v4972, %v4998
      %v5012 = vadd.f32 %v4973, %v4998
      %v5013 = vadd.f32 %v4974, %v4998
      %v5014 = vadd.f32 %v4975, %v4998
      %v5015 = vadd.f32 %v4976, %v4998
      %v5016 = vadd.f32 %v4977, %v4998
      %v5017 = vadd.f32 %v4978, %v4998
      %v5018 = vadd.f32 %v4979, %v4998
      %v5019 = vadd.f32 %v4980, %v4998
      %v5020 = vadd.f32 %v4981, %v4998
      %v5021 = vadd.f32 %v4982, %v4998
      %v5022 = vadd.f32 %v4983, %v4998
      %v5023 = vadd.f32 %v4984, %v4998
      %v5024 = vadd.f32 %v4985, %v4998
      %v5025 = vadd.f32 %v4986, %v4998
      %v5026 = vadd.f32 %v4987, %v4998
      %v5027 = vadd.f32 %v4988, %v4998
      %v5028 = vadd.f32 %v4989, %v4998
      %v5029 = vadd.f32 %v4990, %v4998
      %v5030 = vadd.f32 %v4991, %v4998
      %v5031 = vadd.f32 %v4992, %v4998
      %v5032 = vmax.f32 %v5000, 0.0
      %v5033 = vmax.f32 %v5001, 0.0
      %v5034 = vmax.f32 %v5002, 0.0
      %v5035 = vmax.f32 %v5003, 0.0
      %v5036 = vmax.f32 %v5004, 0.0
      %v5037 = vmax.f32 %v5005, 0.0
      %v5038 = vmax.f32 %v5006, 0.0
      %v5039 = vmax.f32 %v5007, 0.0
      %v5040 = vmax.f32 %v5008, 0.0
      %v5041 = vmax.f32 %v5009, 0.0
      %v5042 = vmax.f32 %v5010, 0.0
      %v5043 = vmax.f32 %v5011, 0.0
      %v5044 = vmax.f32 %v5012, 0.0
      %v5045 = vmax.f32 %v5013, 0.0
      %v5046 = vmax.f32 %v5014, 0.0
      %v5047 = vmax.f32 %v5015, 0.0
      %v5048 = vmax.f32 %v5016, 0.0
      %v5049 = vmax.f32 %v5017, 0.0
      %v5050 = vmax.f32 %v5018, 0.0
      %v5051 = vmax.f32 %v5019, 0.0
      %v5052 = vmax.f32 %v5020, 0.0
      %v5053 = vmax.f32 %v5021, 0.0
      %v5054 = vmax.f32 %v5022, 0.0
      %v5055 = vmax.f32 %v5023, 0.0
      %v5056 = vmax.f32 %v5024, 0.0
      %v5057 = vmax.f32 %v5025, 0.0
      %v5058 = vmax.f32 %v5026, 0.0
      %v5059 = vmax.f32 %v5027, 0.0
      %v5060 = vmax.f32 %v5028, 0.0
      %v5061 = vmax.f32 %v5029, 0.0
      %v5062 = vmax.f32 %v5030, 0.0
      %v5063 = vmax.f32 %v5031, 0.0
      %v5064 = vpack.c.bf16 %v5033, %v5032
      %v5065 = vpack.c.bf16 %v5035, %v5034
      %v5066 = vpack.c.bf16 %v5037, %v5036
      %v5067 = vpack.c.bf16 %v5039, %v5038
      %v5068 = vpack.c.bf16 %v5041, %v5040
      %v5069 = vpack.c.bf16 %v5043, %v5042
      %v5070 = vpack.c.bf16 %v5045, %v5044
      %v5071 = vpack.c.bf16 %v5047, %v5046
      %v5072 = vpack.c.bf16 %v5049, %v5048
      %v5073 = vpack.c.bf16 %v5051, %v5050
      %v5074 = vpack.c.bf16 %v5053, %v5052
      %v5075 = vpack.c.bf16 %v5055, %v5054
      %v5076 = vpack.c.bf16 %v5057, %v5056
      %v5077 = vpack.c.bf16 %v5059, %v5058
      %v5078 = vpack.c.bf16 %v5061, %v5060
      %v5079 = vpack.c.bf16 %v5063, %v5062
      %v5080 = vld [vmem:[%s4] sm:$0xf]
      %v5081 = vld [vmem:[%s4 + $0x4] sm:$0xf]
      %v5082 = vld [vmem:[%s4 + $0x8] sm:$0xf]
      %v5083 = vld [vmem:[%s4 + $0xc] sm:$0xf]
      %v5084 = vld [vmem:[%s5] sm:$0x1]
      %v5086 = vlaneseq
      %v5087 = vshrl.u32 %v5086, 7
      %v5088 = vsub.s32 0, %v5087
      %v5089 = vrot.slane %v5084, %v5088
      %v5095 = vunpack.c.l.b16 %v5080
      %v5096 = vunpack.c.l.b16 %v5081
      %v5097 = vunpack.c.l.b16 %v5082
      %v5098 = vunpack.c.l.b16 %v5083
      %v5099 = vpack.c.b16 %v5096, %v5095
      %v5100 = vpack.c.b16 %v5098, %v5097
      %v5104 = vsel %vm831, %v5064, 0
      %v5107 = vsel %vm831, %v5065, 0
      %v5110 = vsel %vm831, %v5066, 0
      %v5113 = vsel %vm831, %v5067, 0
      %v5116 = vsel %vm831, %v5068, 0
      %v5119 = vsel %vm831, %v5069, 0
      %v5122 = vsel %vm831, %v5070, 0
      %v5125 = vsel %vm831, %v5071, 0
      %v5128 = vsel %vm831, %v5072, 0
      %v5131 = vsel %vm831, %v5073, 0
      %v5134 = vsel %vm831, %v5074, 0
      %v5137 = vsel %vm831, %v5075, 0
      %v5140 = vsel %vm831, %v5076, 0
      %v5143 = vsel %vm831, %v5077, 0
      %v5146 = vsel %vm831, %v5078, 0
      %v5149 = vsel %vm831, %v5079, 0
      %5151 = vmatprep.subr.bf16.mxu0 0
      %5152 = vmatpush1.bf16.msra.mxu0 0
      %5153 = vmatprep.subr.bf16.mxu0 0
      %5154 = vmatpush1.bf16.msra.mxu0 0
      %5155 = vmatprep.subr.bf16.mxu0 0
      %5156 = vmatpush1.bf16.msra.mxu0 0
      %5157 = vmatprep.subr.bf16.mxu0 0
      %5158 = vmatpush1.bf16.msra.mxu0 0
      %5159 = vmatprep.subr.bf16.mxu0 0
      %5160 = vmatpush1.bf16.msra.mxu0 0
      %5161 = vmatprep.subr.bf16.mxu0 0
      %5162 = vmatpush1.bf16.msra.mxu0 0
      %5163 = vmatprep.subr.bf16.mxu0 0
      %5164 = vmatpush1.bf16.msra.mxu0 %v5100
      %5165 = vmatprep.subr.bf16.mxu0 0
      %5166 = vmatpush1.bf16.msra.mxu0 %v5099
      %5167 = vmatprep.subr.bf16.mxu0 0
      %5168 = vmatpush2.bf16.msra.mxu0 0
      %5169 = vmatprep.subr.bf16.mxu0 0
      %5170 = vmatpush2.bf16.msra.mxu0 0
      %5171 = vmatprep.subr.bf16.mxu0 0
      %5172 = vmatpush2.bf16.msra.mxu0 0
      %5173 = vmatprep.subr.bf16.mxu0 0
      %5174 = vmatpush2.bf16.msra.mxu0 0
      %5175 = vmatprep.subr.bf16.mxu0 0
      %5176 = vmatpush2.bf16.msra.mxu0 0
      %5177 = vmatprep.subr.bf16.mxu0 0
      %5178 = vmatpush2.bf16.msra.mxu0 0
      %5179 = vmatprep.subr.bf16.mxu0 0
      %5180 = vmatpush2.bf16.msra.mxu0 0
      %5181 = vmatprep.subr.bf16.mxu0 0
      %5182 = vmatpush2.bf16.msra.mxu0 0
      %5183 = vmatprep.mubr.bf16.mxu0 0
      %5184 = vmatmul.mubr.bf16.gmra.mxu0 %v5104
      %v5185 = vpop.f32.mrf.mxu0
      %v5186 = vadd.f32 %v5089, %v5185
      %v5187 = vpop.f32.mrf.mxu0
      %v5188 = vpop.f32.mrf.mxu0
      %v5189 = vadd.f32 %v5089, %v5188
      %v5190 = vpop.f32.mrf.mxu0
      %5191 = vmatprep.mubr.bf16.mxu0 0
      %5192 = vmatmul.mubr.bf16.gmra.mxu0 %v5107
      %v5193 = vpop.f32.mrf.mxu0
      %v5194 = vadd.f32 %v5089, %v5193
      %v5195 = vpop.f32.mrf.mxu0
      %v5196 = vpop.f32.mrf.mxu0
      %v5197 = vadd.f32 %v5089, %v5196
      %v5198 = vpop.f32.mrf.mxu0
      %5199 = vmatprep.mubr.bf16.mxu0 0
      %5200 = vmatmul.mubr.bf16.gmra.mxu0 %v5110
      %v5201 = vpop.f32.mrf.mxu0
      %v5202 = vadd.f32 %v5089, %v5201
      %v5203 = vpop.f32.mrf.mxu0
      %v5204 = vpop.f32.mrf.mxu0
      %v5205 = vadd.f32 %v5089, %v5204
      %v5206 = vpop.f32.mrf.mxu0
      %5207 = vmatprep.mubr.bf16.mxu0 0
      %5208 = vmatmul.mubr.bf16.gmra.mxu0 %v5113
      %v5209 = vpop.f32.mrf.mxu0
      %v5210 = vadd.f32 %v5089, %v5209
      %v5211 = vpop.f32.mrf.mxu0
      %v5212 = vpop.f32.mrf.mxu0
      %v5213 = vadd.f32 %v5089, %v5212
      %v5214 = vpop.f32.mrf.mxu0
      %5215 = vmatprep.mubr.bf16.mxu0 0
      %5216 = vmatmul.mubr.bf16.gmra.mxu0 %v5116
      %v5217 = vpop.f32.mrf.mxu0
      %v5218 = vadd.f32 %v5089, %v5217
      %v5219 = vpop.f32.mrf.mxu0
      %v5220 = vpop.f32.mrf.mxu0
      %v5221 = vadd.f32 %v5089, %v5220
      %v5222 = vpop.f32.mrf.mxu0
      %5223 = vmatprep.mubr.bf16.mxu0 0
      %5224 = vmatmul.mubr.bf16.gmra.mxu0 %v5119
      %v5225 = vpop.f32.mrf.mxu0
      %v5226 = vadd.f32 %v5089, %v5225
      %v5227 = vpop.f32.mrf.mxu0
      %v5228 = vpop.f32.mrf.mxu0
      %v5229 = vadd.f32 %v5089, %v5228
      %v5230 = vpop.f32.mrf.mxu0
      %5231 = vmatprep.mubr.bf16.mxu0 0
      %5232 = vmatmul.mubr.bf16.gmra.mxu0 %v5122
      %v5233 = vpop.f32.mrf.mxu0
      %v5234 = vadd.f32 %v5089, %v5233
      %v5235 = vpop.f32.mrf.mxu0
      %v5236 = vpop.f32.mrf.mxu0
      %v5237 = vadd.f32 %v5089, %v5236
      %v5238 = vpop.f32.mrf.mxu0
      %5239 = vmatprep.mubr.bf16.mxu0 0
      %5240 = vmatmul.mubr.bf16.gmra.mxu0 %v5125
      %v5241 = vpop.f32.mrf.mxu0
      %v5242 = vadd.f32 %v5089, %v5241
      %v5243 = vpop.f32.mrf.mxu0
      %v5244 = vpop.f32.mrf.mxu0
      %v5245 = vadd.f32 %v5089, %v5244
      %v5246 = vpop.f32.mrf.mxu0
      %5247 = vmatprep.mubr.bf16.mxu0 0
      %5248 = vmatmul.mubr.bf16.gmra.mxu0 %v5128
      %v5249 = vpop.f32.mrf.mxu0
      %v5250 = vadd.f32 %v5089, %v5249
      %v5251 = vpop.f32.mrf.mxu0
      %v5252 = vpop.f32.mrf.mxu0
      %v5253 = vadd.f32 %v5089, %v5252
      %v5254 = vpop.f32.mrf.mxu0
      %5255 = vmatprep.mubr.bf16.mxu0 0
      %5256 = vmatmul.mubr.bf16.gmra.mxu0 %v5131
      %v5257 = vpop.f32.mrf.mxu0
      %v5258 = vadd.f32 %v5089, %v5257
      %v5259 = vpop.f32.mrf.mxu0
      %v5260 = vpop.f32.mrf.mxu0
      %v5261 = vadd.f32 %v5089, %v5260
      %v5262 = vpop.f32.mrf.mxu0
      %5263 = vmatprep.mubr.bf16.mxu0 0
      %5264 = vmatmul.mubr.bf16.gmra.mxu0 %v5134
      %v5265 = vpop.f32.mrf.mxu0
      %v5266 = vadd.f32 %v5089, %v5265
      %v5267 = vpop.f32.mrf.mxu0
      %v5268 = vpop.f32.mrf.mxu0
      %v5269 = vadd.f32 %v5089, %v5268
      %v5270 = vpop.f32.mrf.mxu0
      %5271 = vmatprep.mubr.bf16.mxu0 0
      %5272 = vmatmul.mubr.bf16.gmra.mxu0 %v5137
      %v5273 = vpop.f32.mrf.mxu0
      %v5274 = vadd.f32 %v5089, %v5273
      %v5275 = vpop.f32.mrf.mxu0
      %v5276 = vpop.f32.mrf.mxu0
      %v5277 = vadd.f32 %v5089, %v5276
      %v5278 = vpop.f32.mrf.mxu0
      %5279 = vmatprep.mubr.bf16.mxu0 0
      %5280 = vmatmul.mubr.bf16.gmra.mxu0 %v5140
      %v5281 = vpop.f32.mrf.mxu0
      %v5282 = vadd.f32 %v5089, %v5281
      %v5283 = vpop.f32.mrf.mxu0
      %v5284 = vpop.f32.mrf.mxu0
      %v5285 = vadd.f32 %v5089, %v5284
      %v5286 = vpop.f32.mrf.mxu0
      %5287 = vmatprep.mubr.bf16.mxu0 0
      %5288 = vmatmul.mubr.bf16.gmra.mxu0 %v5143
      %v5289 = vpop.f32.mrf.mxu0
      %v5290 = vadd.f32 %v5089, %v5289
      %v5291 = vpop.f32.mrf.mxu0
      %v5292 = vpop.f32.mrf.mxu0
      %v5293 = vadd.f32 %v5089, %v5292
      %v5294 = vpop.f32.mrf.mxu0
      %5295 = vmatprep.mubr.bf16.mxu0 0
      %5296 = vmatmul.mubr.bf16.gmra.mxu0 %v5146
      %v5297 = vpop.f32.mrf.mxu0
      %v5298 = vadd.f32 %v5089, %v5297
      %v5299 = vpop.f32.mrf.mxu0
      %v5300 = vpop.f32.mrf.mxu0
      %v5301 = vadd.f32 %v5089, %v5300
      %v5302 = vpop.f32.mrf.mxu0
      %5303 = vmatprep.mubr.bf16.mxu0 0
      %5304 = vmatmul.mubr.bf16.gmra.mxu0 %v5149
      %v5305 = vpop.f32.mrf.mxu0
      %v5306 = vadd.f32 %v5089, %v5305
      %v5307 = vpop.f32.mrf.mxu0
      %v5308 = vpop.f32.mrf.mxu0
      %v5309 = vadd.f32 %v5089, %v5308
      %v5310 = vpop.f32.mrf.mxu0
      %5311 = vdwg.mxu0
      %v5312 = vld [vmem:[%s320] sm:$0xf]
      %v5313 = vld [vmem:[%s320 + $0x4] sm:$0xf]
      %v5314 = vld [vmem:[%s320 + $0x8] sm:$0xf]
      %v5315 = vld [vmem:[%s320 + $0xc] sm:$0xf]
      %v5316 = vld [vmem:[%s320 + $0x10] sm:$0xf]
      %v5317 = vld [vmem:[%s320 + $0x14] sm:$0xf]
      %v5318 = vld [vmem:[%s320 + $0x18] sm:$0xf]
      %v5319 = vld [vmem:[%s320 + $0x1c] sm:$0xf]
      %v5320 = vld [vmem:[%s320 + $0x20] sm:$0xf]
      %v5321 = vld [vmem:[%s320 + $0x24] sm:$0xf]
      %v5322 = vld [vmem:[%s320 + $0x28] sm:$0xf]
      %v5323 = vld [vmem:[%s320 + $0x2c] sm:$0xf]
      %v5324 = vld [vmem:[%s320 + $0x30] sm:$0xf]
      %v5325 = vld [vmem:[%s320 + $0x34] sm:$0xf]
      %v5326 = vld [vmem:[%s320 + $0x38] sm:$0xf]
      %v5327 = vld [vmem:[%s320 + $0x3c] sm:$0xf]
      %v5328 = vld [vmem:[%s320 + $0x40] sm:$0xf]
      %v5329 = vld [vmem:[%s320 + $0x44] sm:$0xf]
      %v5330 = vld [vmem:[%s320 + $0x48] sm:$0xf]
      %v5331 = vld [vmem:[%s320 + $0x4c] sm:$0xf]
      %v5332 = vld [vmem:[%s320 + $0x50] sm:$0xf]
      %v5333 = vld [vmem:[%s320 + $0x54] sm:$0xf]
      %v5334 = vld [vmem:[%s320 + $0x58] sm:$0xf]
      %v5335 = vld [vmem:[%s320 + $0x5c] sm:$0xf]
      %v5336 = vld [vmem:[%s320 + $0x60] sm:$0xf]
      %v5337 = vld [vmem:[%s320 + $0x64] sm:$0xf]
      %v5338 = vld [vmem:[%s320 + $0x68] sm:$0xf]
      %v5339 = vld [vmem:[%s320 + $0x6c] sm:$0xf]
      %v5340 = vld [vmem:[%s320 + $0x70] sm:$0xf]
      %v5341 = vld [vmem:[%s320 + $0x74] sm:$0xf]
      %v5342 = vld [vmem:[%s320 + $0x78] sm:$0xf]
      %v5343 = vld [vmem:[%s320 + $0x7c] sm:$0xf]
      %v5344 = vld [vmem:[%s6] sm:$0xf]
      %v5345 = vld [vmem:[%s6 + $0x4] sm:$0xf]
      %v5346 = vld [vmem:[%s6 + $0x8] sm:$0xf]
      %v5347 = vld [vmem:[%s6 + $0xc] sm:$0xf]
      %v5348 = vld [vmem:[%s6 + $0x10] sm:$0xf]
      %v5349 = vld [vmem:[%s6 + $0x14] sm:$0xf]
      %v5350 = vld [vmem:[%s6 + $0x18] sm:$0xf]
      %v5351 = vld [vmem:[%s6 + $0x1c] sm:$0xf]
      %v5352 = vld [vmem:[%s7] sm:$0x1]
      %v5354 = vlaneseq
      %v5355 = vshrl.u32 %v5354, 7
      %v5356 = vsub.s32 0, %v5355
      %v5357 = vrot.slane %v5352, %v5356
      %v5391 = vunpack.c.l.b16 %v5312
      %v5392 = vunpack.c.l.b16 %v5313
      %v5393 = vunpack.c.l.b16 %v5314
      %v5394 = vunpack.c.l.b16 %v5315
      %v5395 = vunpack.c.l.b16 %v5316
      %v5396 = vunpack.c.l.b16 %v5317
      %v5397 = vunpack.c.l.b16 %v5318
      %v5398 = vunpack.c.l.b16 %v5319
      %v5399 = vunpack.c.l.b16 %v5320
      %v5400 = vunpack.c.l.b16 %v5321
      %v5401 = vunpack.c.l.b16 %v5322
      %v5402 = vunpack.c.l.b16 %v5323
      %v5403 = vunpack.c.l.b16 %v5324
      %v5404 = vunpack.c.l.b16 %v5325
      %v5405 = vunpack.c.l.b16 %v5326
      %v5406 = vunpack.c.l.b16 %v5327
      %v5407 = vunpack.c.l.b16 %v5328
      %v5408 = vunpack.c.l.b16 %v5329
      %v5409 = vunpack.c.l.b16 %v5330
      %v5410 = vunpack.c.l.b16 %v5331
      %v5411 = vunpack.c.l.b16 %v5332
      %v5412 = vunpack.c.l.b16 %v5333
      %v5413 = vunpack.c.l.b16 %v5334
      %v5414 = vunpack.c.l.b16 %v5335
      %v5415 = vunpack.c.l.b16 %v5336
      %v5416 = vunpack.c.l.b16 %v5337
      %v5417 = vunpack.c.l.b16 %v5338
      %v5418 = vunpack.c.l.b16 %v5339
      %v5419 = vunpack.c.l.b16 %v5340
      %v5420 = vunpack.c.l.b16 %v5341
      %v5421 = vunpack.c.l.b16 %v5342
      %v5422 = vunpack.c.l.b16 %v5343
      %v5423 = vpack.c.b16 %v5392, %v5391
      %v5424 = vpack.c.b16 %v5394, %v5393
      %v5425 = vpack.c.b16 %v5396, %v5395
      %v5426 = vpack.c.b16 %v5398, %v5397
      %v5427 = vpack.c.b16 %v5400, %v5399
      %v5428 = vpack.c.b16 %v5402, %v5401
      %v5429 = vpack.c.b16 %v5404, %v5403
      %v5430 = vpack.c.b16 %v5406, %v5405
      %v5431 = vpack.c.b16 %v5408, %v5407
      %v5432 = vpack.c.b16 %v5410, %v5409
      %v5433 = vpack.c.b16 %v5412, %v5411
      %v5434 = vpack.c.b16 %v5414, %v5413
      %v5435 = vpack.c.b16 %v5416, %v5415
      %v5436 = vpack.c.b16 %v5418, %v5417
      %v5437 = vpack.c.b16 %v5420, %v5419
      %v5438 = vpack.c.b16 %v5422, %v5421
      %v5447 = vunpack.c.l.b16 %v5344
      %v5448 = vunpack.c.l.b16 %v5345
      %v5449 = vunpack.c.l.b16 %v5346
      %v5450 = vunpack.c.l.b16 %v5347
      %v5451 = vunpack.c.l.b16 %v5348
      %v5452 = vunpack.c.l.b16 %v5349
      %v5453 = vunpack.c.l.b16 %v5350
      %v5454 = vunpack.c.l.b16 %v5351
      %v5455 = vpack.c.b16 %v5448, %v5447
      %v5456 = vpack.c.b16 %v5450, %v5449
      %v5457 = vpack.c.b16 %v5452, %v5451
      %v5458 = vpack.c.b16 %v5454, %v5453
      %vm5463 = vcmask 523264
      %v5465 = vsel %vm5463, %v5423, 0
      %v5468 = vsel %vm5463, %v5424, 0
      %v5471 = vsel %vm5463, %v5425, 0
      %v5474 = vsel %vm5463, %v5426, 0
      %v5477 = vsel %vm5463, %v5427, 0
      %v5480 = vsel %vm5463, %v5428, 0
      %v5483 = vsel %vm5463, %v5429, 0
      %v5486 = vsel %vm5463, %v5430, 0
      %v5489 = vsel %vm5463, %v5431, 0
      %v5492 = vsel %vm5463, %v5432, 0
      %v5495 = vsel %vm5463, %v5433, 0
      %v5498 = vsel %vm5463, %v5434, 0
      %v5501 = vsel %vm5463, %v5435, 0
      %v5504 = vsel %vm5463, %v5436, 0
      %v5507 = vsel %vm5463, %v5437, 0
      %v5510 = vsel %vm5463, %v5438, 0
      %5512 = vmatprep.subr.bf16.mxu0 0
      %5513 = vmatpush1.bf16.msra.mxu0 0
      %5514 = vmatprep.subr.bf16.mxu0 0
      %5515 = vmatpush1.bf16.msra.mxu0 0
      %5516 = vmatprep.subr.bf16.mxu0 0
      %5517 = vmatpush1.bf16.msra.mxu0 0
      %5518 = vmatprep.subr.bf16.mxu0 0
      %5519 = vmatpush1.bf16.msra.mxu0 0
      %5520 = vmatprep.subr.bf16.mxu0 0
      %5521 = vmatpush1.bf16.msra.mxu0 %v5458
      %5522 = vmatprep.subr.bf16.mxu0 0
      %5523 = vmatpush1.bf16.msra.mxu0 %v5457
      %5524 = vmatprep.subr.bf16.mxu0 0
      %5525 = vmatpush1.bf16.msra.mxu0 %v5456
      %5526 = vmatprep.subr.bf16.mxu0 0
      %5527 = vmatpush1.bf16.msra.mxu0 %v5455
      %5528 = vmatprep.subr.bf16.mxu0 0
      %5529 = vmatpush2.bf16.msra.mxu0 0
      %5530 = vmatprep.subr.bf16.mxu0 0
      %5531 = vmatpush2.bf16.msra.mxu0 0
      %5532 = vmatprep.subr.bf16.mxu0 0
      %5533 = vmatpush2.bf16.msra.mxu0 0
      %5534 = vmatprep.subr.bf16.mxu0 0
      %5535 = vmatpush2.bf16.msra.mxu0 0
      %5536 = vmatprep.subr.bf16.mxu0 0
      %5537 = vmatpush2.bf16.msra.mxu0 0
      %5538 = vmatprep.subr.bf16.mxu0 0
      %5539 = vmatpush2.bf16.msra.mxu0 0
      %5540 = vmatprep.subr.bf16.mxu0 0
      %5541 = vmatpush2.bf16.msra.mxu0 0
      %5542 = vmatprep.subr.bf16.mxu0 0
      %5543 = vmatpush2.bf16.msra.mxu0 0
      %5544 = vmatprep.mubr.bf16.mxu0 0
      %5545 = vmatmul.mubr.bf16.gmra.mxu0 %v5465
      %v5546 = vpop.f32.mrf.mxu0
      %v5547 = vadd.f32 %v5357, %v5546
      %v5548 = vpop.f32.mrf.mxu0
      %v5549 = vpop.f32.mrf.mxu0
      %v5550 = vadd.f32 %v5357, %v5549
      %v5551 = vpop.f32.mrf.mxu0
      %5552 = vmatprep.mubr.bf16.mxu0 0
      %5553 = vmatmul.mubr.bf16.gmra.mxu0 %v5468
      %v5554 = vpop.f32.mrf.mxu0
      %v5555 = vadd.f32 %v5357, %v5554
      %v5556 = vpop.f32.mrf.mxu0
      %v5557 = vpop.f32.mrf.mxu0
      %v5558 = vadd.f32 %v5357, %v5557
      %v5559 = vpop.f32.mrf.mxu0
      %5560 = vmatprep.mubr.bf16.mxu0 0
      %5561 = vmatmul.mubr.bf16.gmra.mxu0 %v5471
      %v5562 = vpop.f32.mrf.mxu0
      %v5563 = vadd.f32 %v5357, %v5562
      %v5564 = vpop.f32.mrf.mxu0
      %v5565 = vpop.f32.mrf.mxu0
      %v5566 = vadd.f32 %v5357, %v5565
      %v5567 = vpop.f32.mrf.mxu0
      %5568 = vmatprep.mubr.bf16.mxu0 0
      %5569 = vmatmul.mubr.bf16.gmra.mxu0 %v5474
      %v5570 = vpop.f32.mrf.mxu0
      %v5571 = vadd.f32 %v5357, %v5570
      %v5572 = vpop.f32.mrf.mxu0
      %v5573 = vpop.f32.mrf.mxu0
      %v5574 = vadd.f32 %v5357, %v5573
      %v5575 = vpop.f32.mrf.mxu0
      %5576 = vmatprep.mubr.bf16.mxu0 0
      %5577 = vmatmul.mubr.bf16.gmra.mxu0 %v5477
      %v5578 = vpop.f32.mrf.mxu0
      %v5579 = vadd.f32 %v5357, %v5578
      %v5580 = vpop.f32.mrf.mxu0
      %v5581 = vpop.f32.mrf.mxu0
      %v5582 = vadd.f32 %v5357, %v5581
      %v5583 = vpop.f32.mrf.mxu0
      %5584 = vmatprep.mubr.bf16.mxu0 0
      %5585 = vmatmul.mubr.bf16.gmra.mxu0 %v5480
      %v5586 = vpop.f32.mrf.mxu0
      %v5587 = vadd.f32 %v5357, %v5586
      %v5588 = vpop.f32.mrf.mxu0
      %v5589 = vpop.f32.mrf.mxu0
      %v5590 = vadd.f32 %v5357, %v5589
      %v5591 = vpop.f32.mrf.mxu0
      %5592 = vmatprep.mubr.bf16.mxu0 0
      %5593 = vmatmul.mubr.bf16.gmra.mxu0 %v5483
      %v5594 = vpop.f32.mrf.mxu0
      %v5595 = vadd.f32 %v5357, %v5594
      %v5596 = vpop.f32.mrf.mxu0
      %v5597 = vpop.f32.mrf.mxu0
      %v5598 = vadd.f32 %v5357, %v5597
      %v5599 = vpop.f32.mrf.mxu0
      %5600 = vmatprep.mubr.bf16.mxu0 0
      %5601 = vmatmul.mubr.bf16.gmra.mxu0 %v5486
      %v5602 = vpop.f32.mrf.mxu0
      %v5603 = vadd.f32 %v5357, %v5602
      %v5604 = vpop.f32.mrf.mxu0
      %v5605 = vpop.f32.mrf.mxu0
      %v5606 = vadd.f32 %v5357, %v5605
      %v5607 = vpop.f32.mrf.mxu0
      %5608 = vmatprep.mubr.bf16.mxu0 0
      %5609 = vmatmul.mubr.bf16.gmra.mxu0 %v5489
      %v5610 = vpop.f32.mrf.mxu0
      %v5611 = vadd.f32 %v5357, %v5610
      %v5612 = vpop.f32.mrf.mxu0
      %v5613 = vpop.f32.mrf.mxu0
      %v5614 = vadd.f32 %v5357, %v5613
      %v5615 = vpop.f32.mrf.mxu0
      %5616 = vmatprep.mubr.bf16.mxu0 0
      %5617 = vmatmul.mubr.bf16.gmra.mxu0 %v5492
      %v5618 = vpop.f32.mrf.mxu0
      %v5619 = vadd.f32 %v5357, %v5618
      %v5620 = vpop.f32.mrf.mxu0
      %v5621 = vpop.f32.mrf.mxu0
      %v5622 = vadd.f32 %v5357, %v5621
      %v5623 = vpop.f32.mrf.mxu0
      %5624 = vmatprep.mubr.bf16.mxu0 0
      %5625 = vmatmul.mubr.bf16.gmra.mxu0 %v5495
      %v5626 = vpop.f32.mrf.mxu0
      %v5627 = vadd.f32 %v5357, %v5626
      %v5628 = vpop.f32.mrf.mxu0
      %v5629 = vpop.f32.mrf.mxu0
      %v5630 = vadd.f32 %v5357, %v5629
      %v5631 = vpop.f32.mrf.mxu0
      %5632 = vmatprep.mubr.bf16.mxu0 0
      %5633 = vmatmul.mubr.bf16.gmra.mxu0 %v5498
      %v5634 = vpop.f32.mrf.mxu0
      %v5635 = vadd.f32 %v5357, %v5634
      %v5636 = vpop.f32.mrf.mxu0
      %v5637 = vpop.f32.mrf.mxu0
      %v5638 = vadd.f32 %v5357, %v5637
      %v5639 = vpop.f32.mrf.mxu0
      %5640 = vmatprep.mubr.bf16.mxu0 0
      %5641 = vmatmul.mubr.bf16.gmra.mxu0 %v5501
      %v5642 = vpop.f32.mrf.mxu0
      %v5643 = vadd.f32 %v5357, %v5642
      %v5644 = vpop.f32.mrf.mxu0
      %v5645 = vpop.f32.mrf.mxu0
      %v5646 = vadd.f32 %v5357, %v5645
      %v5647 = vpop.f32.mrf.mxu0
      %5648 = vmatprep.mubr.bf16.mxu0 0
      %5649 = vmatmul.mubr.bf16.gmra.mxu0 %v5504
      %v5650 = vpop.f32.mrf.mxu0
      %v5651 = vadd.f32 %v5357, %v5650
      %v5652 = vpop.f32.mrf.mxu0
      %v5653 = vpop.f32.mrf.mxu0
      %v5654 = vadd.f32 %v5357, %v5653
      %v5655 = vpop.f32.mrf.mxu0
      %5656 = vmatprep.mubr.bf16.mxu0 0
      %5657 = vmatmul.mubr.bf16.gmra.mxu0 %v5507
      %v5658 = vpop.f32.mrf.mxu0
      %v5659 = vadd.f32 %v5357, %v5658
      %v5660 = vpop.f32.mrf.mxu0
      %v5661 = vpop.f32.mrf.mxu0
      %v5662 = vadd.f32 %v5357, %v5661
      %v5663 = vpop.f32.mrf.mxu0
      %5664 = vmatprep.mubr.bf16.mxu0 0
      %5665 = vmatmul.mubr.bf16.gmra.mxu0 %v5510
      %v5666 = vpop.f32.mrf.mxu0
      %v5667 = vadd.f32 %v5357, %v5666
      %v5668 = vpop.f32.mrf.mxu0
      %v5669 = vpop.f32.mrf.mxu0
      %v5670 = vadd.f32 %v5357, %v5669
      %v5671 = vpop.f32.mrf.mxu0
      %5672 = vdwg.mxu0
      %v5673 = vadd.f32 %v5186, %v5547
      %v5674 = vadd.f32 %v5189, %v5550
      %v5675 = vadd.f32 %v5194, %v5555
      %v5676 = vadd.f32 %v5197, %v5558
      %v5677 = vadd.f32 %v5202, %v5563
      %v5678 = vadd.f32 %v5205, %v5566
      %v5679 = vadd.f32 %v5210, %v5571
      %v5680 = vadd.f32 %v5213, %v5574
      %v5681 = vadd.f32 %v5218, %v5579
      %v5682 = vadd.f32 %v5221, %v5582
      %v5683 = vadd.f32 %v5226, %v5587
      %v5684 = vadd.f32 %v5229, %v5590
      %v5685 = vadd.f32 %v5234, %v5595
      %v5686 = vadd.f32 %v5237, %v5598
      %v5687 = vadd.f32 %v5242, %v5603
      %v5688 = vadd.f32 %v5245, %v5606
      %v5689 = vadd.f32 %v5250, %v5611
      %v5690 = vadd.f32 %v5253, %v5614
      %v5691 = vadd.f32 %v5258, %v5619
      %v5692 = vadd.f32 %v5261, %v5622
      %v5693 = vadd.f32 %v5266, %v5627
      %v5694 = vadd.f32 %v5269, %v5630
      %v5695 = vadd.f32 %v5274, %v5635
      %v5696 = vadd.f32 %v5277, %v5638
      %v5697 = vadd.f32 %v5282, %v5643
      %v5698 = vadd.f32 %v5285, %v5646
      %v5699 = vadd.f32 %v5290, %v5651
      %v5700 = vadd.f32 %v5293, %v5654
      %v5701 = vadd.f32 %v5298, %v5659
      %v5702 = vadd.f32 %v5301, %v5662
      %v5703 = vadd.f32 %v5306, %v5667
      %v5704 = vadd.f32 %v5309, %v5670
      %v5705 = vmax.f32 %v5673, 0.0
      %v5706 = vmax.f32 %v5674, 0.0
      %v5707 = vmax.f32 %v5675, 0.0
      %v5708 = vmax.f32 %v5676, 0.0
      %v5709 = vmax.f32 %v5677, 0.0
      %v5710 = vmax.f32 %v5678, 0.0
      %v5711 = vmax.f32 %v5679, 0.0
      %v5712 = vmax.f32 %v5680, 0.0
      %v5713 = vmax.f32 %v5681, 0.0
      %v5714 = vmax.f32 %v5682, 0.0
      %v5715 = vmax.f32 %v5683, 0.0
      %v5716 = vmax.f32 %v5684, 0.0
      %v5717 = vmax.f32 %v5685, 0.0
      %v5718 = vmax.f32 %v5686, 0.0
      %v5719 = vmax.f32 %v5687, 0.0
      %v5720 = vmax.f32 %v5688, 0.0
      %v5721 = vmax.f32 %v5689, 0.0
      %v5722 = vmax.f32 %v5690, 0.0
      %v5723 = vmax.f32 %v5691, 0.0
      %v5724 = vmax.f32 %v5692, 0.0
      %v5725 = vmax.f32 %v5693, 0.0
      %v5726 = vmax.f32 %v5694, 0.0
      %v5727 = vmax.f32 %v5695, 0.0
      %v5728 = vmax.f32 %v5696, 0.0
      %v5729 = vmax.f32 %v5697, 0.0
      %v5730 = vmax.f32 %v5698, 0.0
      %v5731 = vmax.f32 %v5699, 0.0
      %v5732 = vmax.f32 %v5700, 0.0
      %v5733 = vmax.f32 %v5701, 0.0
      %v5734 = vmax.f32 %v5702, 0.0
      %v5735 = vmax.f32 %v5703, 0.0
      %v5736 = vmax.f32 %v5704, 0.0
      %5737 = vst [vmem:[%s325] sm:$0xff] %v5705
      %5738 = vst [vmem:[%s325 + $0x8] sm:$0xff] %v5706
      %5739 = vst [vmem:[%s325 + $0x10] sm:$0xff] %v5707
      %5740 = vst [vmem:[%s325 + $0x18] sm:$0xff] %v5708
      %5741 = vst [vmem:[%s325 + $0x20] sm:$0xff] %v5709
      %5742 = vst [vmem:[%s325 + $0x28] sm:$0xff] %v5710
      %5743 = vst [vmem:[%s325 + $0x30] sm:$0xff] %v5711
      %5744 = vst [vmem:[%s325 + $0x38] sm:$0xff] %v5712
      %5745 = vst [vmem:[%s325 + $0x40] sm:$0xff] %v5713
      %5746 = vst [vmem:[%s325 + $0x48] sm:$0xff] %v5714
      %5747 = vst [vmem:[%s325 + $0x50] sm:$0xff] %v5715
      %5748 = vst [vmem:[%s325 + $0x58] sm:$0xff] %v5716
      %5749 = vst [vmem:[%s325 + $0x60] sm:$0xff] %v5717
      %5750 = vst [vmem:[%s325 + $0x68] sm:$0xff] %v5718
      %5751 = vst [vmem:[%s325 + $0x70] sm:$0xff] %v5719
      %5752 = vst [vmem:[%s325 + $0x78] sm:$0xff] %v5720
      %5753 = vst [vmem:[%s325 + $0x80] sm:$0xff] %v5721
      %5754 = vst [vmem:[%s325 + $0x88] sm:$0xff] %v5722
      %5755 = vst [vmem:[%s325 + $0x90] sm:$0xff] %v5723
      %5756 = vst [vmem:[%s325 + $0x98] sm:$0xff] %v5724
      %5757 = vst [vmem:[%s325 + $0xa0] sm:$0xff] %v5725
      %5758 = vst [vmem:[%s325 + $0xa8] sm:$0xff] %v5726
      %5759 = vst [vmem:[%s325 + $0xb0] sm:$0xff] %v5727
      %5760 = vst [vmem:[%s325 + $0xb8] sm:$0xff] %v5728
      %5761 = vst [vmem:[%s325 + $0xc0] sm:$0xff] %v5729
      %5762 = vst [vmem:[%s325 + $0xc8] sm:$0xff] %v5730
      %5763 = vst [vmem:[%s325 + $0xd0] sm:$0xff] %v5731
      %5764 = vst [vmem:[%s325 + $0xd8] sm:$0xff] %v5732
      %5765 = vst [vmem:[%s325 + $0xe0] sm:$0xff] %v5733
      %5766 = vst [vmem:[%s325 + $0xe8] sm:$0xff] %v5734
      %5767 = vst [vmem:[%s325 + $0xf0] sm:$0xff] %v5735
      %5768 = vst [vmem:[%s325 + $0xf8] sm:$0xff] %v5736
      %p5769 = scmp.lt.s32.totalorder %s19, 1
      %s5770 = scalar_select %p5769, %s19, 1
      %s5771 = smul.addr %s5770, 32
      %s5772 = smul.addr %s5771, 8
      %s5773 = scalar_lea.vmem %s8, %s5772
      // Predicated region
      $region53: #{_lambda_.3} parent=51 // pred_check
        %p5774 = pneg %p215
      $region54: #{_lambda_.3} parent=51 // pred_check_branch
        %5776 = sbr.rel (%p5774) target = $region56
      $region55: #{_lambda_.3} parent=51 // pred_region
        _
      $region56: #{_lambda_.3} parent=51 // pred_fallthru
        _
    $region52: #{_lambda_.3} parent=5 // pred_fallthru
      _
    %p5777 = scmp.le.s32.totalorder 2, %s14
    // Predicated region
    $region57: #{_lambda_.3} parent=5 // pred_check
      %p5778 = pneg %p5777
    $region58: #{_lambda_.3} parent=5 // pred_check_branch
      %5780 = sbr.rel (%p5778) target = $region60
    $region59: #{_lambda_.3} parent=5 // pred_region
      %s5781 = ssub.s32 %s14, 2
      // Predicated region
      $region61: #{_lambda_.3} parent=59 // pred_check
        %p5782 = pneg %p221
      $region62: #{_lambda_.3} parent=59 // pred_check_branch
        %5784 = sbr.rel (%p5782) target = $region64
      $region63: #{_lambda_.3} parent=59 // pred_region
        %p5785 = scmp.lt.s32.totalorder %s20, 1
        %s5786 = scalar_select %p5785, %s20, 1
        %s5787 = smul.addr %s5786, 32
        %s5788 = smul.addr %s5787, 8
        %s5789 = scalar_lea.vmem %s8, %s5788
      $region64: #{_lambda_.3} parent=59 // pred_fallthru
        _
    $region60: #{_lambda_.3} parent=5 // pred_fallthru
      _
  $region6: #{_lambda_.3} parent=0 // loop_footer
    %s18 = sadd.s32 1, %s14
  $region7: #{_lambda_.3} parent=0 // loop_footer_branch
    %13 = sbr.rel target = $region3
  $region8: #{_lambda_.3} parent=0 // loop_exit
    _

</llo_original>
